<compile_context>
chip_gen: v7x
topology: tpu7x:2x2x1
jax: 0.10.0
libtpu: 0.0.40
codegen_flags: <defaults>
</compile_context>

<pallas_src>
import math

import jax
import jax.numpy as jnp
from jax import lax
from jax.experimental import pallas as pl
from jax.experimental.pallas import tpu as pltpu

# ----------------------------- config (small synthetic BERT) -----------------
VOCAB = 100
MAXLEN = 16
B = 2                  # batch (number of texts)
S = 8                  # sequence length (stands in for max_length=256)
H = 128                # hidden size (stands in for 768) -- lane-dense (128)
NH = 4                 # attention heads
HD = H // NH           # head dim
FF = 512               # intermediate size (stands in for 3072), 4*H like BERT
LAYERS = 2
LN_EPS = 1e-12

TB = 1                 # texts per grid tile (one sequence per tile; attention is
                       # per-sequence so TB must stay 1 with this layout)
TS = TB * S            # tokens per tile
N_TILES = B // TB      # leading "parallel" grid axis (even extent for v7x 2 TCs)
QKV = 3 * NH           # fused (q,k,v) x head batch dim of the projection einsum

assert TB == 1 and B % TB == 0


# ----------------------------- shared math helpers ---------------------------
def _layernorm(x, gamma, beta):
    mu = jnp.mean(x, axis=-1, keepdims=True)
    var = jnp.mean((x - mu) ** 2, axis=-1, keepdims=True)
    return (x - mu) * lax.rsqrt(var + LN_EPS) * gamma + beta


def _gelu(x):
    # TODO(synk): HF BertModel uses exact erf-GELU; tanh approximation kept so
    # in-kernel math matches the pure-JAX reference and lowers on all TPU gens.
    return 0.5 * x * (1.0 + jnp.tanh(0.7978845608028654 * (x + 0.044715 * x * x * x)))


# ----------------------------- fused encoder kernel --------------------------
def bert_encoder_kernel(x_ref, mask_ref, eg_ref, eb_ref,
                        wqkv_ref, bqkv_ref, wo_ref, bo_ref, g1_ref, be1_ref,
                        w1_ref, bi1_ref, w2_ref, bi2_ref, g2_ref, be2_ref,
                        o_ref, x_sc):
    layer = pl.program_id(1)

    # Layer-0 prologue (per tile): embedding LayerNorm; result stays resident.
    @pl.when(layer == 0)
    def _():
        xe = x_ref[...].reshape(TS, H)
        x_sc[...] = _layernorm(xe, eg_ref[...], eb_ref[...])

    x = x_sc[...]                                     # (TS, H) f32 resident activations
    x_b = x.astype(jnp.bfloat16)

    # ---- head-batched QKV projection (bf16 MXU, f32 accumulate).
    #      Weights are pre-laid-out per head as (3*NH, H, HD); the head axis is a
    #      leading batch dim from the start -> no lane slicing / relayouts.
    x_n = jnp.broadcast_to(x_b[None], (QKV, TS, H))
    qkv = jnp.einsum('nth,nhd->ntd', x_n, wqkv_ref[...],
                     preferred_element_type=jnp.float32) + bqkv_ref[...]  # (3NH,TS,HD)
    q = qkv[0:NH]                                     # (NH,TS,HD) leading-dim slices
    k = qkv[NH:2 * NH]
    v = qkv[2 * NH:3 * NH]

    # ---- all heads at once: masked softmax attention (q pre-scaled by 1/sqrt(HD)).
    scores = jnp.einsum('nqd,nkd->nqk',
                        q.astype(jnp.bfloat16), k.astype(jnp.bfloat16),
                        preferred_element_type=jnp.float32)               # (NH,TS,TS)
    scores = scores + mask_ref[...]                   # (TB,1,S) broadcast over heads
    scores = scores - jnp.max(scores, axis=-1, keepdims=True)
    p = jnp.exp(scores)
    denom = jnp.sum(p, axis=-1, keepdims=True)        # (NH,TS,1)
    ctx = jnp.einsum('nqk,nkd->nqd',
                     p.astype(jnp.bfloat16), v.astype(jnp.bfloat16),
                     preferred_element_type=jnp.float32)                  # (NH,TS,HD)
    # Flash-style normalization: scale the small (NH,TS,HD) context, not the
    # (NH,TS,TS) prob matrix; reciprocal on the EUP slot.
    ctx = ctx * pl.reciprocal(denom, approx=True)

    # ---- head-merge folded into Wo (host re-laid-out to (NH, HD, H)):
    #      per-head partial outputs, then a cheap leading-dim sum. No concats.
    attn_h = jnp.einsum('nqd,ndo->nqo',
                        ctx.astype(jnp.bfloat16), wo_ref[...],
                        preferred_element_type=jnp.float32)               # (NH,TS,H)
    attn = jnp.sum(attn_h, axis=0) + bo_ref[...]      # (TS, H)

    h1 = _layernorm(x + attn, g1_ref[...], be1_ref[...])

    # ---- feed-forward (bf16 MXU, f32 accumulate), residual + LayerNorm.
    ff = _gelu(jnp.dot(h1.astype(jnp.bfloat16), w1_ref[...],
                       preferred_element_type=jnp.float32) + bi1_ref[...])
    ff = jnp.dot(ff.astype(jnp.bfloat16), w2_ref[...],
                 preferred_element_type=jnp.float32) + bi2_ref[...]
    out = _layernorm(h1 + ff, g2_ref[...], be2_ref[...])

    x_sc[...] = out                                   # carried to the next layer

    @pl.when(layer == LAYERS - 1)
    def _():
        o_ref[...] = out.reshape(TB, S, H)


# ----------------------------- pallas_call wrapper ----------------------------
def _const_spec(shape):
    n = len(shape)
    return pl.BlockSpec(shape, lambda t, l: (0,) * n)


def _tile_spec(shape):
    # Per-tile activation/mask/output: leading dim indexed by the parallel axis.
    n = len(shape)
    return pl.BlockSpec(shape, lambda t, l: (t,) + (0,) * (n - 1))


def _layer_spec(shape):
    # Per-layer stacked weight: leading LAYERS dim indexed by the layer axis, squeezed.
    n = len(shape)
    return pl.BlockSpec((None,) + shape, lambda t, l: (l,) + (0,) * n)


def bert_encoder(x_emb, mask_add, emb_g, emb_b, sp):
    # NOTE on scaling to real BERT (H=768, FF=3072): weights are already streamed
    # in bf16 (double-buffered per-layer set fits v7x's 64 MiB); on v6e also grow
    # tokens per tile (larger TS) until per-layer matmul time covers weight DMA,
    # optionally with pipeline_mode=pl.Buffered(3) on the wqkv/w1/w2 specs.
    in_specs = [
        _tile_spec((TB, S, H)),        # embedded input (layer-0 prologue only)
        _tile_spec((TB, 1, S)),        # additive mask (head broadcast in-kernel)
        _const_spec((1, H)),           # embedding LN gamma
        _const_spec((1, H)),           # embedding LN beta
        _layer_spec((QKV, H, HD)),     # per-head Wq|Wk|Wv (1/sqrt(HD) folded in Wq), bf16
        _layer_spec((QKV, 1, HD)),     # per-head bq|bk|bv (scaled bq), f32
        _layer_spec((NH, HD, H)),      # per-head Wo (head-merge folded in), bf16
        _layer_spec((1, H)),           # bo
        _layer_spec((1, H)),           # LN1 gamma
        _layer_spec((1, H)),           # LN1 beta
        _layer_spec((H, FF)),          # W1 (bf16)
        _layer_spec((1, FF)),          # b1
        _layer_spec((FF, H)),          # W2 (bf16)
        _layer_spec((1, H)),           # b2
        _layer_spec((1, H)),           # LN2 gamma
        _layer_spec((1, H)),           # LN2 beta
    ]
    return pl.pallas_call(
        bert_encoder_kernel,
        out_shape=jax.ShapeDtypeStruct((B, S, H), jnp.float32),
        grid=(N_TILES, LAYERS),
        in_specs=in_specs,
        out_specs=_tile_spec((TB, S, H)),
        scratch_shapes=[pltpu.VMEM((TS, H), jnp.float32)],
        compiler_params=pltpu.CompilerParams(
            dimension_semantics=("parallel", "arbitrary"),   # tiles ∥, layers sequential
            vmem_limit_bytes=64 * 1024 * 1024),
    )(x_emb, mask_add, emb_g, emb_b,
      sp["wqkv"], sp["bqkv"], sp["wo"], sp["bo"], sp["g1"], sp["be1"],
      sp["w1"], sp["bi1"], sp["w2"], sp["bi2"], sp["g2"], sp["be2"])


# ----------------------------- parameters ------------------------------------
def init_params(key):
    ks = iter(jax.random.split(key, 8 + LAYERS * 16))

    def nrm(shape, scale=0.02):
        return scale * jax.random.normal(next(ks), shape, dtype=jnp.float32)

    params = {
        "word_emb": nrm((VOCAB, H)),
        "pos_emb": nrm((MAXLEN, H)),
        "type_emb": nrm((2, H)),
        "emb_g": 1.0 + nrm((1, H)),
        "emb_b": nrm((1, H)),
        "layers": [],
    }
    for _ in range(LAYERS):
        params["layers"].append({
            "wq": nrm((H, H)), "bq": nrm((1, H)),
            "wk": nrm((H, H)), "bk": nrm((1, H)),
            "wv": nrm((H, H)), "bv": nrm((1, H)),
            "wo": nrm((H, H)), "bo": nrm((1, H)),
            "g1": 1.0 + nrm((1, H)), "be1": nrm((1, H)),
            "w1": nrm((H, FF)), "bi1": nrm((1, FF)),
            "w2": nrm((FF, H)), "bi2": nrm((1, H)),
            "g2": 1.0 + nrm((1, H)), "be2": nrm((1, H)),
        })
    return params


def stack_layer_params(params):
    """Stack per-layer weights to (LAYERS, ...), re-lay-out heads into a leading
    batch dim (QKV: (3*NH,H,HD), Wo: (NH,HD,H)), fold 1/sqrt(HD) into Wq/bq, and
    cast the matmul weights to bf16 (biases / LN params stay f32)."""
    layers = params["layers"]
    scale = 1.0 / math.sqrt(HD)
    bf16 = jnp.bfloat16

    def head_w(w):    # (H, H) -> (NH, H, HD): pull head axis out of output columns
        return w.reshape(H, NH, HD).transpose(1, 0, 2)

    def head_b(b):    # (1, H) -> (NH, 1, HD)
        return b.reshape(NH, HD)[:, None, :]

    wqkv, bqkv, wo_h = [], [], []
    for lp in layers:
        wqkv.append(jnp.concatenate([head_w(lp["wq"]) * scale,
                                     head_w(lp["wk"]),
                                     head_w(lp["wv"])], axis=0))     # (3NH, H, HD)
        bqkv.append(jnp.concatenate([head_b(lp["bq"]) * scale,
                                     head_b(lp["bk"]),
                                     head_b(lp["bv"])], axis=0))     # (3NH, 1, HD)
        wo_h.append(lp["wo"].reshape(NH, HD, H))                     # (NH, HD, H)

    def stk(name):
        return jnp.stack([lp[name] for lp in layers], axis=0)

    return {
        "wqkv": jnp.stack(wqkv, axis=0).astype(bf16),
        "bqkv": jnp.stack(bqkv, axis=0),
        "wo": jnp.stack(wo_h, axis=0).astype(bf16),
        "bo": stk("bo"),
        "g1": stk("g1"), "be1": stk("be1"),
        "w1": stk("w1").astype(bf16), "bi1": stk("bi1"),
        "w2": stk("w2").astype(bf16), "bi2": stk("bi2"),
        "g2": stk("g2"), "be2": stk("be2"),
    }


# ----------------------------- forward (module equivalent) -------------------
def text_encoder_forward(params, input_ids, attention_mask):
    """Equivalent of TextEncoder.forward with simplify=False.

    Returns (simplified_texts, clip_encoded_texts, bert_encoded_texts);
    bert_encoded_texts: (B, S, H) float32 — stacked last_hidden_state.
    """
    # TODO(synk): BertTokenizer / BLIP2 caption generation / CLIP pooling and the
    #             np.save + print side effects are host I/O with no Pallas
    #             equivalent; inputs here are already token ids + attention mask.
    pos = jnp.arange(S)
    x_emb = (params["word_emb"][input_ids]
             + params["pos_emb"][pos][None, :, :]
             + params["type_emb"][0][None, None, :]).astype(jnp.float32)

    # Additive mask (0 attended / -1e9 padded), (B, 1, S); broadcast over heads
    # happens inside the kernel (no host-side NH-fold tiling / extra DMA).
    add_mask = ((1.0 - attention_mask.astype(jnp.float32)) * -1e9)[:, None, :]

    stacked = stack_layer_params(params)
    bert_out = bert_encoder(x_emb, add_mask, params["emb_g"], params["emb_b"], stacked)

    simplified_texts = []      # simplify=False branch
    clip_encoded_texts = []    # simplify=False branch
    return simplified_texts, clip_encoded_texts, bert_out


# ----------------------------- pure-JAX reference (correctness check) --------
def _ref_forward(params, input_ids, attention_mask):
    pos = jnp.arange(S)
    x = (params["word_emb"][input_ids]
         + params["pos_emb"][pos][None, :, :]
         + params["type_emb"][0][None, None, :]).astype(jnp.float32)
    x = _layernorm(x, params["emb_g"], params["emb_b"])
    add_mask = ((1.0 - attention_mask.astype(jnp.float32)) * -1e9)[:, None, None, :]
    for p in params["layers"]:
        q = (x @ p["wq"] + p["bq"]).reshape(B, S, NH, HD)
        k = (x @ p["wk"] + p["bk"]).reshape(B, S, NH, HD)
        v = (x @ p["wv"] + p["bv"]).reshape(B, S, NH, HD)
        sc = jnp.einsum('bqhd,bkhd->bhqk', q, k) / math.sqrt(HD) + add_mask
        pr = jax.nn.softmax(sc, axis=-1)
        ctx = jnp.einsum('bhqk,bkhd->bqhd', pr, v).reshape(B, S, H)
        h1 = _layernorm(x + (ctx @ p["wo"] + p["bo"]), p["g1"], p["be1"])
        ff = _gelu(h1 @ p["w1"] + p["bi1"]) @ p["w2"] + p["bi2"]
        x = _layernorm(h1 + ff, p["g2"], p["be2"])
    return x


# ----------------------------- main -------------------------------------------
if __name__ == "__main__":
    key = jax.random.PRNGKey(0)
    kp, kid = jax.random.split(key)
    params = init_params(kp)

    input_ids = jax.random.randint(kid, (B, S), 0, VOCAB, dtype=jnp.int32)
    attention_mask = jnp.ones((B, S), dtype=jnp.int32).at[1, S - 2:].set(0)  # pad tail of 2nd seq

    simplified, clip_out, bert_out = text_encoder_forward(params, input_ids, attention_mask)
    bert_out = jax.block_until_ready(bert_out)

    ref = _ref_forward(params, input_ids, attention_mask)
    assert bert_out.shape == (B, S, H)
    # Tolerance accommodates bf16 MXU operands + pl.reciprocal(approx=True) in the
    # softmax; outputs are LayerNorm-normalized (unit scale) so this still catches
    # structural bugs (wrong head mapping / mask / merge), which give O(1) errors.
    err = float(jnp.max(jnp.abs(bert_out - ref)))
    assert jnp.allclose(bert_out, ref, atol=4e-2, rtol=4e-2), \
        f"mismatch vs reference (max abs err {err:.3e})"

    print("KERNEL_OK")
</pallas_src>

<mosaic_0001>
module attributes {stable_mosaic.version = 11 : i64} {
  func.func @bert_encoder_kernel(%arg0: i32, %arg1: i32, %arg2: memref<1x8x128xf32, #tpu.memory_space<vmem>>, %arg3: memref<1x1x8xf32, #tpu.memory_space<vmem>>, %arg4: memref<1x128xf32, #tpu.memory_space<vmem>>, %arg5: memref<1x128xf32, #tpu.memory_space<vmem>>, %arg6: memref<1x12x128x32xbf16, #tpu.memory_space<vmem>>, %arg7: memref<1x12x1x32xf32, #tpu.memory_space<vmem>>, %arg8: memref<1x4x32x128xbf16, #tpu.memory_space<vmem>>, %arg9: memref<1x1x128xf32, #tpu.memory_space<vmem>>, %arg10: memref<1x1x128xf32, #tpu.memory_space<vmem>>, %arg11: memref<1x1x128xf32, #tpu.memory_space<vmem>>, %arg12: memref<1x128x512xbf16, #tpu.memory_space<vmem>>, %arg13: memref<1x1x512xf32, #tpu.memory_space<vmem>>, %arg14: memref<1x512x128xbf16, #tpu.memory_space<vmem>>, %arg15: memref<1x1x128xf32, #tpu.memory_space<vmem>>, %arg16: memref<1x1x128xf32, #tpu.memory_space<vmem>>, %arg17: memref<1x1x128xf32, #tpu.memory_space<vmem>>, %arg18: memref<1x8x128xf32, #tpu.memory_space<vmem>>, %arg19: memref<8x128xf32, #tpu.memory_space<vmem>>) attributes {dimension_semantics = [#tpu.dimension_semantics<parallel>, #tpu.dimension_semantics<arbitrary>], iteration_bounds = array<i64: 2, 2>, scalar_prefetch = 0 : i64, scratch_operands = 1 : i64, tpu.core_type = #tpu.core_type<tc>, window_params = [{transform_indices = @transform_0, window_bounds = array<i64: 1, 8, 128>}, {transform_indices = @transform_1, window_bounds = array<i64: 1, 1, 8>}, {pipeline_mode = #tpu.pipeline_mode<synchronous>, transform_indices = @transform_2, window_bounds = array<i64: 1, 128>}, {pipeline_mode = #tpu.pipeline_mode<synchronous>, transform_indices = @transform_3, window_bounds = array<i64: 1, 128>}, {transform_indices = @transform_4, window_bounds = array<i64: 1, 12, 128, 32>}, {transform_indices = @transform_5, window_bounds = array<i64: 1, 12, 1, 32>}, {transform_indices = @transform_6, window_bounds = array<i64: 1, 4, 32, 128>}, {transform_indices = @transform_7, window_bounds = array<i64: 1, 1, 128>}, {transform_indices = @transform_8, window_bounds = array<i64: 1, 1, 128>}, {transform_indices = @transform_9, window_bounds = array<i64: 1, 1, 128>}, {transform_indices = @transform_10, window_bounds = array<i64: 1, 128, 512>}, {transform_indices = @transform_11, window_bounds = array<i64: 1, 1, 512>}, {transform_indices = @transform_12, window_bounds = array<i64: 1, 512, 128>}, {transform_indices = @transform_13, window_bounds = array<i64: 1, 1, 128>}, {transform_indices = @transform_14, window_bounds = array<i64: 1, 1, 128>}, {transform_indices = @transform_15, window_bounds = array<i64: 1, 1, 128>}, {transform_indices = @transform_16, window_bounds = array<i64: 1, 8, 128>}]} {
    %c0_i32 = arith.constant 0 : i32
    %0 = arith.cmpi eq, %arg1, %c0_i32 : i32
    %1 = arith.extui %0 : i1 to i32
    %c0_i32_0 = arith.constant 0 : i32
    %2 = arith.cmpi ne, %1, %c0_i32_0 : i32
    scf.if %2 {
      %c0_69 = arith.constant 0 : index
      %c0_70 = arith.constant 0 : index
      %c0_71 = arith.constant 0 : index
      %133 = vector.load %arg2[%c0_69, %c0_70, %c0_71] : memref<1x8x128xf32, #tpu.memory_space<vmem>>, vector<1x8x128xf32>
      %134 = vector.shape_cast %133 : vector<1x8x128xf32> to vector<8x128xf32>
      %c0_72 = arith.constant 0 : index
      %c0_73 = arith.constant 0 : index
      %135 = vector.load %arg4[%c0_72, %c0_73] : memref<1x128xf32, #tpu.memory_space<vmem>>, vector<1x128xf32>
      %c0_74 = arith.constant 0 : index
      %c0_75 = arith.constant 0 : index
      %136 = vector.load %arg5[%c0_74, %c0_75] : memref<1x128xf32, #tpu.memory_space<vmem>>, vector<1x128xf32>
      %cst_76 = arith.constant dense<0.000000e+00> : vector<8xf32>
      %137 = vector.multi_reduction <add>, %134, %cst_76 [1] : vector<8x128xf32> to vector<8xf32>
      %138 = vector.shape_cast %137 : vector<8xf32> to vector<8x1xf32>
      %cst_77 = arith.constant 1.280000e+02 : f32
      %139 = vector.broadcast %cst_77 : f32 to vector<8x1xf32>
      %140 = arith.divf %138, %139 : vector<8x1xf32>
      %141 = vector.broadcast %140 : vector<8x1xf32> to vector<8x128xf32>
      %142 = arith.subf %134, %141 : vector<8x128xf32>
      %143 = arith.mulf %142, %142 : vector<8x128xf32>
      %cst_78 = arith.constant dense<0.000000e+00> : vector<8xf32>
      %144 = vector.multi_reduction <add>, %143, %cst_78 [1] : vector<8x128xf32> to vector<8xf32>
      %145 = vector.shape_cast %144 : vector<8xf32> to vector<8x1xf32>
      %cst_79 = arith.constant 1.280000e+02 : f32
      %146 = vector.broadcast %cst_79 : f32 to vector<8x1xf32>
      %147 = arith.divf %145, %146 : vector<8x1xf32>
      %148 = vector.broadcast %140 : vector<8x1xf32> to vector<8x128xf32>
      %149 = arith.subf %134, %148 : vector<8x128xf32>
      %cst_80 = arith.constant 9.99999996E-13 : f32
      %150 = vector.broadcast %cst_80 : f32 to vector<8x1xf32>
      %151 = arith.addf %147, %150 : vector<8x1xf32>
      %152 = math.rsqrt %151 : vector<8x1xf32>
      %153 = vector.broadcast %152 : vector<8x1xf32> to vector<8x128xf32>
      %154 = arith.mulf %149, %153 : vector<8x128xf32>
      %155 = vector.broadcast %135 : vector<1x128xf32> to vector<8x128xf32>
      %156 = arith.mulf %154, %155 : vector<8x128xf32>
      %157 = vector.broadcast %136 : vector<1x128xf32> to vector<8x128xf32>
      %158 = arith.addf %156, %157 : vector<8x128xf32>
      %c0_81 = arith.constant 0 : index
      %c0_82 = arith.constant 0 : index
      %159 = vector.load %arg19[%c0_81, %c0_82] : memref<8x128xf32, #tpu.memory_space<vmem>>, vector<8x128xf32>
      tpu.vector_store %arg19[%c0_81, %c0_82], %158 {strides = array<i32>} : memref<8x128xf32, #tpu.memory_space<vmem>>, vector<8x128xf32>,
    } else {
    }
    %c0 = arith.constant 0 : index
    %c0_1 = arith.constant 0 : index
    %3 = vector.load %arg19[%c0, %c0_1] : memref<8x128xf32, #tpu.memory_space<vmem>>, vector<8x128xf32>
    %4 = arith.truncf %3 : vector<8x128xf32> to vector<8x128xbf16>
    %5 = vector.shape_cast %4 : vector<8x128xbf16> to vector<1x8x128xbf16>
    %6 = vector.shape_cast %5 : vector<1x8x128xbf16> to vector<1x8x128xbf16>
    %7 = vector.broadcast %6 : vector<1x8x128xbf16> to vector<12x8x128xbf16>
    %c0_2 = arith.constant 0 : index
    %c0_3 = arith.constant 0 : index
    %c0_4 = arith.constant 0 : index
    %c0_5 = arith.constant 0 : index
    %8 = vector.load %arg6[%c0_2, %c0_3, %c0_4, %c0_5] : memref<1x12x128x32xbf16, #tpu.memory_space<vmem>>, vector<1x12x128x32xbf16>
    %9 = vector.shape_cast %8 : vector<1x12x128x32xbf16> to vector<12x128x32xbf16>
    "tpu.trace_start"() <{level = 10 : i32, message = "nth,nhd->ntd"}> : () -> ()
    %cst = arith.constant dense<0.000000e+00> : vector<12x8x32xf32>
    %10 = tpu.matmul %7, %9, %cst {dimension_numbers = #tpu.dot_dimension_numbers<[2], [1], [1], [2], [0, 0, 0, 1, 1, 2], [0], [0]>} : vector<12x8x128xbf16>, vector<12x128x32xbf16>, vector<12x8x32xf32> -> vector<12x8x32xf32>
    "tpu.trace_stop"() : () -> ()
    %c0_6 = arith.constant 0 : index
    %c0_7 = arith.constant 0 : index
    %c0_8 = arith.constant 0 : index
    %c0_9 = arith.constant 0 : index
    %11 = vector.load %arg7[%c0_6, %c0_7, %c0_8, %c0_9] : memref<1x12x1x32xf32, #tpu.memory_space<vmem>>, vector<1x12x1x32xf32>
    %12 = vector.shape_cast %11 : vector<1x12x1x32xf32> to vector<12x1x32xf32>
    %13 = vector.broadcast %12 : vector<12x1x32xf32> to vector<12x8x32xf32>
    %14 = arith.addf %10, %13 : vector<12x8x32xf32>
    %15 = vector.extract_strided_slice %14 {offsets = [0, 0, 0], sizes = [4, 8, 32], strides = [1, 1, 1]} : vector<12x8x32xf32> to vector<4x8x32xf32>
    %16 = vector.extract_strided_slice %14 {offsets = [4, 0, 0], sizes = [4, 8, 32], strides = [1, 1, 1]} : vector<12x8x32xf32> to vector<4x8x32xf32>
    %17 = vector.extract_strided_slice %14 {offsets = [8, 0, 0], sizes = [4, 8, 32], strides = [1, 1, 1]} : vector<12x8x32xf32> to vector<4x8x32xf32>
    %18 = arith.truncf %15 : vector<4x8x32xf32> to vector<4x8x32xbf16>
    %19 = arith.truncf %16 : vector<4x8x32xf32> to vector<4x8x32xbf16>
    "tpu.trace_start"() <{level = 10 : i32, message = "nqd,nkd->nqk"}> : () -> ()
    %cst_10 = arith.constant dense<0.000000e+00> : vector<4x8x8xf32>
    %20 = tpu.matmul %18, %19, %cst_10 {dimension_numbers = #tpu.dot_dimension_numbers<[2], [2], [1], [1], [0, 0, 0, 1, 1, 1], [0], [0]>} : vector<4x8x32xbf16>, vector<4x8x32xbf16>, vector<4x8x8xf32> -> vector<4x8x8xf32>
    "tpu.trace_stop"() : () -> ()
    %c0_11 = arith.constant 0 : index
    %c0_12 = arith.constant 0 : index
    %c0_13 = arith.constant 0 : index
    %21 = vector.load %arg3[%c0_11, %c0_12, %c0_13] : memref<1x1x8xf32, #tpu.memory_space<vmem>>, vector<1x1x8xf32>
    %22 = vector.broadcast %21 : vector<1x1x8xf32> to vector<4x8x8xf32>
    %23 = arith.addf %20, %22 : vector<4x8x8xf32>
    %cst_14 = arith.constant dense<0xFF800000> : vector<4x8xf32>
    %24 = vector.multi_reduction <maximumf>, %23, %cst_14 [2] : vector<4x8x8xf32> to vector<4x8xf32>
    %25 = vector.shape_cast %24 : vector<4x8xf32> to vector<4x8x1xf32>
    %26 = vector.broadcast %25 : vector<4x8x1xf32> to vector<4x8x8xf32>
    %27 = arith.subf %23, %26 : vector<4x8x8xf32>
    %28 = math.exp %27 : vector<4x8x8xf32>
    %cst_15 = arith.constant dense<0.000000e+00> : vector<4x8xf32>
    %29 = vector.multi_reduction <add>, %28, %cst_15 [2] : vector<4x8x8xf32> to vector<4x8xf32>
    %30 = vector.shape_cast %29 : vector<4x8xf32> to vector<4x8x1xf32>
    %31 = arith.truncf %28 : vector<4x8x8xf32> to vector<4x8x8xbf16>
    %32 = arith.truncf %17 : vector<4x8x32xf32> to vector<4x8x32xbf16>
    "tpu.trace_start"() <{level = 10 : i32, message = "nqk,nkd->nqd"}> : () -> ()
    %cst_16 = arith.constant dense<0.000000e+00> : vector<4x8x32xf32>
    %33 = tpu.matmul %31, %32, %cst_16 {dimension_numbers = #tpu.dot_dimension_numbers<[2], [1], [1], [2], [0, 0, 0, 1, 1, 2], [0], [0]>} : vector<4x8x8xbf16>, vector<4x8x32xbf16>, vector<4x8x32xf32> -> vector<4x8x32xf32>
    "tpu.trace_stop"() : () -> ()
    %34 = tpu.reciprocal %30 {approx = true} : vector<4x8x1xf32> -> vector<4x8x1xf32>
    %35 = vector.broadcast %34 : vector<4x8x1xf32> to vector<4x8x32xf32>
    %36 = arith.mulf %33, %35 : vector<4x8x32xf32>
    %37 = arith.truncf %36 : vector<4x8x32xf32> to vector<4x8x32xbf16>
    %c0_17 = arith.constant 0 : index
    %c0_18 = arith.constant 0 : index
    %c0_19 = arith.constant 0 : index
    %c0_20 = arith.constant 0 : index
    %38 = vector.load %arg8[%c0_17, %c0_18, %c0_19, %c0_20] : memref<1x4x32x128xbf16, #tpu.memory_space<vmem>>, vector<1x4x32x128xbf16>
    %39 = vector.shape_cast %38 : vector<1x4x32x128xbf16> to vector<4x32x128xbf16>
    "tpu.trace_start"() <{level = 10 : i32, message = "nqd,ndo->nqo"}> : () -> ()
    %cst_21 = arith.constant dense<0.000000e+00> : vector<4x8x128xf32>
    %40 = tpu.matmul %37, %39, %cst_21 {dimension_numbers = #tpu.dot_dimension_numbers<[2], [1], [1], [2], [0, 0, 0, 1, 1, 2], [0], [0]>} : vector<4x8x32xbf16>, vector<4x32x128xbf16>, vector<4x8x128xf32> -> vector<4x8x128xf32>
    "tpu.trace_stop"() : () -> ()
    %cst_22 = arith.constant dense<0.000000e+00> : vector<8x128xf32>
    %41 = vector.multi_reduction <add>, %40, %cst_22 [0] : vector<4x8x128xf32> to vector<8x128xf32>
    %c0_23 = arith.constant 0 : index
    %c0_24 = arith.constant 0 : index
    %c0_25 = arith.constant 0 : index
    %42 = vector.load %arg9[%c0_23, %c0_24, %c0_25] : memref<1x1x128xf32, #tpu.memory_space<vmem>>, vector<1x1x128xf32>
    %43 = vector.shape_cast %42 : vector<1x1x128xf32> to vector<1x128xf32>
    %44 = vector.broadcast %43 : vector<1x128xf32> to vector<8x128xf32>
    %45 = arith.addf %41, %44 : vector<8x128xf32>
    %46 = arith.addf %3, %45 : vector<8x128xf32>
    %c0_26 = arith.constant 0 : index
    %c0_27 = arith.constant 0 : index
    %c0_28 = arith.constant 0 : index
    %47 = vector.load %arg10[%c0_26, %c0_27, %c0_28] : memref<1x1x128xf32, #tpu.memory_space<vmem>>, vector<1x1x128xf32>
    %48 = vector.shape_cast %47 : vector<1x1x128xf32> to vector<1x128xf32>
    %c0_29 = arith.constant 0 : index
    %c0_30 = arith.constant 0 : index
    %c0_31 = arith.constant 0 : index
    %49 = vector.load %arg11[%c0_29, %c0_30, %c0_31] : memref<1x1x128xf32, #tpu.memory_space<vmem>>, vector<1x1x128xf32>
    %50 = vector.shape_cast %49 : vector<1x1x128xf32> to vector<1x128xf32>
    %cst_32 = arith.constant dense<0.000000e+00> : vector<8xf32>
    %51 = vector.multi_reduction <add>, %46, %cst_32 [1] : vector<8x128xf32> to vector<8xf32>
    %52 = vector.shape_cast %51 : vector<8xf32> to vector<8x1xf32>
    %cst_33 = arith.constant 1.280000e+02 : f32
    %53 = vector.broadcast %cst_33 : f32 to vector<8x1xf32>
    %54 = arith.divf %52, %53 : vector<8x1xf32>
    %55 = vector.broadcast %54 : vector<8x1xf32> to vector<8x128xf32>
    %56 = arith.subf %46, %55 : vector<8x128xf32>
    %57 = arith.mulf %56, %56 : vector<8x128xf32>
    %cst_34 = arith.constant dense<0.000000e+00> : vector<8xf32>
    %58 = vector.multi_reduction <add>, %57, %cst_34 [1] : vector<8x128xf32> to vector<8xf32>
    %59 = vector.shape_cast %58 : vector<8xf32> to vector<8x1xf32>
    %cst_35 = arith.constant 1.280000e+02 : f32
    %60 = vector.broadcast %cst_35 : f32 to vector<8x1xf32>
    %61 = arith.divf %59, %60 : vector<8x1xf32>
    %62 = vector.broadcast %54 : vector<8x1xf32> to vector<8x128xf32>
    %63 = arith.subf %46, %62 : vector<8x128xf32>
    %cst_36 = arith.constant 9.99999996E-13 : f32
    %64 = vector.broadcast %cst_36 : f32 to vector<8x1xf32>
    %65 = arith.addf %61, %64 : vector<8x1xf32>
    %66 = math.rsqrt %65 : vector<8x1xf32>
    %67 = vector.broadcast %66 : vector<8x1xf32> to vector<8x128xf32>
    %68 = arith.mulf %63, %67 : vector<8x128xf32>
    %69 = vector.broadcast %48 : vector<1x128xf32> to vector<8x128xf32>
    %70 = arith.mulf %68, %69 : vector<8x128xf32>
    %71 = vector.broadcast %50 : vector<1x128xf32> to vector<8x128xf32>
    %72 = arith.addf %70, %71 : vector<8x128xf32>
    %73 = arith.truncf %72 : vector<8x128xf32> to vector<8x128xbf16>
    %c0_37 = arith.constant 0 : index
    %c0_38 = arith.constant 0 : index
    %c0_39 = arith.constant 0 : index
    %74 = vector.load %arg12[%c0_37, %c0_38, %c0_39] : memref<1x128x512xbf16, #tpu.memory_space<vmem>>, vector<1x128x512xbf16>
    %75 = vector.shape_cast %74 : vector<1x128x512xbf16> to vector<128x512xbf16>
    %cst_40 = arith.constant dense<0.000000e+00> : vector<8x512xf32>
    %76 = tpu.matmul %73, %75, %cst_40 {dimension_numbers = #tpu.dot_dimension_numbers<[1], [0], [0], [1], [0, 0, 1, 1], [], []>} : vector<8x128xbf16>, vector<128x512xbf16>, vector<8x512xf32> -> vector<8x512xf32>
    %c0_41 = arith.constant 0 : index
    %c0_42 = arith.constant 0 : index
    %c0_43 = arith.constant 0 : index
    %77 = vector.load %arg13[%c0_41, %c0_42, %c0_43] : memref<1x1x512xf32, #tpu.memory_space<vmem>>, vector<1x1x512xf32>
    %78 = vector.shape_cast %77 : vector<1x1x512xf32> to vector<1x512xf32>
    %79 = vector.broadcast %78 : vector<1x512xf32> to vector<8x512xf32>
    %80 = arith.addf %76, %79 : vector<8x512xf32>
    %cst_44 = arith.constant 5.000000e-01 : f32
    %81 = vector.broadcast %cst_44 : f32 to vector<8x512xf32>
    %82 = arith.mulf %81, %80 : vector<8x512xf32>
    %cst_45 = arith.constant 4.471500e-02 : f32
    %83 = vector.broadcast %cst_45 : f32 to vector<8x512xf32>
    %84 = arith.mulf %83, %80 : vector<8x512xf32>
    %85 = arith.mulf %84, %80 : vector<8x512xf32>
    %86 = arith.mulf %85, %80 : vector<8x512xf32>
    %87 = arith.addf %80, %86 : vector<8x512xf32>
    %cst_46 = arith.constant 0.797884583 : f32
    %88 = vector.broadcast %cst_46 : f32 to vector<8x512xf32>
    %89 = arith.mulf %88, %87 : vector<8x512xf32>
    %90 = math.tanh %89 : vector<8x512xf32>
    %cst_47 = arith.constant 1.000000e+00 : f32
    %91 = vector.broadcast %cst_47 : f32 to vector<8x512xf32>
    %92 = arith.addf %91, %90 : vector<8x512xf32>
    %93 = arith.mulf %82, %92 : vector<8x512xf32>
    %94 = arith.truncf %93 : vector<8x512xf32> to vector<8x512xbf16>
    %c0_48 = arith.constant 0 : index
    %c0_49 = arith.constant 0 : index
    %c0_50 = arith.constant 0 : index
    %95 = vector.load %arg14[%c0_48, %c0_49, %c0_50] : memref<1x512x128xbf16, #tpu.memory_space<vmem>>, vector<1x512x128xbf16>
    %96 = vector.shape_cast %95 : vector<1x512x128xbf16> to vector<512x128xbf16>
    %cst_51 = arith.constant dense<0.000000e+00> : vector<8x128xf32>
    %97 = tpu.matmul %94, %96, %cst_51 {dimension_numbers = #tpu.dot_dimension_numbers<[1], [0], [0], [1], [0, 0, 1, 1], [], []>} : vector<8x512xbf16>, vector<512x128xbf16>, vector<8x128xf32> -> vector<8x128xf32>
    %c0_52 = arith.constant 0 : index
    %c0_53 = arith.constant 0 : index
    %c0_54 = arith.constant 0 : index
    %98 = vector.load %arg15[%c0_52, %c0_53, %c0_54] : memref<1x1x128xf32, #tpu.memory_space<vmem>>, vector<1x1x128xf32>
    %99 = vector.shape_cast %98 : vector<1x1x128xf32> to vector<1x128xf32>
    %100 = vector.broadcast %99 : vector<1x128xf32> to vector<8x128xf32>
    %101 = arith.addf %97, %100 : vector<8x128xf32>
    %102 = arith.addf %72, %101 : vector<8x128xf32>
    %c0_55 = arith.constant 0 : index
    %c0_56 = arith.constant 0 : index
    %c0_57 = arith.constant 0 : index
    %103 = vector.load %arg16[%c0_55, %c0_56, %c0_57] : memref<1x1x128xf32, #tpu.memory_space<vmem>>, vector<1x1x128xf32>
    %104 = vector.shape_cast %103 : vector<1x1x128xf32> to vector<1x128xf32>
    %c0_58 = arith.constant 0 : index
    %c0_59 = arith.constant 0 : index
    %c0_60 = arith.constant 0 : index
    %105 = vector.load %arg17[%c0_58, %c0_59, %c0_60] : memref<1x1x128xf32, #tpu.memory_space<vmem>>, vector<1x1x128xf32>
    %106 = vector.shape_cast %105 : vector<1x1x128xf32> to vector<1x128xf32>
    %cst_61 = arith.constant dense<0.000000e+00> : vector<8xf32>
    %107 = vector.multi_reduction <add>, %102, %cst_61 [1] : vector<8x128xf32> to vector<8xf32>
    %108 = vector.shape_cast %107 : vector<8xf32> to vector<8x1xf32>
    %cst_62 = arith.constant 1.280000e+02 : f32
    %109 = vector.broadcast %cst_62 : f32 to vector<8x1xf32>
    %110 = arith.divf %108, %109 : vector<8x1xf32>
    %111 = vector.broadcast %110 : vector<8x1xf32> to vector<8x128xf32>
    %112 = arith.subf %102, %111 : vector<8x128xf32>
    %113 = arith.mulf %112, %112 : vector<8x128xf32>
    %cst_63 = arith.constant dense<0.000000e+00> : vector<8xf32>
    %114 = vector.multi_reduction <add>, %113, %cst_63 [1] : vector<8x128xf32> to vector<8xf32>
    %115 = vector.shape_cast %114 : vector<8xf32> to vector<8x1xf32>
    %cst_64 = arith.constant 1.280000e+02 : f32
    %116 = vector.broadcast %cst_64 : f32 to vector<8x1xf32>
    %117 = arith.divf %115, %116 : vector<8x1xf32>
    %118 = vector.broadcast %110 : vector<8x1xf32> to vector<8x128xf32>
    %119 = arith.subf %102, %118 : vector<8x128xf32>
    %cst_65 = arith.constant 9.99999996E-13 : f32
    %120 = vector.broadcast %cst_65 : f32 to vector<8x1xf32>
    %121 = arith.addf %117, %120 : vector<8x1xf32>
    %122 = math.rsqrt %121 : vector<8x1xf32>
    %123 = vector.broadcast %122 : vector<8x1xf32> to vector<8x128xf32>
    %124 = arith.mulf %119, %123 : vector<8x128xf32>
    %125 = vector.broadcast %104 : vector<1x128xf32> to vector<8x128xf32>
    %126 = arith.mulf %124, %125 : vector<8x128xf32>
    %127 = vector.broadcast %106 : vector<1x128xf32> to vector<8x128xf32>
    %128 = arith.addf %126, %127 : vector<8x128xf32>
    %c0_66 = arith.constant 0 : index
    %c0_67 = arith.constant 0 : index
    %129 = vector.load %arg19[%c0_66, %c0_67] : memref<8x128xf32, #tpu.memory_space<vmem>>, vector<8x128xf32>
    tpu.vector_store %arg19[%c0_66, %c0_67], %128 {strides = array<i32>} : memref<8x128xf32, #tpu.memory_space<vmem>>, vector<8x128xf32>,
    %c1_i32 = arith.constant 1 : i32
    %130 = arith.cmpi eq, %arg1, %c1_i32 : i32
    %131 = arith.extui %130 : i1 to i32
    %c0_i32_68 = arith.constant 0 : i32
    %132 = arith.cmpi ne, %131, %c0_i32_68 : i32
    scf.if %132 {
      %133 = vector.shape_cast %128 : vector<8x128xf32> to vector<1x8x128xf32>
      %c0_69 = arith.constant 0 : index
      %c0_70 = arith.constant 0 : index
      %c0_71 = arith.constant 0 : index
      %134 = vector.load %arg18[%c0_69, %c0_70, %c0_71] : memref<1x8x128xf32, #tpu.memory_space<vmem>>, vector<1x8x128xf32>
      tpu.vector_store %arg18[%c0_69, %c0_70, %c0_71], %133 {strides = array<i32>} : memref<1x8x128xf32, #tpu.memory_space<vmem>>, vector<1x8x128xf32>,
    } else {
    }
    return
  }
  func.func @transform_0(%arg0: i32, %arg1: i32) -> (i32, i32, i32) {
    %c0_i32 = arith.constant 0 : i32
    %c0_i32_0 = arith.constant 0 : i32
    %c0_i32_1 = arith.constant 0 : i32
    return %arg0, %c0_i32, %c0_i32_0 : i32, i32, i32
  }
  func.func @transform_1(%arg0: i32, %arg1: i32) -> (i32, i32, i32) {
    %c0_i32 = arith.constant 0 : i32
    %c0_i32_0 = arith.constant 0 : i32
    %c0_i32_1 = arith.constant 0 : i32
    return %arg0, %c0_i32, %c0_i32_0 : i32, i32, i32
  }
  func.func @transform_2(%arg0: i32, %arg1: i32) -> (i32, i32) {
    %c0_i32 = arith.constant 0 : i32
    %c0_i32_0 = arith.constant 0 : i32
    %c0_i32_1 = arith.constant 0 : i32
    return %c0_i32, %c0_i32_0 : i32, i32
  }
  func.func @transform_3(%arg0: i32, %arg1: i32) -> (i32, i32) {
    %c0_i32 = arith.constant 0 : i32
    %c0_i32_0 = arith.constant 0 : i32
    %c0_i32_1 = arith.constant 0 : i32
    return %c0_i32, %c0_i32_0 : i32, i32
  }
  func.func @transform_4(%arg0: i32, %arg1: i32) -> (i32, i32, i32, i32) {
    %c0_i32 = arith.constant 0 : i32
    %c0_i32_0 = arith.constant 0 : i32
    %c0_i32_1 = arith.constant 0 : i32
    %c0_i32_2 = arith.constant 0 : i32
    return %arg1, %c0_i32, %c0_i32_0, %c0_i32_1 : i32, i32, i32, i32
  }
  func.func @transform_5(%arg0: i32, %arg1: i32) -> (i32, i32, i32, i32) {
    %c0_i32 = arith.constant 0 : i32
    %c0_i32_0 = arith.constant 0 : i32
    %c0_i32_1 = arith.constant 0 : i32
    %c0_i32_2 = arith.constant 0 : i32
    return %arg1, %c0_i32, %c0_i32_0, %c0_i32_1 : i32, i32, i32, i32
  }
  func.func @transform_6(%arg0: i32, %arg1: i32) -> (i32, i32, i32, i32) {
    %c0_i32 = arith.constant 0 : i32
    %c0_i32_0 = arith.constant 0 : i32
    %c0_i32_1 = arith.constant 0 : i32
    %c0_i32_2 = arith.constant 0 : i32
    return %arg1, %c0_i32, %c0_i32_0, %c0_i32_1 : i32, i32, i32, i32
  }
  func.func @transform_7(%arg0: i32, %arg1: i32) -> (i32, i32, i32) {
    %c0_i32 = arith.constant 0 : i32
    %c0_i32_0 = arith.constant 0 : i32
    %c0_i32_1 = arith.constant 0 : i32
    return %arg1, %c0_i32, %c0_i32_0 : i32, i32, i32
  }
  func.func @transform_8(%arg0: i32, %arg1: i32) -> (i32, i32, i32) {
    %c0_i32 = arith.constant 0 : i32
    %c0_i32_0 = arith.constant 0 : i32
    %c0_i32_1 = arith.constant 0 : i32
    return %arg1, %c0_i32, %c0_i32_0 : i32, i32, i32
  }
  func.func @transform_9(%arg0: i32, %arg1: i32) -> (i32, i32, i32) {
    %c0_i32 = arith.constant 0 : i32
    %c0_i32_0 = arith.constant 0 : i32
    %c0_i32_1 = arith.constant 0 : i32
    return %arg1, %c0_i32, %c0_i32_0 : i32, i32, i32
  }
  func.func @transform_10(%arg0: i32, %arg1: i32) -> (i32, i32, i32) {
    %c0_i32 = arith.constant 0 : i32
    %c0_i32_0 = arith.constant 0 : i32
    %c0_i32_1 = arith.constant 0 : i32
    return %arg1, %c0_i32, %c0_i32_0 : i32, i32, i32
  }
  func.func @transform_11(%arg0: i32, %arg1: i32) -> (i32, i32, i32) {
    %c0_i32 = arith.constant 0 : i32
    %c0_i32_0 = arith.constant 0 : i32
    %c0_i32_1 = arith.constant 0 : i32
    return %arg1, %c0_i32, %c0_i32_0 : i32, i32, i32
  }
  func.func @transform_12(%arg0: i32, %arg1: i32) -> (i32, i32, i32) {
    %c0_i32 = arith.constant 0 : i32
    %c0_i32_0 = arith.constant 0 : i32
    %c0_i32_1 = arith.constant 0 : i32
    return %arg1, %c0_i32, %c0_i32_0 : i32, i32, i32
  }
  func.func @transform_13(%arg0: i32, %arg1: i32) -> (i32, i32, i32) {
    %c0_i32 = arith.constant 0 : i32
    %c0_i32_0 = arith.constant 0 : i32
    %c0_i32_1 = arith.constant 0 : i32
    return %arg1, %c0_i32, %c0_i32_0 : i32, i32, i32
  }
  func.func @transform_14(%arg0: i32, %arg1: i32) -> (i32, i32, i32) {
    %c0_i32 = arith.constant 0 : i32
    %c0_i32_0 = arith.constant 0 : i32
    %c0_i32_1 = arith.constant 0 : i32
    return %arg1, %c0_i32, %c0_i32_0 : i32, i32, i32
  }
  func.func @transform_15(%arg0: i32, %arg1: i32) -> (i32, i32, i32) {
    %c0_i32 = arith.constant 0 : i32
    %c0_i32_0 = arith.constant 0 : i32
    %c0_i32_1 = arith.constant 0 : i32
    return %arg1, %c0_i32, %c0_i32_0 : i32, i32, i32
  }
  func.func @transform_16(%arg0: i32, %arg1: i32) -> (i32, i32, i32) {
    %c0_i32 = arith.constant 0 : i32
    %c0_i32_0 = arith.constant 0 : i32
    %c0_i32_1 = arith.constant 0 : i32
    return %arg0, %c0_i32, %c0_i32_0 : i32, i32, i32
  }
}

</mosaic_0001>

<llo_original>
// kernel: tpu_custom_call.1
$region0: #{tpu_custom_call.1}
  #allocation0 [shape = 'u32[]', space=smem, size = 0x4, offset = 0x4, fixed_abs, tag = 'smem constant byte address 0x4 - core index']
  #allocation1 [shape = 'u32[144,128]{1,0:T(1,128)}', space=vmem, size = 0x12000, scoped, tag = 'internal scratch']
  #allocation2 [shape = 'f32[8,128]{1,0:T(8,128)}', space=vmem, size = 0x1000, scoped, tag = 'scratch operand']
  %s0 = inlined_call_operand.hbm [shape: f32[2,8,128], index: 0, kind: input, shape index: {}]
  %s1 = inlined_call_operand.hbm [shape: f32[2,1,8], index: 1, kind: input, shape index: {}]
  %s2 = inlined_call_operand.hbm [shape: f32[1,128], index: 2, kind: input, shape index: {}]
  %s3 = inlined_call_operand.hbm [shape: f32[1,128], index: 3, kind: input, shape index: {}]
  %s4 = inlined_call_operand.hbm [shape: bf16[2,12,128,32], index: 4, kind: input, shape index: {}]
  %s5 = inlined_call_operand.hbm [shape: f32[2,12,1,32], index: 5, kind: input, shape index: {}]
  %s6 = inlined_call_operand.hbm [shape: bf16[2,4,32,128], index: 6, kind: input, shape index: {}]
  %s7 = inlined_call_operand.hbm [shape: f32[2,1,128], index: 7, kind: input, shape index: {}]
  %s8 = inlined_call_operand.hbm [shape: f32[2,1,128], index: 8, kind: input, shape index: {}]
  %s9 = inlined_call_operand.hbm [shape: f32[2,1,128], index: 9, kind: input, shape index: {}]
  %s10 = inlined_call_operand.hbm [shape: bf16[2,128,512], index: 10, kind: input, shape index: {}]
  %s11 = inlined_call_operand.hbm [shape: f32[2,1,512], index: 11, kind: input, shape index: {}]
  %s12 = inlined_call_operand.hbm [shape: bf16[2,512,128], index: 12, kind: input, shape index: {}]
  %s13 = inlined_call_operand.hbm [shape: f32[2,1,128], index: 13, kind: input, shape index: {}]
  %s14 = inlined_call_operand.hbm [shape: f32[2,1,128], index: 14, kind: input, shape index: {}]
  %s15 = inlined_call_operand.hbm [shape: f32[2,1,128], index: 15, kind: input, shape index: {}]
  %s16 = inlined_call_operand.hbm [shape: f32[2,8,128], index: 16, kind: output, shape index: {}]
  %s17 = sld [smem:[#allocation0]]
  $region169: #{tpu_custom_call.1} parent=0
    _
  %s19 = ssub.s32 1, %s17
  %s20 = scalar_select 0, %s19, %s17
  $region1: #{tpu_custom_call.1} parent=0
    #allocation3 [shape = 'u8[8192]{0}', space=vmem, size = 0x2000, scoped, tag = 'input window, operand 0']
    #allocation4 [shape = 's32[2]{0}', space=sflag, size = 0x8, scoped, tag = 'scoped memory for tpu_custom_call.1']
    #allocation5 [shape = 's32[2]{0}', space=sflag, size = 0x8, scoped, tag = 'scoped memory for tpu_custom_call.1']
    #allocation6 [shape = 'u8[1024]{0}', space=vmem, size = 0x400, scoped, tag = 'input window, operand 1']
    #allocation7 [shape = 's32[2]{0}', space=sflag, size = 0x8, scoped, tag = 'scoped memory for tpu_custom_call.1']
    #allocation8 [shape = 'u8[512]{0}', space=vmem, size = 0x400, scoped, tag = 'input window, operand 2, single buffered']
    #allocation9 [shape = 'u8[512]{0}', space=vmem, size = 0x400, scoped, tag = 'input window, operand 3, single buffered']
    #allocation10 [shape = 's32[1]{0}', space=sflag, size = 0x4, scoped, tag = 'scoped memory for tpu_custom_call.1']
    #allocation11 [shape = 'u8[786432]{0}', space=vmem, size = 0xc0000, scoped, tag = 'input window, operand 4']
    #allocation12 [shape = 'u8[12288]{0}', space=vmem, size = 0x3000, scoped, tag = 'input window, operand 5']
    #allocation13 [shape = 'u8[65536]{0}', space=vmem, size = 0x10000, scoped, tag = 'input window, operand 6']
    #allocation14 [shape = 'u8[1024]{0}', space=vmem, size = 0x400, scoped, tag = 'input window, operand 7']
    #allocation15 [shape = 'u8[1024]{0}', space=vmem, size = 0x400, scoped, tag = 'input window, operand 8']
    #allocation16 [shape = 'u8[1024]{0}', space=vmem, size = 0x400, scoped, tag = 'input window, operand 9']
    #allocation17 [shape = 'u8[262144]{0}', space=vmem, size = 0x40000, scoped, tag = 'input window, operand 10']
    #allocation18 [shape = 'u8[4096]{0}', space=vmem, size = 0x1000, scoped, tag = 'input window, operand 11']
    #allocation19 [shape = 'u8[262144]{0}', space=vmem, size = 0x40000, scoped, tag = 'input window, operand 12']
    #allocation20 [shape = 'u8[1024]{0}', space=vmem, size = 0x400, scoped, tag = 'input window, operand 13']
    #allocation21 [shape = 'u8[1024]{0}', space=vmem, size = 0x400, scoped, tag = 'input window, operand 14']
    #allocation22 [shape = 'u8[1024]{0}', space=vmem, size = 0x400, scoped, tag = 'input window, operand 15']
    #allocation23 [shape = 'u8[8192]{0}', space=vmem, size = 0x2000, scoped, tag = 'output window, operand 0']
    %21 = vsyncpa [#allocation4], 0
    %s22 = scalar_lea.sflag [#allocation4], 1
    %23 = vsyncpa %s22, 0
    %24 = vsyncpa [#allocation7], 0
    %s25 = scalar_lea.sflag [#allocation7], 1
    %26 = vsyncpa %s25, 0
    %27 = vsyncpa [#allocation10], 0
    %28 = vsyncpa [#allocation5], 0
    %s29 = scalar_lea.sflag [#allocation5], 1
    %30 = vsyncpa %s29, 0
    loop: start=0, step=1, limit=6
    $region2: #{tpu_custom_call.1} parent=1 // loop_pre_header
      _
    $region3: #{tpu_custom_call.1} parent=1 // loop_header
      %s32 = sphi 0, %s36
      %p33 = scmp.ge.s32.totalorder %s32, 6
      %s39 = sphi 0, %s51
      %s40 = sphi 0, %s47
      %s41 = sphi 0, %s39
      %s42 = sphi 0, %s40
      %s43 = sphi 0, %s41
      %s44 = sphi 0, %s42
      %s54 = sphi 0, %s56
      %s57 = sphi 0, %s54
      %s58 = sphi 0, %s57
      %s74 = sphi 0, %s58
      %s80 = sphi 0, %s82
      %s83 = sphi 0, %s80
      %s84 = sphi 0, %s83
      %s100 = sphi 0, %s84
      %s104 = sphi 0, %s104
      %s106 = sphi 0, %s104
      %s107 = sphi 0, %s106
      %s121 = sphi 0, %s107
      %s125 = sphi 0, %s125
      %s127 = sphi 0, %s125
      %s128 = sphi 0, %s127
      %s142 = sphi 0, %s128
      %s148 = sphi 0, %s150
      %s151 = sphi 0, %s148
      %s152 = sphi 0, %s151
      %s168 = sphi 0, %s152
      %s174 = sphi 0, %s176
      %s177 = sphi 0, %s174
      %s178 = sphi 0, %s177
      %s194 = sphi 0, %s178
      %s200 = sphi 0, %s202
      %s203 = sphi 0, %s200
      %s204 = sphi 0, %s203
      %s220 = sphi 0, %s204
      %s226 = sphi 0, %s228
      %s229 = sphi 0, %s226
      %s230 = sphi 0, %s229
      %s246 = sphi 0, %s230
      %s252 = sphi 0, %s254
      %s255 = sphi 0, %s252
      %s256 = sphi 0, %s255
      %s272 = sphi 0, %s256
      %s278 = sphi 0, %s280
      %s281 = sphi 0, %s278
      %s282 = sphi 0, %s281
      %s298 = sphi 0, %s282
      %s304 = sphi 0, %s306
      %s307 = sphi 0, %s304
      %s308 = sphi 0, %s307
      %s324 = sphi 0, %s308
      %s330 = sphi 0, %s332
      %s333 = sphi 0, %s330
      %s334 = sphi 0, %s333
      %s350 = sphi 0, %s334
      %s356 = sphi 0, %s358
      %s359 = sphi 0, %s356
      %s360 = sphi 0, %s359
      %s376 = sphi 0, %s360
      %s382 = sphi 0, %s384
      %s385 = sphi 0, %s382
      %s386 = sphi 0, %s385
      %s402 = sphi 0, %s386
      %s408 = sphi 0, %s410
      %s411 = sphi 0, %s408
      %s412 = sphi 0, %s411
      %s428 = sphi 0, %s412
      %s434 = sphi 0, %s436
      %s437 = sphi 0, %s434
      %s438 = sphi 0, %s437
      %s454 = sphi 0, %s438
      %s460 = sphi 0, %s462
      %s463 = sphi 0, %s460
      %s464 = sphi 0, %s463
      %s480 = sphi 0, %s464
    $region4: #{tpu_custom_call.1} parent=1 // loop_header_branch
      %35 = sbr.rel (%p33) target = $region8
    $region5: #{tpu_custom_call.1} parent=1 // loop_body
      %s37 = ssub.s32 %s32, 1
      %s38 = ssub.s32 %s32, 2
      %s45 = sadd.s32 1, %s40
      %p46 = scmp.ge.s32.totalorder %s45, 2
      %s47 = scalar_select %p46, 0, %s45
      %s48 = sadd.s32 1, %s39
      %s49 = scalar_select %p46, %s48, %s39
      %p50 = scmp.ge.s32.totalorder %s49, 2
      %s51 = scalar_select %p50, 0, %s49
      %s52 = ssub.s32 %s39, %s51
      %p53 = scmp.eq.s32.totalorder %s52, 0
      %s55 = sadd.s32 %s54, 1
      %s56 = scalar_select %p53, %s54, %s55
      %p59 = pneg %p53
      %p60 = scmp.eq.s32.totalorder %s32, 3
      %p61 = por %p59, %p60
      %p62 = scmp.ne.s32.totalorder %s54, %s57
      %p63 = scmp.eq.s32.totalorder %s32, 0
      %p64 = por %p62, %p63
      %p65 = scmp.ne.s32.totalorder %s54, %s57
      %p66 = scmp.eq.s32.totalorder %s37, 3
      %p67 = por %p65, %p66
      %p68 = scmp.ne.s32.totalorder %s57, %s58
      %p69 = scmp.eq.s32.totalorder %s37, 0
      %p70 = por %p68, %p69
      %p71 = scmp.ne.s32.totalorder %s57, %s58
      %p72 = scmp.eq.s32.totalorder %s38, 3
      %p73 = por %p71, %p72
      %p75 = scmp.ne.s32.totalorder %s58, %s74
      %p76 = scmp.eq.s32.totalorder %s38, 0
      %p77 = por %p75, %p76
      %s78 = ssub.s32 %s39, %s51
      %p79 = scmp.eq.s32.totalorder %s78, 0
      %s81 = sadd.s32 %s80, 1
      %s82 = scalar_select %p79, %s80, %s81
      %p85 = pneg %p79
      %p86 = scmp.eq.s32.totalorder %s32, 3
      %p87 = por %p85, %p86
      %p88 = scmp.ne.s32.totalorder %s80, %s83
      %p89 = scmp.eq.s32.totalorder %s32, 0
      %p90 = por %p88, %p89
      %p91 = scmp.ne.s32.totalorder %s80, %s83
      %p92 = scmp.eq.s32.totalorder %s37, 3
      %p93 = por %p91, %p92
      %p94 = scmp.ne.s32.totalorder %s83, %s84
      %p95 = scmp.eq.s32.totalorder %s37, 0
      %p96 = por %p94, %p95
      %p97 = scmp.ne.s32.totalorder %s83, %s84
      %p98 = scmp.eq.s32.totalorder %s38, 3
      %p99 = por %p97, %p98
      %p101 = scmp.ne.s32.totalorder %s84, %s100
      %p102 = scmp.eq.s32.totalorder %s38, 0
      %p103 = por %p101, %p102
      %s105 = sadd.s32 %s104, 1
      %p108 = scmp.eq.s32.totalorder %s32, 3
      %p109 = scmp.ne.s32.totalorder %s104, %s106
      %p110 = scmp.eq.s32.totalorder %s32, 0
      %p111 = por %p109, %p110
      %p112 = scmp.ne.s32.totalorder %s104, %s106
      %p113 = scmp.eq.s32.totalorder %s37, 3
      %p114 = por %p112, %p113
      %p115 = scmp.ne.s32.totalorder %s106, %s107
      %p116 = scmp.eq.s32.totalorder %s37, 0
      %p117 = por %p115, %p116
      %p118 = scmp.ne.s32.totalorder %s106, %s107
      %p119 = scmp.eq.s32.totalorder %s38, 3
      %p120 = por %p118, %p119
      %p122 = scmp.ne.s32.totalorder %s107, %s121
      %p123 = scmp.eq.s32.totalorder %s38, 0
      %p124 = por %p122, %p123
      %s126 = sadd.s32 %s125, 1
      %p129 = scmp.eq.s32.totalorder %s32, 3
      %p130 = scmp.ne.s32.totalorder %s125, %s127
      %p131 = scmp.eq.s32.totalorder %s32, 0
      %p132 = por %p130, %p131
      %p133 = scmp.ne.s32.totalorder %s125, %s127
      %p134 = scmp.eq.s32.totalorder %s37, 3
      %p135 = por %p133, %p134
      %p136 = scmp.ne.s32.totalorder %s127, %s128
      %p137 = scmp.eq.s32.totalorder %s37, 0
      %p138 = por %p136, %p137
      %p139 = scmp.ne.s32.totalorder %s127, %s128
      %p140 = scmp.eq.s32.totalorder %s38, 3
      %p141 = por %p139, %p140
      %p143 = scmp.ne.s32.totalorder %s128, %s142
      %p144 = scmp.eq.s32.totalorder %s38, 0
      %p145 = por %p143, %p144
      %s146 = ssub.s32 %s40, %s47
      %p147 = scmp.eq.s32.totalorder %s146, 0
      %s149 = sadd.s32 %s148, 1
      %s150 = scalar_select %p147, %s148, %s149
      %p153 = pneg %p147
      %p154 = scmp.eq.s32.totalorder %s32, 3
      %p155 = por %p153, %p154
      %p156 = scmp.ne.s32.totalorder %s148, %s151
      %p157 = scmp.eq.s32.totalorder %s32, 0
      %p158 = por %p156, %p157
      %p159 = scmp.ne.s32.totalorder %s148, %s151
      %p160 = scmp.eq.s32.totalorder %s37, 3
      %p161 = por %p159, %p160
      %p162 = scmp.ne.s32.totalorder %s151, %s152
      %p163 = scmp.eq.s32.totalorder %s37, 0
      %p164 = por %p162, %p163
      %p165 = scmp.ne.s32.totalorder %s151, %s152
      %p166 = scmp.eq.s32.totalorder %s38, 3
      %p167 = por %p165, %p166
      %p169 = scmp.ne.s32.totalorder %s152, %s168
      %p170 = scmp.eq.s32.totalorder %s38, 0
      %p171 = por %p169, %p170
      %s172 = ssub.s32 %s40, %s47
      %p173 = scmp.eq.s32.totalorder %s172, 0
      %s175 = sadd.s32 %s174, 1
      %s176 = scalar_select %p173, %s174, %s175
      %p179 = pneg %p173
      %p180 = scmp.eq.s32.totalorder %s32, 3
      %p181 = por %p179, %p180
      %p182 = scmp.ne.s32.totalorder %s174, %s177
      %p183 = scmp.eq.s32.totalorder %s32, 0
      %p184 = por %p182, %p183
      %p185 = scmp.ne.s32.totalorder %s174, %s177
      %p186 = scmp.eq.s32.totalorder %s37, 3
      %p187 = por %p185, %p186
      %p188 = scmp.ne.s32.totalorder %s177, %s178
      %p189 = scmp.eq.s32.totalorder %s37, 0
      %p190 = por %p188, %p189
      %p191 = scmp.ne.s32.totalorder %s177, %s178
      %p192 = scmp.eq.s32.totalorder %s38, 3
      %p193 = por %p191, %p192
      %p195 = scmp.ne.s32.totalorder %s178, %s194
      %p196 = scmp.eq.s32.totalorder %s38, 0
      %p197 = por %p195, %p196
      %s198 = ssub.s32 %s40, %s47
      %p199 = scmp.eq.s32.totalorder %s198, 0
      %s201 = sadd.s32 %s200, 1
      %s202 = scalar_select %p199, %s200, %s201
      %p205 = pneg %p199
      %p206 = scmp.eq.s32.totalorder %s32, 3
      %p207 = por %p205, %p206
      %p208 = scmp.ne.s32.totalorder %s200, %s203
      %p209 = scmp.eq.s32.totalorder %s32, 0
      %p210 = por %p208, %p209
      %p211 = scmp.ne.s32.totalorder %s200, %s203
      %p212 = scmp.eq.s32.totalorder %s37, 3
      %p213 = por %p211, %p212
      %p214 = scmp.ne.s32.totalorder %s203, %s204
      %p215 = scmp.eq.s32.totalorder %s37, 0
      %p216 = por %p214, %p215
      %p217 = scmp.ne.s32.totalorder %s203, %s204
      %p218 = scmp.eq.s32.totalorder %s38, 3
      %p219 = por %p217, %p218
      %p221 = scmp.ne.s32.totalorder %s204, %s220
      %p222 = scmp.eq.s32.totalorder %s38, 0
      %p223 = por %p221, %p222
      %s224 = ssub.s32 %s40, %s47
      %p225 = scmp.eq.s32.totalorder %s224, 0
      %s227 = sadd.s32 %s226, 1
      %s228 = scalar_select %p225, %s226, %s227
      %p231 = pneg %p225
      %p232 = scmp.eq.s32.totalorder %s32, 3
      %p233 = por %p231, %p232
      %p234 = scmp.ne.s32.totalorder %s226, %s229
      %p235 = scmp.eq.s32.totalorder %s32, 0
      %p236 = por %p234, %p235
      %p237 = scmp.ne.s32.totalorder %s226, %s229
      %p238 = scmp.eq.s32.totalorder %s37, 3
      %p239 = por %p237, %p238
      %p240 = scmp.ne.s32.totalorder %s229, %s230
      %p241 = scmp.eq.s32.totalorder %s37, 0
      %p242 = por %p240, %p241
      %p243 = scmp.ne.s32.totalorder %s229, %s230
      %p244 = scmp.eq.s32.totalorder %s38, 3
      %p245 = por %p243, %p244
      %p247 = scmp.ne.s32.totalorder %s230, %s246
      %p248 = scmp.eq.s32.totalorder %s38, 0
      %p249 = por %p247, %p248
      %s250 = ssub.s32 %s40, %s47
      %p251 = scmp.eq.s32.totalorder %s250, 0
      %s253 = sadd.s32 %s252, 1
      %s254 = scalar_select %p251, %s252, %s253
      %p257 = pneg %p251
      %p258 = scmp.eq.s32.totalorder %s32, 3
      %p259 = por %p257, %p258
      %p260 = scmp.ne.s32.totalorder %s252, %s255
      %p261 = scmp.eq.s32.totalorder %s32, 0
      %p262 = por %p260, %p261
      %p263 = scmp.ne.s32.totalorder %s252, %s255
      %p264 = scmp.eq.s32.totalorder %s37, 3
      %p265 = por %p263, %p264
      %p266 = scmp.ne.s32.totalorder %s255, %s256
      %p267 = scmp.eq.s32.totalorder %s37, 0
      %p268 = por %p266, %p267
      %p269 = scmp.ne.s32.totalorder %s255, %s256
      %p270 = scmp.eq.s32.totalorder %s38, 3
      %p271 = por %p269, %p270
      %p273 = scmp.ne.s32.totalorder %s256, %s272
      %p274 = scmp.eq.s32.totalorder %s38, 0
      %p275 = por %p273, %p274
      %s276 = ssub.s32 %s40, %s47
      %p277 = scmp.eq.s32.totalorder %s276, 0
      %s279 = sadd.s32 %s278, 1
      %s280 = scalar_select %p277, %s278, %s279
      %p283 = pneg %p277
      %p284 = scmp.eq.s32.totalorder %s32, 3
      %p285 = por %p283, %p284
      %p286 = scmp.ne.s32.totalorder %s278, %s281
      %p287 = scmp.eq.s32.totalorder %s32, 0
      %p288 = por %p286, %p287
      %p289 = scmp.ne.s32.totalorder %s278, %s281
      %p290 = scmp.eq.s32.totalorder %s37, 3
      %p291 = por %p289, %p290
      %p292 = scmp.ne.s32.totalorder %s281, %s282
      %p293 = scmp.eq.s32.totalorder %s37, 0
      %p294 = por %p292, %p293
      %p295 = scmp.ne.s32.totalorder %s281, %s282
      %p296 = scmp.eq.s32.totalorder %s38, 3
      %p297 = por %p295, %p296
      %p299 = scmp.ne.s32.totalorder %s282, %s298
      %p300 = scmp.eq.s32.totalorder %s38, 0
      %p301 = por %p299, %p300
      %s302 = ssub.s32 %s40, %s47
      %p303 = scmp.eq.s32.totalorder %s302, 0
      %s305 = sadd.s32 %s304, 1
      %s306 = scalar_select %p303, %s304, %s305
      %p309 = pneg %p303
      %p310 = scmp.eq.s32.totalorder %s32, 3
      %p311 = por %p309, %p310
      %p312 = scmp.ne.s32.totalorder %s304, %s307
      %p313 = scmp.eq.s32.totalorder %s32, 0
      %p314 = por %p312, %p313
      %p315 = scmp.ne.s32.totalorder %s304, %s307
      %p316 = scmp.eq.s32.totalorder %s37, 3
      %p317 = por %p315, %p316
      %p318 = scmp.ne.s32.totalorder %s307, %s308
      %p319 = scmp.eq.s32.totalorder %s37, 0
      %p320 = por %p318, %p319
      %p321 = scmp.ne.s32.totalorder %s307, %s308
      %p322 = scmp.eq.s32.totalorder %s38, 3
      %p323 = por %p321, %p322
      %p325 = scmp.ne.s32.totalorder %s308, %s324
      %p326 = scmp.eq.s32.totalorder %s38, 0
      %p327 = por %p325, %p326
      %s328 = ssub.s32 %s40, %s47
      %p329 = scmp.eq.s32.totalorder %s328, 0
      %s331 = sadd.s32 %s330, 1
      %s332 = scalar_select %p329, %s330, %s331
      %p335 = pneg %p329
      %p336 = scmp.eq.s32.totalorder %s32, 3
      %p337 = por %p335, %p336
      %p338 = scmp.ne.s32.totalorder %s330, %s333
      %p339 = scmp.eq.s32.totalorder %s32, 0
      %p340 = por %p338, %p339
      %p341 = scmp.ne.s32.totalorder %s330, %s333
      %p342 = scmp.eq.s32.totalorder %s37, 3
      %p343 = por %p341, %p342
      %p344 = scmp.ne.s32.totalorder %s333, %s334
      %p345 = scmp.eq.s32.totalorder %s37, 0
      %p346 = por %p344, %p345
      %p347 = scmp.ne.s32.totalorder %s333, %s334
      %p348 = scmp.eq.s32.totalorder %s38, 3
      %p349 = por %p347, %p348
      %p351 = scmp.ne.s32.totalorder %s334, %s350
      %p352 = scmp.eq.s32.totalorder %s38, 0
      %p353 = por %p351, %p352
      %s354 = ssub.s32 %s40, %s47
      %p355 = scmp.eq.s32.totalorder %s354, 0
      %s357 = sadd.s32 %s356, 1
      %s358 = scalar_select %p355, %s356, %s357
      %p361 = pneg %p355
      %p362 = scmp.eq.s32.totalorder %s32, 3
      %p363 = por %p361, %p362
      %p364 = scmp.ne.s32.totalorder %s356, %s359
      %p365 = scmp.eq.s32.totalorder %s32, 0
      %p366 = por %p364, %p365
      %p367 = scmp.ne.s32.totalorder %s356, %s359
      %p368 = scmp.eq.s32.totalorder %s37, 3
      %p369 = por %p367, %p368
      %p370 = scmp.ne.s32.totalorder %s359, %s360
      %p371 = scmp.eq.s32.totalorder %s37, 0
      %p372 = por %p370, %p371
      %p373 = scmp.ne.s32.totalorder %s359, %s360
      %p374 = scmp.eq.s32.totalorder %s38, 3
      %p375 = por %p373, %p374
      %p377 = scmp.ne.s32.totalorder %s360, %s376
      %p378 = scmp.eq.s32.totalorder %s38, 0
      %p379 = por %p377, %p378
      %s380 = ssub.s32 %s40, %s47
      %p381 = scmp.eq.s32.totalorder %s380, 0
      %s383 = sadd.s32 %s382, 1
      %s384 = scalar_select %p381, %s382, %s383
      %p387 = pneg %p381
      %p388 = scmp.eq.s32.totalorder %s32, 3
      %p389 = por %p387, %p388
      %p390 = scmp.ne.s32.totalorder %s382, %s385
      %p391 = scmp.eq.s32.totalorder %s32, 0
      %p392 = por %p390, %p391
      %p393 = scmp.ne.s32.totalorder %s382, %s385
      %p394 = scmp.eq.s32.totalorder %s37, 3
      %p395 = por %p393, %p394
      %p396 = scmp.ne.s32.totalorder %s385, %s386
      %p397 = scmp.eq.s32.totalorder %s37, 0
      %p398 = por %p396, %p397
      %p399 = scmp.ne.s32.totalorder %s385, %s386
      %p400 = scmp.eq.s32.totalorder %s38, 3
      %p401 = por %p399, %p400
      %p403 = scmp.ne.s32.totalorder %s386, %s402
      %p404 = scmp.eq.s32.totalorder %s38, 0
      %p405 = por %p403, %p404
      %s406 = ssub.s32 %s40, %s47
      %p407 = scmp.eq.s32.totalorder %s406, 0
      %s409 = sadd.s32 %s408, 1
      %s410 = scalar_select %p407, %s408, %s409
      %p413 = pneg %p407
      %p414 = scmp.eq.s32.totalorder %s32, 3
      %p415 = por %p413, %p414
      %p416 = scmp.ne.s32.totalorder %s408, %s411
      %p417 = scmp.eq.s32.totalorder %s32, 0
      %p418 = por %p416, %p417
      %p419 = scmp.ne.s32.totalorder %s408, %s411
      %p420 = scmp.eq.s32.totalorder %s37, 3
      %p421 = por %p419, %p420
      %p422 = scmp.ne.s32.totalorder %s411, %s412
      %p423 = scmp.eq.s32.totalorder %s37, 0
      %p424 = por %p422, %p423
      %p425 = scmp.ne.s32.totalorder %s411, %s412
      %p426 = scmp.eq.s32.totalorder %s38, 3
      %p427 = por %p425, %p426
      %p429 = scmp.ne.s32.totalorder %s412, %s428
      %p430 = scmp.eq.s32.totalorder %s38, 0
      %p431 = por %p429, %p430
      %s432 = ssub.s32 %s40, %s47
      %p433 = scmp.eq.s32.totalorder %s432, 0
      %s435 = sadd.s32 %s434, 1
      %s436 = scalar_select %p433, %s434, %s435
      %p439 = pneg %p433
      %p440 = scmp.eq.s32.totalorder %s32, 3
      %p441 = por %p439, %p440
      %p442 = scmp.ne.s32.totalorder %s434, %s437
      %p443 = scmp.eq.s32.totalorder %s32, 0
      %p444 = por %p442, %p443
      %p445 = scmp.ne.s32.totalorder %s434, %s437
      %p446 = scmp.eq.s32.totalorder %s37, 3
      %p447 = por %p445, %p446
      %p448 = scmp.ne.s32.totalorder %s437, %s438
      %p449 = scmp.eq.s32.totalorder %s37, 0
      %p450 = por %p448, %p449
      %p451 = scmp.ne.s32.totalorder %s437, %s438
      %p452 = scmp.eq.s32.totalorder %s38, 3
      %p453 = por %p451, %p452
      %p455 = scmp.ne.s32.totalorder %s438, %s454
      %p456 = scmp.eq.s32.totalorder %s38, 0
      %p457 = por %p455, %p456
      %s458 = ssub.s32 %s39, %s51
      %p459 = scmp.eq.s32.totalorder %s458, 0
      %s461 = sadd.s32 %s460, 1
      %s462 = scalar_select %p459, %s460, %s461
      %p465 = pneg %p459
      %p466 = scmp.eq.s32.totalorder %s32, 3
      %p467 = por %p465, %p466
      %p468 = scmp.ne.s32.totalorder %s460, %s463
      %p469 = scmp.eq.s32.totalorder %s32, 0
      %p470 = por %p468, %p469
      %p471 = scmp.ne.s32.totalorder %s460, %s463
      %p472 = scmp.eq.s32.totalorder %s37, 3
      %p473 = por %p471, %p472
      %p474 = scmp.ne.s32.totalorder %s463, %s464
      %p475 = scmp.eq.s32.totalorder %s37, 0
      %p476 = por %p474, %p475
      %p477 = scmp.ne.s32.totalorder %s463, %s464
      %p478 = scmp.eq.s32.totalorder %s38, 3
      %p479 = por %p477, %p478
      %p481 = scmp.ne.s32.totalorder %s464, %s480
      %p482 = scmp.eq.s32.totalorder %s38, 0
      %p483 = por %p481, %p482
      %p484 = scmp.le.s32.totalorder 1, %s32
      %p485 = scmp.lt.s32.totalorder %s32, 5
      %p486 = pnand %p484, %p485
      %p487 = pneg %p486
      // Predicated region
      $region9: #{tpu_custom_call.1} parent=5 // pred_check
        _
      $region10: #{tpu_custom_call.1} parent=5 // pred_check_branch
        %489 = sbr.rel (%p486) target = $region12
      $region11: #{tpu_custom_call.1} parent=5 // pred_region
        %s490 = ssub.s32 %s32, 1
        // Predicated region
        $region13: #{tpu_custom_call.1} parent=11 // pred_check
          %p491 = pneg %p117
        $region14: #{tpu_custom_call.1} parent=11 // pred_check_branch
          %493 = sbr.rel (%p491) target = $region16
        $region15: #{tpu_custom_call.1} parent=11 // pred_region
          %s495 = ssub.s32 16, 16
          %496 = vsyncadd [#allocation7], %s495
          %s498 = sshll.u32 [#allocation8], 4
          %s499 = int_to_ptr.vmem [resolvable:$true] %s498
          %501 = dma.hbm_to_vmem [thread:$0]  %s2, 16, %s499, [#allocation7]
        $region16: #{tpu_custom_call.1} parent=11 // pred_fallthru
          _
        // Predicated region
        $region17: #{tpu_custom_call.1} parent=11 // pred_check
          %p502 = pneg %p138
        $region18: #{tpu_custom_call.1} parent=11 // pred_check_branch
          %504 = sbr.rel (%p502) target = $region20
        $region19: #{tpu_custom_call.1} parent=11 // pred_region
          %s506 = ssub.s32 16, 16
          %507 = vsyncadd [#allocation10], %s506
          %s509 = sshll.u32 [#allocation9], 4
          %s510 = int_to_ptr.vmem [resolvable:$true] %s509
          %512 = dma.hbm_to_vmem [thread:$0]  %s3, 16, %s510, [#allocation10]
        $region20: #{tpu_custom_call.1} parent=11 // pred_fallthru
          _
      $region12: #{tpu_custom_call.1} parent=5 // pred_fallthru
        _
      %p513 = scmp.lt.s32.totalorder %s32, 4
      // Predicated region
      $region21: #{tpu_custom_call.1} parent=5 // pred_check
        %p514 = pneg %p513
      $region22: #{tpu_custom_call.1} parent=5 // pred_check_branch
        %516 = sbr.rel (%p514) target = $region24
      $region23: #{tpu_custom_call.1} parent=5 // pred_region
        // Predicated region
        $region25: #{tpu_custom_call.1} parent=23 // pred_check
          %p517 = pneg %p64
        $region26: #{tpu_custom_call.1} parent=23 // pred_check_branch
          %519 = sbr.rel (%p517) target = $region28
        $region27: #{tpu_custom_call.1} parent=23 // pred_region
          %s520 = sand.u32 %s32, 1
          %s521 = scalar_lea.sflag [#allocation4], %s520
          %s522 = sand.u32 %s54, 1
          %s523 = smul.addr %s522, 8
          %s524 = scalar_lea.vmem [#allocation3], %s523
          %s526 = ssub.s32 128, 128
          %527 = vsyncadd %s521, %s526
          %s528 = smul.addr %s39, 128
          %s529 = scalar_lea.hbm %s0, %s528
          %s531 = sshll.u32 %s524, 4
          %s532 = int_to_ptr.vmem [resolvable:$true] %s531
          %534 = dma.hbm_to_vmem [thread:$0]  %s529, 128, %s532, %s521
        $region28: #{tpu_custom_call.1} parent=23 // pred_fallthru
          _
        // Predicated region
        $region29: #{tpu_custom_call.1} parent=23 // pred_check
          %p535 = pneg %p90
        $region30: #{tpu_custom_call.1} parent=23 // pred_check_branch
          %537 = sbr.rel (%p535) target = $region32
        $region31: #{tpu_custom_call.1} parent=23 // pred_region
          %s538 = sand.u32 %s32, 1
          %s539 = scalar_lea.sflag [#allocation7], %s538
          %s540 = sand.u32 %s80, 1
          %s541 = scalar_lea.vmem [#allocation6], %s540
          %s543 = ssub.s32 16, 16
          %544 = vsyncadd %s539, %s543
          %s545 = smul.addr %s39, 16
          %s546 = scalar_lea.hbm %s1, %s545
          %s548 = sshll.u32 %s541, 4
          %s549 = int_to_ptr.vmem [resolvable:$true] %s548
          %551 = dma.hbm_to_vmem [thread:$0]  %s546, 16, %s549, %s539
        $region32: #{tpu_custom_call.1} parent=23 // pred_fallthru
          _
        // Predicated region
        $region33: #{tpu_custom_call.1} parent=23 // pred_check
          %p552 = pneg %p158
        $region34: #{tpu_custom_call.1} parent=23 // pred_check_branch
          %554 = sbr.rel (%p552) target = $region36
        $region35: #{tpu_custom_call.1} parent=23 // pred_region
          %s555 = sand.u32 %s32, 1
          %s556 = scalar_lea.sflag [#allocation4], %s555
          %s557 = sand.u32 %s148, 1
          %s558 = smul.addr %s557, 768
          %s559 = scalar_lea.vmem [#allocation11], %s558
          %s561 = ssub.s32 12288, 12288
          %562 = vsyncadd %s556, %s561
          %s563 = smul.addr %s40, 192
          %s564 = smul.addr %s563, 64
          %s565 = scalar_lea.hbm %s4, %s564
          %s566 = sshll.u32 %s559, 4
          %s567 = int_to_ptr.vmem [resolvable:$true] %s566
          %572 = dma.hbm_to_vmem [thread:$0]  %s565, 12288, %s567, %s556, 64, 64, 4
        $region36: #{tpu_custom_call.1} parent=23 // pred_fallthru
          _
        // Predicated region
        $region37: #{tpu_custom_call.1} parent=23 // pred_check
          %p573 = pneg %p184
        $region38: #{tpu_custom_call.1} parent=23 // pred_check_branch
          %575 = sbr.rel (%p573) target = $region40
        $region39: #{tpu_custom_call.1} parent=23 // pred_region
          %s576 = sand.u32 %s32, 1
          %s577 = scalar_lea.sflag [#allocation7], %s576
          %s578 = sand.u32 %s174, 1
          %s579 = smul.addr %s578, 12
          %s580 = scalar_lea.vmem [#allocation12], %s579
          %s582 = ssub.s32 192, 192
          %583 = vsyncadd %s577, %s582
          %s584 = smul.addr %s40, 12
          %s585 = smul.addr %s584, 16
          %s586 = scalar_lea.hbm %s5, %s585
          %s587 = sshll.u32 %s580, 4
          %s588 = int_to_ptr.vmem [resolvable:$true] %s587
          %593 = dma.hbm_to_vmem [thread:$0]  %s586, 192, %s588, %s577, 16, 16, 1
        $region40: #{tpu_custom_call.1} parent=23 // pred_fallthru
          _
        // Predicated region
        $region41: #{tpu_custom_call.1} parent=23 // pred_check
          %p594 = pneg %p210
        $region42: #{tpu_custom_call.1} parent=23 // pred_check_branch
          %596 = sbr.rel (%p594) target = $region44
        $region43: #{tpu_custom_call.1} parent=23 // pred_region
          %s597 = sand.u32 %s32, 1
          %s598 = scalar_lea.sflag [#allocation4], %s597
          %s599 = sand.u32 %s200, 1
          %s600 = smul.addr %s599, 64
          %s601 = scalar_lea.vmem [#allocation13], %s600
          %s603 = ssub.s32 1024, 1024
          %604 = vsyncadd %s598, %s603
          %s605 = smul.addr %s40, 16
          %s606 = smul.addr %s605, 64
          %s607 = scalar_lea.hbm %s6, %s606
          %s608 = sshll.u32 %s601, 4
          %s609 = int_to_ptr.vmem [resolvable:$true] %s608
          %614 = dma.hbm_to_vmem [thread:$0]  %s607, 1024, %s609, %s598, 64, 64, 4
        $region44: #{tpu_custom_call.1} parent=23 // pred_fallthru
          _
        // Predicated region
        $region45: #{tpu_custom_call.1} parent=23 // pred_check
          %p615 = pneg %p236
        $region46: #{tpu_custom_call.1} parent=23 // pred_check_branch
          %617 = sbr.rel (%p615) target = $region48
        $region47: #{tpu_custom_call.1} parent=23 // pred_region
          %s618 = sand.u32 %s32, 1
          %s619 = scalar_lea.sflag [#allocation7], %s618
          %s620 = sand.u32 %s226, 1
          %s621 = scalar_lea.vmem [#allocation14], %s620
          %s623 = ssub.s32 16, 16
          %624 = vsyncadd %s619, %s623
          %s625 = smul.addr %s40, 16
          %s626 = scalar_lea.hbm %s7, %s625
          %s628 = sshll.u32 %s621, 4
          %s629 = int_to_ptr.vmem [resolvable:$true] %s628
          %631 = dma.hbm_to_vmem [thread:$0]  %s626, 16, %s629, %s619
        $region48: #{tpu_custom_call.1} parent=23 // pred_fallthru
          _
        // Predicated region
        $region49: #{tpu_custom_call.1} parent=23 // pred_check
          %p632 = pneg %p262
        $region50: #{tpu_custom_call.1} parent=23 // pred_check_branch
          %634 = sbr.rel (%p632) target = $region52
        $region51: #{tpu_custom_call.1} parent=23 // pred_region
          %s635 = sand.u32 %s32, 1
          %s636 = scalar_lea.sflag [#allocation4], %s635
          %s637 = sand.u32 %s252, 1
          %s638 = scalar_lea.vmem [#allocation15], %s637
          %s640 = ssub.s32 16, 16
          %641 = vsyncadd %s636, %s640
          %s642 = smul.addr %s40, 16
          %s643 = scalar_lea.hbm %s8, %s642
          %s645 = sshll.u32 %s638, 4
          %s646 = int_to_ptr.vmem [resolvable:$true] %s645
          %648 = dma.hbm_to_vmem [thread:$0]  %s643, 16, %s646, %s636
        $region52: #{tpu_custom_call.1} parent=23 // pred_fallthru
          _
        // Predicated region
        $region53: #{tpu_custom_call.1} parent=23 // pred_check
          %p649 = pneg %p288
        $region54: #{tpu_custom_call.1} parent=23 // pred_check_branch
          %651 = sbr.rel (%p649) target = $region56
        $region55: #{tpu_custom_call.1} parent=23 // pred_region
          %s652 = sand.u32 %s32, 1
          %s653 = scalar_lea.sflag [#allocation7], %s652
          %s654 = sand.u32 %s278, 1
          %s655 = scalar_lea.vmem [#allocation16], %s654
          %s657 = ssub.s32 16, 16
          %658 = vsyncadd %s653, %s657
          %s659 = smul.addr %s40, 16
          %s660 = scalar_lea.hbm %s9, %s659
          %s662 = sshll.u32 %s655, 4
          %s663 = int_to_ptr.vmem [resolvable:$true] %s662
          %665 = dma.hbm_to_vmem [thread:$0]  %s660, 16, %s663, %s653
        $region56: #{tpu_custom_call.1} parent=23 // pred_fallthru
          _
        // Predicated region
        $region57: #{tpu_custom_call.1} parent=23 // pred_check
          %p666 = pneg %p314
        $region58: #{tpu_custom_call.1} parent=23 // pred_check_branch
          %668 = sbr.rel (%p666) target = $region60
        $region59: #{tpu_custom_call.1} parent=23 // pred_region
          %s669 = sand.u32 %s32, 1
          %s670 = scalar_lea.sflag [#allocation4], %s669
          %s671 = sand.u32 %s304, 1
          %s672 = smul.addr %s671, 256
          %s673 = scalar_lea.vmem [#allocation17], %s672
          %s675 = ssub.s32 4096, 4096
          %676 = vsyncadd %s670, %s675
          %s677 = smul.addr %s40, 64
          %s678 = smul.addr %s677, 64
          %s679 = scalar_lea.hbm %s10, %s678
          %s680 = sshll.u32 %s673, 4
          %s681 = int_to_ptr.vmem [resolvable:$true] %s680
          %686 = dma.hbm_to_vmem [thread:$0]  %s679, 4096, %s681, %s670, 256, 256, 16
        $region60: #{tpu_custom_call.1} parent=23 // pred_fallthru
          _
        // Predicated region
        $region61: #{tpu_custom_call.1} parent=23 // pred_check
          %p687 = pneg %p340
        $region62: #{tpu_custom_call.1} parent=23 // pred_check_branch
          %689 = sbr.rel (%p687) target = $region64
        $region63: #{tpu_custom_call.1} parent=23 // pred_region
          %s690 = sand.u32 %s32, 1
          %s691 = scalar_lea.sflag [#allocation7], %s690
          %s692 = sand.u32 %s330, 1
          %s693 = smul.addr %s692, 4
          %s694 = scalar_lea.vmem [#allocation18], %s693
          %s696 = ssub.s32 64, 64
          %697 = vsyncadd %s691, %s696
          %s698 = smul.addr %s40, 4
          %s699 = smul.addr %s698, 16
          %s700 = scalar_lea.hbm %s11, %s699
          %s702 = sshll.u32 %s694, 4
          %s703 = int_to_ptr.vmem [resolvable:$true] %s702
          %705 = dma.hbm_to_vmem [thread:$0]  %s700, 64, %s703, %s691
        $region64: #{tpu_custom_call.1} parent=23 // pred_fallthru
          _
        // Predicated region
        $region65: #{tpu_custom_call.1} parent=23 // pred_check
          %p706 = pneg %p366
        $region66: #{tpu_custom_call.1} parent=23 // pred_check_branch
          %708 = sbr.rel (%p706) target = $region68
        $region67: #{tpu_custom_call.1} parent=23 // pred_region
          %s709 = sand.u32 %s32, 1
          %s710 = scalar_lea.sflag [#allocation4], %s709
          %s711 = sand.u32 %s356, 1
          %s712 = smul.addr %s711, 256
          %s713 = scalar_lea.vmem [#allocation19], %s712
          %s715 = ssub.s32 4096, 4096
          %716 = vsyncadd %s710, %s715
          %s717 = smul.addr %s40, 64
          %s718 = smul.addr %s717, 64
          %s719 = scalar_lea.hbm %s12, %s718
          %s720 = sshll.u32 %s713, 4
          %s721 = int_to_ptr.vmem [resolvable:$true] %s720
          %726 = dma.hbm_to_vmem [thread:$0]  %s719, 4096, %s721, %s710, 64, 64, 4
        $region68: #{tpu_custom_call.1} parent=23 // pred_fallthru
          _
        // Predicated region
        $region69: #{tpu_custom_call.1} parent=23 // pred_check
          %p727 = pneg %p392
        $region70: #{tpu_custom_call.1} parent=23 // pred_check_branch
          %729 = sbr.rel (%p727) target = $region72
        $region71: #{tpu_custom_call.1} parent=23 // pred_region
          %s730 = sand.u32 %s32, 1
          %s731 = scalar_lea.sflag [#allocation7], %s730
          %s732 = sand.u32 %s382, 1
          %s733 = scalar_lea.vmem [#allocation20], %s732
          %s735 = ssub.s32 16, 16
          %736 = vsyncadd %s731, %s735
          %s737 = smul.addr %s40, 16
          %s738 = scalar_lea.hbm %s13, %s737
          %s740 = sshll.u32 %s733, 4
          %s741 = int_to_ptr.vmem [resolvable:$true] %s740
          %743 = dma.hbm_to_vmem [thread:$0]  %s738, 16, %s741, %s731
        $region72: #{tpu_custom_call.1} parent=23 // pred_fallthru
          _
        // Predicated region
        $region73: #{tpu_custom_call.1} parent=23 // pred_check
          %p744 = pneg %p418
        $region74: #{tpu_custom_call.1} parent=23 // pred_check_branch
          %746 = sbr.rel (%p744) target = $region76
        $region75: #{tpu_custom_call.1} parent=23 // pred_region
          %s747 = sand.u32 %s32, 1
          %s748 = scalar_lea.sflag [#allocation4], %s747
          %s749 = sand.u32 %s408, 1
          %s750 = scalar_lea.vmem [#allocation21], %s749
          %s752 = ssub.s32 16, 16
          %753 = vsyncadd %s748, %s752
          %s754 = smul.addr %s40, 16
          %s755 = scalar_lea.hbm %s14, %s754
          %s757 = sshll.u32 %s750, 4
          %s758 = int_to_ptr.vmem [resolvable:$true] %s757
          %760 = dma.hbm_to_vmem [thread:$0]  %s755, 16, %s758, %s748
        $region76: #{tpu_custom_call.1} parent=23 // pred_fallthru
          _
        // Predicated region
        $region77: #{tpu_custom_call.1} parent=23 // pred_check
          %p761 = pneg %p444
        $region78: #{tpu_custom_call.1} parent=23 // pred_check_branch
          %763 = sbr.rel (%p761) target = $region80
        $region79: #{tpu_custom_call.1} parent=23 // pred_region
          %s764 = sand.u32 %s32, 1
          %s765 = scalar_lea.sflag [#allocation7], %s764
          %s766 = sand.u32 %s434, 1
          %s767 = scalar_lea.vmem [#allocation22], %s766
          %s769 = ssub.s32 16, 16
          %770 = vsyncadd %s765, %s769
          %s771 = smul.addr %s40, 16
          %s772 = scalar_lea.hbm %s15, %s771
          %s774 = sshll.u32 %s767, 4
          %s775 = int_to_ptr.vmem [resolvable:$true] %s774
          %777 = dma.hbm_to_vmem [thread:$0]  %s772, 16, %s775, %s765
        $region80: #{tpu_custom_call.1} parent=23 // pred_fallthru
          _
      $region24: #{tpu_custom_call.1} parent=5 // pred_fallthru
        _
      %p778 = scmp.le.s32.totalorder 1, %s32
      %p779 = scmp.lt.s32.totalorder %s32, 5
      %p780 = pnand %p778, %p779
      %p781 = pneg %p780
      // Predicated region
      $region81: #{tpu_custom_call.1} parent=5 // pred_check
        _
      $region82: #{tpu_custom_call.1} parent=5 // pred_check_branch
        %783 = sbr.rel (%p780) target = $region84
      $region83: #{tpu_custom_call.1} parent=5 // pred_region
        %s784 = ssub.s32 %s32, 1
        %s785 = sand.u32 %s37, 1
        %s786 = scalar_lea.sflag [#allocation4], %s785
        %s787 = sand.u32 %s57, 1
        %s788 = smul.addr %s787, 8
        %s789 = scalar_lea.vmem [#allocation3], %s788
        // Predicated region
        $region85: #{tpu_custom_call.1} parent=83 // pred_check
          %p790 = pneg %p70
        $region86: #{tpu_custom_call.1} parent=83 // pred_check_branch
          %792 = sbr.rel (%p790) target = $region88
        $region87: #{tpu_custom_call.1} parent=83 // pred_region
          %793 = dma.done %s786, 128
        $region88: #{tpu_custom_call.1} parent=83 // pred_fallthru
          _
        %s794 = sand.u32 %s37, 1
        %s795 = scalar_lea.sflag [#allocation7], %s794
        %s796 = sand.u32 %s83, 1
        %s797 = scalar_lea.vmem [#allocation6], %s796
        // Predicated region
        $region89: #{tpu_custom_call.1} parent=83 // pred_check
          %p798 = pneg %p96
        $region90: #{tpu_custom_call.1} parent=83 // pred_check_branch
          %800 = sbr.rel (%p798) target = $region92
        $region91: #{tpu_custom_call.1} parent=83 // pred_region
          %801 = dma.done %s795, 16
        $region92: #{tpu_custom_call.1} parent=83 // pred_fallthru
          _
        // Predicated region
        $region93: #{tpu_custom_call.1} parent=83 // pred_check
          %p802 = pneg %p117
        $region94: #{tpu_custom_call.1} parent=83 // pred_check_branch
          %804 = sbr.rel (%p802) target = $region96
        $region95: #{tpu_custom_call.1} parent=83 // pred_region
          %805 = dma.done [#allocation7], 16
        $region96: #{tpu_custom_call.1} parent=83 // pred_fallthru
          _
        // Predicated region
        $region97: #{tpu_custom_call.1} parent=83 // pred_check
          %p806 = pneg %p138
        $region98: #{tpu_custom_call.1} parent=83 // pred_check_branch
          %808 = sbr.rel (%p806) target = $region100
        $region99: #{tpu_custom_call.1} parent=83 // pred_region
          %809 = dma.done [#allocation10], 16
        $region100: #{tpu_custom_call.1} parent=83 // pred_fallthru
          _
        %s810 = sand.u32 %s37, 1
        %s811 = scalar_lea.sflag [#allocation4], %s810
        %s812 = sand.u32 %s151, 1
        %s813 = smul.addr %s812, 768
        %s814 = scalar_lea.vmem [#allocation11], %s813
        // Predicated region
        $region101: #{tpu_custom_call.1} parent=83 // pred_check
          %p815 = pneg %p164
        $region102: #{tpu_custom_call.1} parent=83 // pred_check_branch
          %817 = sbr.rel (%p815) target = $region104
        $region103: #{tpu_custom_call.1} parent=83 // pred_region
          %818 = dma.done %s811, 12288
        $region104: #{tpu_custom_call.1} parent=83 // pred_fallthru
          _
        %s819 = sand.u32 %s37, 1
        %s820 = scalar_lea.sflag [#allocation7], %s819
        %s821 = sand.u32 %s177, 1
        %s822 = smul.addr %s821, 12
        %s823 = scalar_lea.vmem [#allocation12], %s822
        // Predicated region
        $region105: #{tpu_custom_call.1} parent=83 // pred_check
          %p824 = pneg %p190
        $region106: #{tpu_custom_call.1} parent=83 // pred_check_branch
          %826 = sbr.rel (%p824) target = $region108
        $region107: #{tpu_custom_call.1} parent=83 // pred_region
          %827 = dma.done %s820, 192
        $region108: #{tpu_custom_call.1} parent=83 // pred_fallthru
          _
        %s828 = sand.u32 %s37, 1
        %s829 = scalar_lea.sflag [#allocation4], %s828
        %s830 = sand.u32 %s203, 1
        %s831 = smul.addr %s830, 64
        %s832 = scalar_lea.vmem [#allocation13], %s831
        // Predicated region
        $region109: #{tpu_custom_call.1} parent=83 // pred_check
          %p833 = pneg %p216
        $region110: #{tpu_custom_call.1} parent=83 // pred_check_branch
          %835 = sbr.rel (%p833) target = $region112
        $region111: #{tpu_custom_call.1} parent=83 // pred_region
          %836 = dma.done %s829, 1024
        $region112: #{tpu_custom_call.1} parent=83 // pred_fallthru
          _
        %s837 = sand.u32 %s37, 1
        %s838 = scalar_lea.sflag [#allocation7], %s837
        %s839 = sand.u32 %s229, 1
        %s840 = scalar_lea.vmem [#allocation14], %s839
        // Predicated region
        $region113: #{tpu_custom_call.1} parent=83 // pred_check
          %p841 = pneg %p242
        $region114: #{tpu_custom_call.1} parent=83 // pred_check_branch
          %843 = sbr.rel (%p841) target = $region116
        $region115: #{tpu_custom_call.1} parent=83 // pred_region
          %844 = dma.done %s838, 16
        $region116: #{tpu_custom_call.1} parent=83 // pred_fallthru
          _
        %s845 = sand.u32 %s37, 1
        %s846 = scalar_lea.sflag [#allocation4], %s845
        %s847 = sand.u32 %s255, 1
        %s848 = scalar_lea.vmem [#allocation15], %s847
        // Predicated region
        $region117: #{tpu_custom_call.1} parent=83 // pred_check
          %p849 = pneg %p268
        $region118: #{tpu_custom_call.1} parent=83 // pred_check_branch
          %851 = sbr.rel (%p849) target = $region120
        $region119: #{tpu_custom_call.1} parent=83 // pred_region
          %852 = dma.done %s846, 16
        $region120: #{tpu_custom_call.1} parent=83 // pred_fallthru
          _
        %s853 = sand.u32 %s37, 1
        %s854 = scalar_lea.sflag [#allocation7], %s853
        %s855 = sand.u32 %s281, 1
        %s856 = scalar_lea.vmem [#allocation16], %s855
        // Predicated region
        $region121: #{tpu_custom_call.1} parent=83 // pred_check
          %p857 = pneg %p294
        $region122: #{tpu_custom_call.1} parent=83 // pred_check_branch
          %859 = sbr.rel (%p857) target = $region124
        $region123: #{tpu_custom_call.1} parent=83 // pred_region
          %860 = dma.done %s854, 16
        $region124: #{tpu_custom_call.1} parent=83 // pred_fallthru
          _
        %s861 = sand.u32 %s37, 1
        %s862 = scalar_lea.sflag [#allocation4], %s861
        %s863 = sand.u32 %s307, 1
        %s864 = smul.addr %s863, 256
        %s865 = scalar_lea.vmem [#allocation17], %s864
        // Predicated region
        $region125: #{tpu_custom_call.1} parent=83 // pred_check
          %p866 = pneg %p320
        $region126: #{tpu_custom_call.1} parent=83 // pred_check_branch
          %868 = sbr.rel (%p866) target = $region128
        $region127: #{tpu_custom_call.1} parent=83 // pred_region
          %869 = dma.done %s862, 4096
        $region128: #{tpu_custom_call.1} parent=83 // pred_fallthru
          _
        %s870 = sand.u32 %s37, 1
        %s871 = scalar_lea.sflag [#allocation7], %s870
        %s872 = sand.u32 %s333, 1
        %s873 = smul.addr %s872, 4
        %s874 = scalar_lea.vmem [#allocation18], %s873
        // Predicated region
        $region129: #{tpu_custom_call.1} parent=83 // pred_check
          %p875 = pneg %p346
        $region130: #{tpu_custom_call.1} parent=83 // pred_check_branch
          %877 = sbr.rel (%p875) target = $region132
        $region131: #{tpu_custom_call.1} parent=83 // pred_region
          %878 = dma.done %s871, 64
        $region132: #{tpu_custom_call.1} parent=83 // pred_fallthru
          _
        %s879 = sand.u32 %s37, 1
        %s880 = scalar_lea.sflag [#allocation4], %s879
        %s881 = sand.u32 %s359, 1
        %s882 = smul.addr %s881, 256
        %s883 = scalar_lea.vmem [#allocation19], %s882
        // Predicated region
        $region133: #{tpu_custom_call.1} parent=83 // pred_check
          %p884 = pneg %p372
        $region134: #{tpu_custom_call.1} parent=83 // pred_check_branch
          %886 = sbr.rel (%p884) target = $region136
        $region135: #{tpu_custom_call.1} parent=83 // pred_region
          %887 = dma.done %s880, 4096
        $region136: #{tpu_custom_call.1} parent=83 // pred_fallthru
          _
        %s888 = sand.u32 %s37, 1
        %s889 = scalar_lea.sflag [#allocation7], %s888
        %s890 = sand.u32 %s385, 1
        %s891 = scalar_lea.vmem [#allocation20], %s890
        // Predicated region
        $region137: #{tpu_custom_call.1} parent=83 // pred_check
          %p892 = pneg %p398
        $region138: #{tpu_custom_call.1} parent=83 // pred_check_branch
          %894 = sbr.rel (%p892) target = $region140
        $region139: #{tpu_custom_call.1} parent=83 // pred_region
          %895 = dma.done %s889, 16
        $region140: #{tpu_custom_call.1} parent=83 // pred_fallthru
          _
        %s896 = sand.u32 %s37, 1
        %s897 = scalar_lea.sflag [#allocation4], %s896
        %s898 = sand.u32 %s411, 1
        %s899 = scalar_lea.vmem [#allocation21], %s898
        // Predicated region
        $region141: #{tpu_custom_call.1} parent=83 // pred_check
          %p900 = pneg %p424
        $region142: #{tpu_custom_call.1} parent=83 // pred_check_branch
          %902 = sbr.rel (%p900) target = $region144
        $region143: #{tpu_custom_call.1} parent=83 // pred_region
          %903 = dma.done %s897, 16
        $region144: #{tpu_custom_call.1} parent=83 // pred_fallthru
          _
        %s904 = sand.u32 %s37, 1
        %s905 = scalar_lea.sflag [#allocation7], %s904
        %s906 = sand.u32 %s437, 1
        %s907 = scalar_lea.vmem [#allocation22], %s906
        // Predicated region
        $region145: #{tpu_custom_call.1} parent=83 // pred_check
          %p908 = pneg %p450
        $region146: #{tpu_custom_call.1} parent=83 // pred_check_branch
          %910 = sbr.rel (%p908) target = $region148
        $region147: #{tpu_custom_call.1} parent=83 // pred_region
          %911 = dma.done %s905, 16
        $region148: #{tpu_custom_call.1} parent=83 // pred_fallthru
          _
        %s912 = sand.u32 %s37, 1
        %s913 = scalar_lea.sflag [#allocation4], %s912
        %s914 = sand.u32 %s57, 1
        %s915 = smul.addr %s914, 8
        %s916 = scalar_lea.vmem [#allocation3], %s915
        %p917 = pneg %p70
        %p918 = pneg %p67
        %s919 = sand.u32 %s37, 1
        %s920 = scalar_lea.sflag [#allocation7], %s919
        %s921 = sand.u32 %s83, 1
        %s922 = scalar_lea.vmem [#allocation6], %s921
        %p923 = pneg %p96
        %p924 = pneg %p93
        %p925 = pneg %p117
        %p926 = pneg %p114
        %p927 = pneg %p138
        %p928 = pneg %p135
        %s929 = sand.u32 %s37, 1
        %s930 = scalar_lea.sflag [#allocation4], %s929
        %s931 = sand.u32 %s151, 1
        %s932 = smul.addr %s931, 768
        %s933 = scalar_lea.vmem [#allocation11], %s932
        %p934 = pneg %p164
        %p935 = pneg %p161
        %s936 = sand.u32 %s37, 1
        %s937 = scalar_lea.sflag [#allocation7], %s936
        %s938 = sand.u32 %s177, 1
        %s939 = smul.addr %s938, 12
        %s940 = scalar_lea.vmem [#allocation12], %s939
        %p941 = pneg %p190
        %p942 = pneg %p187
        %s943 = sand.u32 %s37, 1
        %s944 = scalar_lea.sflag [#allocation4], %s943
        %s945 = sand.u32 %s203, 1
        %s946 = smul.addr %s945, 64
        %s947 = scalar_lea.vmem [#allocation13], %s946
        %p948 = pneg %p216
        %p949 = pneg %p213
        %s950 = sand.u32 %s37, 1
        %s951 = scalar_lea.sflag [#allocation7], %s950
        %s952 = sand.u32 %s229, 1
        %s953 = scalar_lea.vmem [#allocation14], %s952
        %p954 = pneg %p242
        %p955 = pneg %p239
        %s956 = sand.u32 %s37, 1
        %s957 = scalar_lea.sflag [#allocation4], %s956
        %s958 = sand.u32 %s255, 1
        %s959 = scalar_lea.vmem [#allocation15], %s958
        %p960 = pneg %p268
        %p961 = pneg %p265
        %s962 = sand.u32 %s37, 1
        %s963 = scalar_lea.sflag [#allocation7], %s962
        %s964 = sand.u32 %s281, 1
        %s965 = scalar_lea.vmem [#allocation16], %s964
        %p966 = pneg %p294
        %p967 = pneg %p291
        %s968 = sand.u32 %s37, 1
        %s969 = scalar_lea.sflag [#allocation4], %s968
        %s970 = sand.u32 %s307, 1
        %s971 = smul.addr %s970, 256
        %s972 = scalar_lea.vmem [#allocation17], %s971
        %p973 = pneg %p320
        %p974 = pneg %p317
        %s975 = sand.u32 %s37, 1
        %s976 = scalar_lea.sflag [#allocation7], %s975
        %s977 = sand.u32 %s333, 1
        %s978 = smul.addr %s977, 4
        %s979 = scalar_lea.vmem [#allocation18], %s978
        %p980 = pneg %p346
        %p981 = pneg %p343
        %s982 = sand.u32 %s37, 1
        %s983 = scalar_lea.sflag [#allocation4], %s982
        %s984 = sand.u32 %s359, 1
        %s985 = smul.addr %s984, 256
        %s986 = scalar_lea.vmem [#allocation19], %s985
        %p987 = pneg %p372
        %p988 = pneg %p369
        %s989 = sand.u32 %s37, 1
        %s990 = scalar_lea.sflag [#allocation7], %s989
        %s991 = sand.u32 %s385, 1
        %s992 = scalar_lea.vmem [#allocation20], %s991
        %p993 = pneg %p398
        %p994 = pneg %p395
        %s995 = sand.u32 %s37, 1
        %s996 = scalar_lea.sflag [#allocation4], %s995
        %s997 = sand.u32 %s411, 1
        %s998 = scalar_lea.vmem [#allocation21], %s997
        %p999 = pneg %p424
        %p1000 = pneg %p421
        %s1001 = sand.u32 %s37, 1
        %s1002 = scalar_lea.sflag [#allocation7], %s1001
        %s1003 = sand.u32 %s437, 1
        %s1004 = scalar_lea.vmem [#allocation22], %s1003
        %p1005 = pneg %p450
        %p1006 = pneg %p447
        %p1007 = pneg %p476
        %p1008 = pneg %p473
        %s1009 = sand.u32 %s463, 1
        %s1010 = scalar_lea.sflag [#allocation5], %s1009
        %s1011 = sand.u32 %s463, 1
        %s1012 = smul.addr %s1011, 8
        %s1013 = scalar_lea.vmem [#allocation23], %s1012
        %p1015 = scmp.eq.s32.totalorder %s42, 0
        // Predicated region
        $region149: #{tpu_custom_call.1} parent=83 // pred_check
          %p1016 = pneg %p1015
        $region150: #{tpu_custom_call.1} parent=83 // pred_check_branch
          %1018 = sbr.rel (%p1016) target = $region152
        $region151: #{tpu_custom_call.1} parent=83 // pred_region
          %v1019 = vld [vmem:[%s789] sm:$0xff]
          %v1020 = vld [vmem:[#allocation8] sm:$0x1]
          %v1021 = vld [vmem:[#allocation9] sm:$0x1]
          %1022 = vadd.xlane.f32.xlu0 %v1019
          %v1023 = vpop.xlane.xlu0 %1022
          %v1024 = vrcp.pop 128.0
          %v1025 = vmul.f32 %v1023, %v1024
          %v1026 = vsub.f32 %v1019, %v1025
          %v1027 = vmul.f32 %v1026, %v1026
          %1028 = vadd.xlane.f32.xlu0 %v1027
          %v1029 = vpop.xlane.xlu0 %1028
          %v1030 = vmul.f32 %v1029, %v1024
          %v1031 = vadd.f32 %v1030, 1e-12
          %v1032 = vrsqrt.pop %v1031
          %v1033 = vmul.f32 %v1026, %v1032
          %v1035 = vlaneseq
          %v1036 = vshrl.u32 %v1035, 7
          %v1037 = vsub.s32 0, %v1036
          %v1038 = vrot.slane %v1020, %v1037
          %v1040 = vmul.f32 %v1033, %v1038
          %v1042 = vlaneseq
          %v1043 = vshrl.u32 %v1042, 7
          %v1044 = vsub.s32 0, %v1043
          %v1045 = vrot.slane %v1021, %v1044
          %v1047 = vadd.f32 %v1040, %v1045
          %1048 = vst [vmem:[#allocation2] sm:$0xff] %v1047
        $region152: #{tpu_custom_call.1} parent=83 // pred_fallthru
          _
        %v1049 = vld [vmem:[#allocation2] sm:$0xff]
        %v1050 = vpack.c.bf16 %v1049, %v1049
        %v1051 = vld [vmem:[%s814] sm:$0xf]
        %v1052 = vld [vmem:[%s814 + $0x4] sm:$0xf]
        %v1053 = vld [vmem:[%s814 + $0x8] sm:$0xf]
        %v1054 = vld [vmem:[%s814 + $0xc] sm:$0xf]
        %v1055 = vld [vmem:[%s814 + $0x10] sm:$0xf]
        %v1056 = vld [vmem:[%s814 + $0x14] sm:$0xf]
        %v1057 = vld [vmem:[%s814 + $0x18] sm:$0xf]
        %v1058 = vld [vmem:[%s814 + $0x1c] sm:$0xf]
        %v1059 = vld [vmem:[%s814 + $0x20] sm:$0xf]
        %v1060 = vld [vmem:[%s814 + $0x24] sm:$0xf]
        %v1061 = vld [vmem:[%s814 + $0x28] sm:$0xf]
        %v1062 = vld [vmem:[%s814 + $0x2c] sm:$0xf]
        %v1063 = vld [vmem:[%s814 + $0x30] sm:$0xf]
        %v1064 = vld [vmem:[%s814 + $0x34] sm:$0xf]
        %v1065 = vld [vmem:[%s814 + $0x38] sm:$0xf]
        %v1066 = vld [vmem:[%s814 + $0x3c] sm:$0xf]
        %v1067 = vld [vmem:[%s814 + $0x40] sm:$0xf]
        %v1068 = vld [vmem:[%s814 + $0x44] sm:$0xf]
        %v1069 = vld [vmem:[%s814 + $0x48] sm:$0xf]
        %v1070 = vld [vmem:[%s814 + $0x4c] sm:$0xf]
        %v1071 = vld [vmem:[%s814 + $0x50] sm:$0xf]
        %v1072 = vld [vmem:[%s814 + $0x54] sm:$0xf]
        %v1073 = vld [vmem:[%s814 + $0x58] sm:$0xf]
        %v1074 = vld [vmem:[%s814 + $0x5c] sm:$0xf]
        %v1075 = vld [vmem:[%s814 + $0x60] sm:$0xf]
        %v1076 = vld [vmem:[%s814 + $0x64] sm:$0xf]
        %v1077 = vld [vmem:[%s814 + $0x68] sm:$0xf]
        %v1078 = vld [vmem:[%s814 + $0x6c] sm:$0xf]
        %v1079 = vld [vmem:[%s814 + $0x70] sm:$0xf]
        %v1080 = vld [vmem:[%s814 + $0x74] sm:$0xf]
        %v1081 = vld [vmem:[%s814 + $0x78] sm:$0xf]
        %v1082 = vld [vmem:[%s814 + $0x7c] sm:$0xf]
        %v1083 = vld [vmem:[%s814 + $0x80] sm:$0xf]
        %v1084 = vld [vmem:[%s814 + $0x84] sm:$0xf]
        %v1085 = vld [vmem:[%s814 + $0x88] sm:$0xf]
        %v1086 = vld [vmem:[%s814 + $0x8c] sm:$0xf]
        %v1087 = vld [vmem:[%s814 + $0x90] sm:$0xf]
        %v1088 = vld [vmem:[%s814 + $0x94] sm:$0xf]
        %v1089 = vld [vmem:[%s814 + $0x98] sm:$0xf]
        %v1090 = vld [vmem:[%s814 + $0x9c] sm:$0xf]
        %v1091 = vld [vmem:[%s814 + $0xa0] sm:$0xf]
        %v1092 = vld [vmem:[%s814 + $0xa4] sm:$0xf]
        %v1093 = vld [vmem:[%s814 + $0xa8] sm:$0xf]
        %v1094 = vld [vmem:[%s814 + $0xac] sm:$0xf]
        %v1095 = vld [vmem:[%s814 + $0xb0] sm:$0xf]
        %v1096 = vld [vmem:[%s814 + $0xb4] sm:$0xf]
        %v1097 = vld [vmem:[%s814 + $0xb8] sm:$0xf]
        %v1098 = vld [vmem:[%s814 + $0xbc] sm:$0xf]
        %v1099 = vld [vmem:[%s814 + $0xc0] sm:$0xf]
        %v1100 = vld [vmem:[%s814 + $0xc4] sm:$0xf]
        %v1101 = vld [vmem:[%s814 + $0xc8] sm:$0xf]
        %v1102 = vld [vmem:[%s814 + $0xcc] sm:$0xf]
        %v1103 = vld [vmem:[%s814 + $0xd0] sm:$0xf]
        %v1104 = vld [vmem:[%s814 + $0xd4] sm:$0xf]
        %v1105 = vld [vmem:[%s814 + $0xd8] sm:$0xf]
        %v1106 = vld [vmem:[%s814 + $0xdc] sm:$0xf]
        %v1107 = vld [vmem:[%s814 + $0xe0] sm:$0xf]
        %v1108 = vld [vmem:[%s814 + $0xe4] sm:$0xf]
        %v1109 = vld [vmem:[%s814 + $0xe8] sm:$0xf]
        %v1110 = vld [vmem:[%s814 + $0xec] sm:$0xf]
        %v1111 = vld [vmem:[%s814 + $0xf0] sm:$0xf]
        %v1112 = vld [vmem:[%s814 + $0xf4] sm:$0xf]
        %v1113 = vld [vmem:[%s814 + $0xf8] sm:$0xf]
        %v1114 = vld [vmem:[%s814 + $0xfc] sm:$0xf]
        %v1115 = vld [vmem:[%s814 + $0x100] sm:$0xf]
        %v1116 = vld [vmem:[%s814 + $0x104] sm:$0xf]
        %v1117 = vld [vmem:[%s814 + $0x108] sm:$0xf]
        %v1118 = vld [vmem:[%s814 + $0x10c] sm:$0xf]
        %v1119 = vld [vmem:[%s814 + $0x110] sm:$0xf]
        %v1120 = vld [vmem:[%s814 + $0x114] sm:$0xf]
        %v1121 = vld [vmem:[%s814 + $0x118] sm:$0xf]
        %v1122 = vld [vmem:[%s814 + $0x11c] sm:$0xf]
        %v1123 = vld [vmem:[%s814 + $0x120] sm:$0xf]
        %v1124 = vld [vmem:[%s814 + $0x124] sm:$0xf]
        %v1125 = vld [vmem:[%s814 + $0x128] sm:$0xf]
        %v1126 = vld [vmem:[%s814 + $0x12c] sm:$0xf]
        %v1127 = vld [vmem:[%s814 + $0x130] sm:$0xf]
        %v1128 = vld [vmem:[%s814 + $0x134] sm:$0xf]
        %v1129 = vld [vmem:[%s814 + $0x138] sm:$0xf]
        %v1130 = vld [vmem:[%s814 + $0x13c] sm:$0xf]
        %v1131 = vld [vmem:[%s814 + $0x140] sm:$0xf]
        %v1132 = vld [vmem:[%s814 + $0x144] sm:$0xf]
        %v1133 = vld [vmem:[%s814 + $0x148] sm:$0xf]
        %v1134 = vld [vmem:[%s814 + $0x14c] sm:$0xf]
        %v1135 = vld [vmem:[%s814 + $0x150] sm:$0xf]
        %v1136 = vld [vmem:[%s814 + $0x154] sm:$0xf]
        %v1137 = vld [vmem:[%s814 + $0x158] sm:$0xf]
        %v1138 = vld [vmem:[%s814 + $0x15c] sm:$0xf]
        %v1139 = vld [vmem:[%s814 + $0x160] sm:$0xf]
        %v1140 = vld [vmem:[%s814 + $0x164] sm:$0xf]
        %v1141 = vld [vmem:[%s814 + $0x168] sm:$0xf]
        %v1142 = vld [vmem:[%s814 + $0x16c] sm:$0xf]
        %v1143 = vld [vmem:[%s814 + $0x170] sm:$0xf]
        %v1144 = vld [vmem:[%s814 + $0x174] sm:$0xf]
        %v1145 = vld [vmem:[%s814 + $0x178] sm:$0xf]
        %v1146 = vld [vmem:[%s814 + $0x17c] sm:$0xf]
        %v1147 = vld [vmem:[%s814 + $0x180] sm:$0xf]
        %v1148 = vld [vmem:[%s814 + $0x184] sm:$0xf]
        %v1149 = vld [vmem:[%s814 + $0x188] sm:$0xf]
        %v1150 = vld [vmem:[%s814 + $0x18c] sm:$0xf]
        %v1151 = vld [vmem:[%s814 + $0x190] sm:$0xf]
        %v1152 = vld [vmem:[%s814 + $0x194] sm:$0xf]
        %v1153 = vld [vmem:[%s814 + $0x198] sm:$0xf]
        %v1154 = vld [vmem:[%s814 + $0x19c] sm:$0xf]
        %v1155 = vld [vmem:[%s814 + $0x1a0] sm:$0xf]
        %v1156 = vld [vmem:[%s814 + $0x1a4] sm:$0xf]
        %v1157 = vld [vmem:[%s814 + $0x1a8] sm:$0xf]
        %v1158 = vld [vmem:[%s814 + $0x1ac] sm:$0xf]
        %v1159 = vld [vmem:[%s814 + $0x1b0] sm:$0xf]
        %v1160 = vld [vmem:[%s814 + $0x1b4] sm:$0xf]
        %v1161 = vld [vmem:[%s814 + $0x1b8] sm:$0xf]
        %v1162 = vld [vmem:[%s814 + $0x1bc] sm:$0xf]
        %v1163 = vld [vmem:[%s814 + $0x1c0] sm:$0xf]
        %v1164 = vld [vmem:[%s814 + $0x1c4] sm:$0xf]
        %v1165 = vld [vmem:[%s814 + $0x1c8] sm:$0xf]
        %v1166 = vld [vmem:[%s814 + $0x1cc] sm:$0xf]
        %v1167 = vld [vmem:[%s814 + $0x1d0] sm:$0xf]
        %v1168 = vld [vmem:[%s814 + $0x1d4] sm:$0xf]
        %v1169 = vld [vmem:[%s814 + $0x1d8] sm:$0xf]
        %v1170 = vld [vmem:[%s814 + $0x1dc] sm:$0xf]
        %v1171 = vld [vmem:[%s814 + $0x1e0] sm:$0xf]
        %v1172 = vld [vmem:[%s814 + $0x1e4] sm:$0xf]
        %v1173 = vld [vmem:[%s814 + $0x1e8] sm:$0xf]
        %v1174 = vld [vmem:[%s814 + $0x1ec] sm:$0xf]
        %v1175 = vld [vmem:[%s814 + $0x1f0] sm:$0xf]
        %v1176 = vld [vmem:[%s814 + $0x1f4] sm:$0xf]
        %v1177 = vld [vmem:[%s814 + $0x1f8] sm:$0xf]
        %v1178 = vld [vmem:[%s814 + $0x1fc] sm:$0xf]
        %v1179 = vld [vmem:[%s814 + $0x200] sm:$0xf]
        %v1180 = vld [vmem:[%s814 + $0x204] sm:$0xf]
        %v1181 = vld [vmem:[%s814 + $0x208] sm:$0xf]
        %v1182 = vld [vmem:[%s814 + $0x20c] sm:$0xf]
        %v1183 = vld [vmem:[%s814 + $0x210] sm:$0xf]
        %v1184 = vld [vmem:[%s814 + $0x214] sm:$0xf]
        %v1185 = vld [vmem:[%s814 + $0x218] sm:$0xf]
        %v1186 = vld [vmem:[%s814 + $0x21c] sm:$0xf]
        %v1187 = vld [vmem:[%s814 + $0x220] sm:$0xf]
        %v1188 = vld [vmem:[%s814 + $0x224] sm:$0xf]
        %v1189 = vld [vmem:[%s814 + $0x228] sm:$0xf]
        %v1190 = vld [vmem:[%s814 + $0x22c] sm:$0xf]
        %v1191 = vld [vmem:[%s814 + $0x230] sm:$0xf]
        %v1192 = vld [vmem:[%s814 + $0x234] sm:$0xf]
        %v1193 = vld [vmem:[%s814 + $0x238] sm:$0xf]
        %v1194 = vld [vmem:[%s814 + $0x23c] sm:$0xf]
        %v1195 = vld [vmem:[%s814 + $0x240] sm:$0xf]
        %v1196 = vld [vmem:[%s814 + $0x244] sm:$0xf]
        %v1197 = vld [vmem:[%s814 + $0x248] sm:$0xf]
        %v1198 = vld [vmem:[%s814 + $0x24c] sm:$0xf]
        %v1199 = vld [vmem:[%s814 + $0x250] sm:$0xf]
        %v1200 = vld [vmem:[%s814 + $0x254] sm:$0xf]
        %v1201 = vld [vmem:[%s814 + $0x258] sm:$0xf]
        %v1202 = vld [vmem:[%s814 + $0x25c] sm:$0xf]
        %v1203 = vld [vmem:[%s814 + $0x260] sm:$0xf]
        %v1204 = vld [vmem:[%s814 + $0x264] sm:$0xf]
        %v1205 = vld [vmem:[%s814 + $0x268] sm:$0xf]
        %v1206 = vld [vmem:[%s814 + $0x26c] sm:$0xf]
        %v1207 = vld [vmem:[%s814 + $0x270] sm:$0xf]
        %v1208 = vld [vmem:[%s814 + $0x274] sm:$0xf]
        %v1209 = vld [vmem:[%s814 + $0x278] sm:$0xf]
        %v1210 = vld [vmem:[%s814 + $0x27c] sm:$0xf]
        %v1211 = vld [vmem:[%s814 + $0x280] sm:$0xf]
        %v1212 = vld [vmem:[%s814 + $0x284] sm:$0xf]
        %v1213 = vld [vmem:[%s814 + $0x288] sm:$0xf]
        %v1214 = vld [vmem:[%s814 + $0x28c] sm:$0xf]
        %v1215 = vld [vmem:[%s814 + $0x290] sm:$0xf]
        %v1216 = vld [vmem:[%s814 + $0x294] sm:$0xf]
        %v1217 = vld [vmem:[%s814 + $0x298] sm:$0xf]
        %v1218 = vld [vmem:[%s814 + $0x29c] sm:$0xf]
        %v1219 = vld [vmem:[%s814 + $0x2a0] sm:$0xf]
        %v1220 = vld [vmem:[%s814 + $0x2a4] sm:$0xf]
        %v1221 = vld [vmem:[%s814 + $0x2a8] sm:$0xf]
        %v1222 = vld [vmem:[%s814 + $0x2ac] sm:$0xf]
        %v1223 = vld [vmem:[%s814 + $0x2b0] sm:$0xf]
        %v1224 = vld [vmem:[%s814 + $0x2b4] sm:$0xf]
        %v1225 = vld [vmem:[%s814 + $0x2b8] sm:$0xf]
        %v1226 = vld [vmem:[%s814 + $0x2bc] sm:$0xf]
        %v1227 = vld [vmem:[%s814 + $0x2c0] sm:$0xf]
        %v1228 = vld [vmem:[%s814 + $0x2c4] sm:$0xf]
        %v1229 = vld [vmem:[%s814 + $0x2c8] sm:$0xf]
        %v1230 = vld [vmem:[%s814 + $0x2cc] sm:$0xf]
        %v1231 = vld [vmem:[%s814 + $0x2d0] sm:$0xf]
        %v1232 = vld [vmem:[%s814 + $0x2d4] sm:$0xf]
        %v1233 = vld [vmem:[%s814 + $0x2d8] sm:$0xf]
        %v1234 = vld [vmem:[%s814 + $0x2dc] sm:$0xf]
        %v1235 = vld [vmem:[%s814 + $0x2e0] sm:$0xf]
        %v1236 = vld [vmem:[%s814 + $0x2e4] sm:$0xf]
        %v1237 = vld [vmem:[%s814 + $0x2e8] sm:$0xf]
        %v1238 = vld [vmem:[%s814 + $0x2ec] sm:$0xf]
        %v1239 = vld [vmem:[%s814 + $0x2f0] sm:$0xf]
        %v1240 = vld [vmem:[%s814 + $0x2f4] sm:$0xf]
        %v1241 = vld [vmem:[%s814 + $0x2f8] sm:$0xf]
        %v1242 = vld [vmem:[%s814 + $0x2fc] sm:$0xf]
        %v1243 = vld [vmem:[%s823] sm:$0x1]
        %v1244 = vld [vmem:[%s823 + $0x1] sm:$0x1]
        %v1245 = vld [vmem:[%s823 + $0x2] sm:$0x1]
        %v1246 = vld [vmem:[%s823 + $0x3] sm:$0x1]
        %v1247 = vld [vmem:[%s823 + $0x4] sm:$0x1]
        %v1248 = vld [vmem:[%s823 + $0x5] sm:$0x1]
        %v1249 = vld [vmem:[%s823 + $0x6] sm:$0x1]
        %v1250 = vld [vmem:[%s823 + $0x7] sm:$0x1]
        %v1251 = vld [vmem:[%s823 + $0x8] sm:$0x1]
        %v1252 = vld [vmem:[%s823 + $0x9] sm:$0x1]
        %v1253 = vld [vmem:[%s823 + $0xa] sm:$0x1]
        %v1254 = vld [vmem:[%s823 + $0xb] sm:$0x1]
        %v1267 = vlaneseq
        %v1268 = vshrl.u32 %v1267, 7
        %v1269 = vsub.s32 0, %v1268
        %v1270 = vrot.slane %v1243, %v1269
        %v1271 = vlaneseq
        %v1272 = vshrl.u32 %v1271, 7
        %v1273 = vsub.s32 0, %v1272
        %v1274 = vrot.slane %v1244, %v1273
        %v1275 = vlaneseq
        %v1276 = vshrl.u32 %v1275, 7
        %v1277 = vsub.s32 0, %v1276
        %v1278 = vrot.slane %v1245, %v1277
        %v1279 = vlaneseq
        %v1280 = vshrl.u32 %v1279, 7
        %v1281 = vsub.s32 0, %v1280
        %v1282 = vrot.slane %v1246, %v1281
        %v1283 = vlaneseq
        %v1284 = vshrl.u32 %v1283, 7
        %v1285 = vsub.s32 0, %v1284
        %v1286 = vrot.slane %v1247, %v1285
        %v1287 = vlaneseq
        %v1288 = vshrl.u32 %v1287, 7
        %v1289 = vsub.s32 0, %v1288
        %v1290 = vrot.slane %v1248, %v1289
        %v1291 = vlaneseq
        %v1292 = vshrl.u32 %v1291, 7
        %v1293 = vsub.s32 0, %v1292
        %v1294 = vrot.slane %v1249, %v1293
        %v1295 = vlaneseq
        %v1296 = vshrl.u32 %v1295, 7
        %v1297 = vsub.s32 0, %v1296
        %v1298 = vrot.slane %v1250, %v1297
        %v1299 = vlaneseq
        %v1300 = vshrl.u32 %v1299, 7
        %v1301 = vsub.s32 0, %v1300
        %v1302 = vrot.slane %v1251, %v1301
        %v1303 = vlaneseq
        %v1304 = vshrl.u32 %v1303, 7
        %v1305 = vsub.s32 0, %v1304
        %v1306 = vrot.slane %v1252, %v1305
        %v1307 = vlaneseq
        %v1308 = vshrl.u32 %v1307, 7
        %v1309 = vsub.s32 0, %v1308
        %v1310 = vrot.slane %v1253, %v1309
        %v1311 = vlaneseq
        %v1312 = vshrl.u32 %v1311, 7
        %v1313 = vsub.s32 0, %v1312
        %v1314 = vrot.slane %v1254, %v1313
        %v1343 = vunpack.c.l.b16 %v1051
        %v1344 = vunpack.c.l.b16 %v1052
        %v1345 = vunpack.c.l.b16 %v1053
        %v1346 = vunpack.c.l.b16 %v1054
        %v1347 = vunpack.c.l.b16 %v1055
        %v1348 = vunpack.c.l.b16 %v1056
        %v1349 = vunpack.c.l.b16 %v1057
        %v1350 = vunpack.c.l.b16 %v1058
        %v1351 = vunpack.c.l.b16 %v1059
        %v1352 = vunpack.c.l.b16 %v1060
        %v1353 = vunpack.c.l.b16 %v1061
        %v1354 = vunpack.c.l.b16 %v1062
        %v1355 = vunpack.c.l.b16 %v1063
        %v1356 = vunpack.c.l.b16 %v1064
        %v1357 = vunpack.c.l.b16 %v1065
        %v1358 = vunpack.c.l.b16 %v1066
        %v1359 = vpack.c.b16 %v1344, %v1343
        %v1360 = vpack.c.b16 %v1346, %v1345
        %v1361 = vpack.c.b16 %v1348, %v1347
        %v1362 = vpack.c.b16 %v1350, %v1349
        %v1363 = vpack.c.b16 %v1352, %v1351
        %v1364 = vpack.c.b16 %v1354, %v1353
        %v1365 = vpack.c.b16 %v1356, %v1355
        %v1366 = vpack.c.b16 %v1358, %v1357
        %1375 = vmatprep.subr.bf16.mxu0 0
        %1376 = vmatpush1.bf16.msra.mxu0 %v1359
        %1377 = vmatprep.subr.bf16.mxu0 0
        %1378 = vmatpush1.bf16.msra.mxu0 %v1360
        %1379 = vmatprep.subr.bf16.mxu0 0
        %1380 = vmatpush1.bf16.msra.mxu0 %v1361
        %1381 = vmatprep.subr.bf16.mxu0 0
        %1382 = vmatpush1.bf16.msra.mxu0 %v1362
        %1383 = vmatprep.subr.bf16.mxu0 0
        %1384 = vmatpush1.bf16.msra.mxu0 %v1363
        %1385 = vmatprep.subr.bf16.mxu0 0
        %1386 = vmatpush1.bf16.msra.mxu0 %v1364
        %1387 = vmatprep.subr.bf16.mxu0 0
        %1388 = vmatpush1.bf16.msra.mxu0 %v1365
        %1389 = vmatprep.subr.bf16.mxu0 0
        %1390 = vmatpush1.bf16.msra.mxu0 %v1366
        %1391 = vmatprep.subr.bf16.mxu0 0
        %1392 = vmatpush1.bf16.msra.mxu0 0
        %1393 = vmatprep.subr.bf16.mxu0 0
        %1394 = vmatpush1.bf16.msra.mxu0 0
        %1395 = vmatprep.subr.bf16.mxu0 0
        %1396 = vmatpush1.bf16.msra.mxu0 0
        %1397 = vmatprep.subr.bf16.mxu0 0
        %1398 = vmatpush1.bf16.msra.mxu0 0
        %1399 = vmatprep.subr.bf16.mxu0 0
        %1400 = vmatpush1.bf16.msra.mxu0 0
        %1401 = vmatprep.subr.bf16.mxu0 0
        %1402 = vmatpush1.bf16.msra.mxu0 0
        %1403 = vmatprep.subr.bf16.mxu0 0
        %1404 = vmatpush1.bf16.msra.mxu0 0
        %1405 = vmatprep.subr.bf16.mxu0 0
        %1406 = vmatpush1.bf16.msra.mxu0 0
        %1407 = vmatprep.mubr.bf16.mxu0 0
        %1408 = vmatmul.mubr.bf16.gmra.mrb[0].mxu0 %v1050
        %v1409 = vpop.f32.mrb[0].mxu0
        %v1410 = vadd.f32 %v1270, %v1409
        %v1411 = vpop.f32.mrb[0].mxu0
        %v1412 = vpop.f32.mrb[0].mxu0
        %v1413 = vpop.f32.mrb[0].mxu0
        %1414 = vdwg.mxu0
        %v1431 = vunpack.c.l.b16 %v1067
        %v1432 = vunpack.c.l.b16 %v1068
        %v1433 = vunpack.c.l.b16 %v1069
        %v1434 = vunpack.c.l.b16 %v1070
        %v1435 = vunpack.c.l.b16 %v1071
        %v1436 = vunpack.c.l.b16 %v1072
        %v1437 = vunpack.c.l.b16 %v1073
        %v1438 = vunpack.c.l.b16 %v1074
        %v1439 = vunpack.c.l.b16 %v1075
        %v1440 = vunpack.c.l.b16 %v1076
        %v1441 = vunpack.c.l.b16 %v1077
        %v1442 = vunpack.c.l.b16 %v1078
        %v1443 = vunpack.c.l.b16 %v1079
        %v1444 = vunpack.c.l.b16 %v1080
        %v1445 = vunpack.c.l.b16 %v1081
        %v1446 = vunpack.c.l.b16 %v1082
        %v1447 = vpack.c.b16 %v1432, %v1431
        %v1448 = vpack.c.b16 %v1434, %v1433
        %v1449 = vpack.c.b16 %v1436, %v1435
        %v1450 = vpack.c.b16 %v1438, %v1437
        %v1451 = vpack.c.b16 %v1440, %v1439
        %v1452 = vpack.c.b16 %v1442, %v1441
        %v1453 = vpack.c.b16 %v1444, %v1443
        %v1454 = vpack.c.b16 %v1446, %v1445
        %1463 = vmatprep.subr.bf16.mxu0 0
        %1464 = vmatpush1.bf16.msra.mxu0 %v1447
        %1465 = vmatprep.subr.bf16.mxu0 0
        %1466 = vmatpush1.bf16.msra.mxu0 %v1448
        %1467 = vmatprep.subr.bf16.mxu0 0
        %1468 = vmatpush1.bf16.msra.mxu0 %v1449
        %1469 = vmatprep.subr.bf16.mxu0 0
        %1470 = vmatpush1.bf16.msra.mxu0 %v1450
        %1471 = vmatprep.subr.bf16.mxu0 0
        %1472 = vmatpush1.bf16.msra.mxu0 %v1451
        %1473 = vmatprep.subr.bf16.mxu0 0
        %1474 = vmatpush1.bf16.msra.mxu0 %v1452
        %1475 = vmatprep.subr.bf16.mxu0 0
        %1476 = vmatpush1.bf16.msra.mxu0 %v1453
        %1477 = vmatprep.subr.bf16.mxu0 0
        %1478 = vmatpush1.bf16.msra.mxu0 %v1454
        %1479 = vmatprep.subr.bf16.mxu0 0
        %1480 = vmatpush1.bf16.msra.mxu0 0
        %1481 = vmatprep.subr.bf16.mxu0 0
        %1482 = vmatpush1.bf16.msra.mxu0 0
        %1483 = vmatprep.subr.bf16.mxu0 0
        %1484 = vmatpush1.bf16.msra.mxu0 0
        %1485 = vmatprep.subr.bf16.mxu0 0
        %1486 = vmatpush1.bf16.msra.mxu0 0
        %1487 = vmatprep.subr.bf16.mxu0 0
        %1488 = vmatpush1.bf16.msra.mxu0 0
        %1489 = vmatprep.subr.bf16.mxu0 0
        %1490 = vmatpush1.bf16.msra.mxu0 0
        %1491 = vmatprep.subr.bf16.mxu0 0
        %1492 = vmatpush1.bf16.msra.mxu0 0
        %1493 = vmatprep.subr.bf16.mxu0 0
        %1494 = vmatpush1.bf16.msra.mxu0 0
        %1495 = vmatprep.mubr.bf16.mxu0 0
        %1496 = vmatmul.mubr.bf16.gmra.mrb[0].mxu0 %v1050
        %v1497 = vpop.f32.mrb[0].mxu0
        %v1498 = vadd.f32 %v1274, %v1497
        %v1499 = vpop.f32.mrb[0].mxu0
        %v1500 = vpop.f32.mrb[0].mxu0
        %v1501 = vpop.f32.mrb[0].mxu0
        %1502 = vdwg.mxu0
        %v1519 = vunpack.c.l.b16 %v1083
        %v1520 = vunpack.c.l.b16 %v1084
        %v1521 = vunpack.c.l.b16 %v1085
        %v1522 = vunpack.c.l.b16 %v1086
        %v1523 = vunpack.c.l.b16 %v1087
        %v1524 = vunpack.c.l.b16 %v1088
        %v1525 = vunpack.c.l.b16 %v1089
        %v1526 = vunpack.c.l.b16 %v1090
        %v1527 = vunpack.c.l.b16 %v1091
        %v1528 = vunpack.c.l.b16 %v1092
        %v1529 = vunpack.c.l.b16 %v1093
        %v1530 = vunpack.c.l.b16 %v1094
        %v1531 = vunpack.c.l.b16 %v1095
        %v1532 = vunpack.c.l.b16 %v1096
        %v1533 = vunpack.c.l.b16 %v1097
        %v1534 = vunpack.c.l.b16 %v1098
        %v1535 = vpack.c.b16 %v1520, %v1519
        %v1536 = vpack.c.b16 %v1522, %v1521
        %v1537 = vpack.c.b16 %v1524, %v1523
        %v1538 = vpack.c.b16 %v1526, %v1525
        %v1539 = vpack.c.b16 %v1528, %v1527
        %v1540 = vpack.c.b16 %v1530, %v1529
        %v1541 = vpack.c.b16 %v1532, %v1531
        %v1542 = vpack.c.b16 %v1534, %v1533
        %1551 = vmatprep.subr.bf16.mxu0 0
        %1552 = vmatpush1.bf16.msra.mxu0 %v1535
        %1553 = vmatprep.subr.bf16.mxu0 0
        %1554 = vmatpush1.bf16.msra.mxu0 %v1536
        %1555 = vmatprep.subr.bf16.mxu0 0
        %1556 = vmatpush1.bf16.msra.mxu0 %v1537
        %1557 = vmatprep.subr.bf16.mxu0 0
        %1558 = vmatpush1.bf16.msra.mxu0 %v1538
        %1559 = vmatprep.subr.bf16.mxu0 0
        %1560 = vmatpush1.bf16.msra.mxu0 %v1539
        %1561 = vmatprep.subr.bf16.mxu0 0
        %1562 = vmatpush1.bf16.msra.mxu0 %v1540
        %1563 = vmatprep.subr.bf16.mxu0 0
        %1564 = vmatpush1.bf16.msra.mxu0 %v1541
        %1565 = vmatprep.subr.bf16.mxu0 0
        %1566 = vmatpush1.bf16.msra.mxu0 %v1542
        %1567 = vmatprep.subr.bf16.mxu0 0
        %1568 = vmatpush1.bf16.msra.mxu0 0
        %1569 = vmatprep.subr.bf16.mxu0 0
        %1570 = vmatpush1.bf16.msra.mxu0 0
        %1571 = vmatprep.subr.bf16.mxu0 0
        %1572 = vmatpush1.bf16.msra.mxu0 0
        %1573 = vmatprep.subr.bf16.mxu0 0
        %1574 = vmatpush1.bf16.msra.mxu0 0
        %1575 = vmatprep.subr.bf16.mxu0 0
        %1576 = vmatpush1.bf16.msra.mxu0 0
        %1577 = vmatprep.subr.bf16.mxu0 0
        %1578 = vmatpush1.bf16.msra.mxu0 0
        %1579 = vmatprep.subr.bf16.mxu0 0
        %1580 = vmatpush1.bf16.msra.mxu0 0
        %1581 = vmatprep.subr.bf16.mxu0 0
        %1582 = vmatpush1.bf16.msra.mxu0 0
        %1583 = vmatprep.mubr.bf16.mxu0 0
        %1584 = vmatmul.mubr.bf16.gmra.mrb[0].mxu0 %v1050
        %v1585 = vpop.f32.mrb[0].mxu0
        %v1586 = vadd.f32 %v1278, %v1585
        %v1587 = vpop.f32.mrb[0].mxu0
        %v1588 = vpop.f32.mrb[0].mxu0
        %v1589 = vpop.f32.mrb[0].mxu0
        %1590 = vdwg.mxu0
        %v1607 = vunpack.c.l.b16 %v1099
        %v1608 = vunpack.c.l.b16 %v1100
        %v1609 = vunpack.c.l.b16 %v1101
        %v1610 = vunpack.c.l.b16 %v1102
        %v1611 = vunpack.c.l.b16 %v1103
        %v1612 = vunpack.c.l.b16 %v1104
        %v1613 = vunpack.c.l.b16 %v1105
        %v1614 = vunpack.c.l.b16 %v1106
        %v1615 = vunpack.c.l.b16 %v1107
        %v1616 = vunpack.c.l.b16 %v1108
        %v1617 = vunpack.c.l.b16 %v1109
        %v1618 = vunpack.c.l.b16 %v1110
        %v1619 = vunpack.c.l.b16 %v1111
        %v1620 = vunpack.c.l.b16 %v1112
        %v1621 = vunpack.c.l.b16 %v1113
        %v1622 = vunpack.c.l.b16 %v1114
        %v1623 = vpack.c.b16 %v1608, %v1607
        %v1624 = vpack.c.b16 %v1610, %v1609
        %v1625 = vpack.c.b16 %v1612, %v1611
        %v1626 = vpack.c.b16 %v1614, %v1613
        %v1627 = vpack.c.b16 %v1616, %v1615
        %v1628 = vpack.c.b16 %v1618, %v1617
        %v1629 = vpack.c.b16 %v1620, %v1619
        %v1630 = vpack.c.b16 %v1622, %v1621
        %1639 = vmatprep.subr.bf16.mxu0 0
        %1640 = vmatpush1.bf16.msra.mxu0 %v1623
        %1641 = vmatprep.subr.bf16.mxu0 0
        %1642 = vmatpush1.bf16.msra.mxu0 %v1624
        %1643 = vmatprep.subr.bf16.mxu0 0
        %1644 = vmatpush1.bf16.msra.mxu0 %v1625
        %1645 = vmatprep.subr.bf16.mxu0 0
        %1646 = vmatpush1.bf16.msra.mxu0 %v1626
        %1647 = vmatprep.subr.bf16.mxu0 0
        %1648 = vmatpush1.bf16.msra.mxu0 %v1627
        %1649 = vmatprep.subr.bf16.mxu0 0
        %1650 = vmatpush1.bf16.msra.mxu0 %v1628
        %1651 = vmatprep.subr.bf16.mxu0 0
        %1652 = vmatpush1.bf16.msra.mxu0 %v1629
        %1653 = vmatprep.subr.bf16.mxu0 0
        %1654 = vmatpush1.bf16.msra.mxu0 %v1630
        %1655 = vmatprep.subr.bf16.mxu0 0
        %1656 = vmatpush1.bf16.msra.mxu0 0
        %1657 = vmatprep.subr.bf16.mxu0 0
        %1658 = vmatpush1.bf16.msra.mxu0 0
        %1659 = vmatprep.subr.bf16.mxu0 0
        %1660 = vmatpush1.bf16.msra.mxu0 0
        %1661 = vmatprep.subr.bf16.mxu0 0
        %1662 = vmatpush1.bf16.msra.mxu0 0
        %1663 = vmatprep.subr.bf16.mxu0 0
        %1664 = vmatpush1.bf16.msra.mxu0 0
        %1665 = vmatprep.subr.bf16.mxu0 0
        %1666 = vmatpush1.bf16.msra.mxu0 0
        %1667 = vmatprep.subr.bf16.mxu0 0
        %1668 = vmatpush1.bf16.msra.mxu0 0
        %1669 = vmatprep.subr.bf16.mxu0 0
        %1670 = vmatpush1.bf16.msra.mxu0 0
        %1671 = vmatprep.mubr.bf16.mxu0 0
        %1672 = vmatmul.mubr.bf16.gmra.mrb[0].mxu0 %v1050
        %v1673 = vpop.f32.mrb[0].mxu0
        %v1674 = vadd.f32 %v1282, %v1673
        %v1675 = vpop.f32.mrb[0].mxu0
        %v1676 = vpop.f32.mrb[0].mxu0
        %v1677 = vpop.f32.mrb[0].mxu0
        %1678 = vdwg.mxu0
        %v1695 = vunpack.c.l.b16 %v1115
        %v1696 = vunpack.c.l.b16 %v1116
        %v1697 = vunpack.c.l.b16 %v1117
        %v1698 = vunpack.c.l.b16 %v1118
        %v1699 = vunpack.c.l.b16 %v1119
        %v1700 = vunpack.c.l.b16 %v1120
        %v1701 = vunpack.c.l.b16 %v1121
        %v1702 = vunpack.c.l.b16 %v1122
        %v1703 = vunpack.c.l.b16 %v1123
        %v1704 = vunpack.c.l.b16 %v1124
        %v1705 = vunpack.c.l.b16 %v1125
        %v1706 = vunpack.c.l.b16 %v1126
        %v1707 = vunpack.c.l.b16 %v1127
        %v1708 = vunpack.c.l.b16 %v1128
        %v1709 = vunpack.c.l.b16 %v1129
        %v1710 = vunpack.c.l.b16 %v1130
        %v1711 = vpack.c.b16 %v1696, %v1695
        %v1712 = vpack.c.b16 %v1698, %v1697
        %v1713 = vpack.c.b16 %v1700, %v1699
        %v1714 = vpack.c.b16 %v1702, %v1701
        %v1715 = vpack.c.b16 %v1704, %v1703
        %v1716 = vpack.c.b16 %v1706, %v1705
        %v1717 = vpack.c.b16 %v1708, %v1707
        %v1718 = vpack.c.b16 %v1710, %v1709
        %1727 = vmatprep.subr.bf16.mxu0 0
        %1728 = vmatpush1.bf16.msra.mxu0 %v1711
        %1729 = vmatprep.subr.bf16.mxu0 0
        %1730 = vmatpush1.bf16.msra.mxu0 %v1712
        %1731 = vmatprep.subr.bf16.mxu0 0
        %1732 = vmatpush1.bf16.msra.mxu0 %v1713
        %1733 = vmatprep.subr.bf16.mxu0 0
        %1734 = vmatpush1.bf16.msra.mxu0 %v1714
        %1735 = vmatprep.subr.bf16.mxu0 0
        %1736 = vmatpush1.bf16.msra.mxu0 %v1715
        %1737 = vmatprep.subr.bf16.mxu0 0
        %1738 = vmatpush1.bf16.msra.mxu0 %v1716
        %1739 = vmatprep.subr.bf16.mxu0 0
        %1740 = vmatpush1.bf16.msra.mxu0 %v1717
        %1741 = vmatprep.subr.bf16.mxu0 0
        %1742 = vmatpush1.bf16.msra.mxu0 %v1718
        %1743 = vmatprep.subr.bf16.mxu0 0
        %1744 = vmatpush1.bf16.msra.mxu0 0
        %1745 = vmatprep.subr.bf16.mxu0 0
        %1746 = vmatpush1.bf16.msra.mxu0 0
        %1747 = vmatprep.subr.bf16.mxu0 0
        %1748 = vmatpush1.bf16.msra.mxu0 0
        %1749 = vmatprep.subr.bf16.mxu0 0
        %1750 = vmatpush1.bf16.msra.mxu0 0
        %1751 = vmatprep.subr.bf16.mxu0 0
        %1752 = vmatpush1.bf16.msra.mxu0 0
        %1753 = vmatprep.subr.bf16.mxu0 0
        %1754 = vmatpush1.bf16.msra.mxu0 0
        %1755 = vmatprep.subr.bf16.mxu0 0
        %1756 = vmatpush1.bf16.msra.mxu0 0
        %1757 = vmatprep.subr.bf16.mxu0 0
        %1758 = vmatpush1.bf16.msra.mxu0 0
        %1759 = vmatprep.mubr.bf16.mxu0 0
        %1760 = vmatmul.mubr.bf16.gmra.mrb[0].mxu0 %v1050
        %v1761 = vpop.f32.mrb[0].mxu0
        %v1762 = vadd.f32 %v1286, %v1761
        %v1763 = vpop.f32.mrb[0].mxu0
        %v1764 = vpop.f32.mrb[0].mxu0
        %v1765 = vpop.f32.mrb[0].mxu0
        %1766 = vdwg.mxu0
        %v1783 = vunpack.c.l.b16 %v1131
        %v1784 = vunpack.c.l.b16 %v1132
        %v1785 = vunpack.c.l.b16 %v1133
        %v1786 = vunpack.c.l.b16 %v1134
        %v1787 = vunpack.c.l.b16 %v1135
        %v1788 = vunpack.c.l.b16 %v1136
        %v1789 = vunpack.c.l.b16 %v1137
        %v1790 = vunpack.c.l.b16 %v1138
        %v1791 = vunpack.c.l.b16 %v1139
        %v1792 = vunpack.c.l.b16 %v1140
        %v1793 = vunpack.c.l.b16 %v1141
        %v1794 = vunpack.c.l.b16 %v1142
        %v1795 = vunpack.c.l.b16 %v1143
        %v1796 = vunpack.c.l.b16 %v1144
        %v1797 = vunpack.c.l.b16 %v1145
        %v1798 = vunpack.c.l.b16 %v1146
        %v1799 = vpack.c.b16 %v1784, %v1783
        %v1800 = vpack.c.b16 %v1786, %v1785
        %v1801 = vpack.c.b16 %v1788, %v1787
        %v1802 = vpack.c.b16 %v1790, %v1789
        %v1803 = vpack.c.b16 %v1792, %v1791
        %v1804 = vpack.c.b16 %v1794, %v1793
        %v1805 = vpack.c.b16 %v1796, %v1795
        %v1806 = vpack.c.b16 %v1798, %v1797
        %1815 = vmatprep.subr.bf16.mxu0 0
        %1816 = vmatpush1.bf16.msra.mxu0 %v1799
        %1817 = vmatprep.subr.bf16.mxu0 0
        %1818 = vmatpush1.bf16.msra.mxu0 %v1800
        %1819 = vmatprep.subr.bf16.mxu0 0
        %1820 = vmatpush1.bf16.msra.mxu0 %v1801
        %1821 = vmatprep.subr.bf16.mxu0 0
        %1822 = vmatpush1.bf16.msra.mxu0 %v1802
        %1823 = vmatprep.subr.bf16.mxu0 0
        %1824 = vmatpush1.bf16.msra.mxu0 %v1803
        %1825 = vmatprep.subr.bf16.mxu0 0
        %1826 = vmatpush1.bf16.msra.mxu0 %v1804
        %1827 = vmatprep.subr.bf16.mxu0 0
        %1828 = vmatpush1.bf16.msra.mxu0 %v1805
        %1829 = vmatprep.subr.bf16.mxu0 0
        %1830 = vmatpush1.bf16.msra.mxu0 %v1806
        %1831 = vmatprep.subr.bf16.mxu0 0
        %1832 = vmatpush1.bf16.msra.mxu0 0
        %1833 = vmatprep.subr.bf16.mxu0 0
        %1834 = vmatpush1.bf16.msra.mxu0 0
        %1835 = vmatprep.subr.bf16.mxu0 0
        %1836 = vmatpush1.bf16.msra.mxu0 0
        %1837 = vmatprep.subr.bf16.mxu0 0
        %1838 = vmatpush1.bf16.msra.mxu0 0
        %1839 = vmatprep.subr.bf16.mxu0 0
        %1840 = vmatpush1.bf16.msra.mxu0 0
        %1841 = vmatprep.subr.bf16.mxu0 0
        %1842 = vmatpush1.bf16.msra.mxu0 0
        %1843 = vmatprep.subr.bf16.mxu0 0
        %1844 = vmatpush1.bf16.msra.mxu0 0
        %1845 = vmatprep.subr.bf16.mxu0 0
        %1846 = vmatpush1.bf16.msra.mxu0 0
        %1847 = vmatprep.mubr.bf16.mxu0 0
        %1848 = vmatmul.mubr.bf16.gmra.mrb[0].mxu0 %v1050
        %v1849 = vpop.f32.mrb[0].mxu0
        %v1850 = vadd.f32 %v1290, %v1849
        %v1851 = vpop.f32.mrb[0].mxu0
        %v1852 = vpop.f32.mrb[0].mxu0
        %v1853 = vpop.f32.mrb[0].mxu0
        %1854 = vdwg.mxu0
        %v1871 = vunpack.c.l.b16 %v1147
        %v1872 = vunpack.c.l.b16 %v1148
        %v1873 = vunpack.c.l.b16 %v1149
        %v1874 = vunpack.c.l.b16 %v1150
        %v1875 = vunpack.c.l.b16 %v1151
        %v1876 = vunpack.c.l.b16 %v1152
        %v1877 = vunpack.c.l.b16 %v1153
        %v1878 = vunpack.c.l.b16 %v1154
        %v1879 = vunpack.c.l.b16 %v1155
        %v1880 = vunpack.c.l.b16 %v1156
        %v1881 = vunpack.c.l.b16 %v1157
        %v1882 = vunpack.c.l.b16 %v1158
        %v1883 = vunpack.c.l.b16 %v1159
        %v1884 = vunpack.c.l.b16 %v1160
        %v1885 = vunpack.c.l.b16 %v1161
        %v1886 = vunpack.c.l.b16 %v1162
        %v1887 = vpack.c.b16 %v1872, %v1871
        %v1888 = vpack.c.b16 %v1874, %v1873
        %v1889 = vpack.c.b16 %v1876, %v1875
        %v1890 = vpack.c.b16 %v1878, %v1877
        %v1891 = vpack.c.b16 %v1880, %v1879
        %v1892 = vpack.c.b16 %v1882, %v1881
        %v1893 = vpack.c.b16 %v1884, %v1883
        %v1894 = vpack.c.b16 %v1886, %v1885
        %1903 = vmatprep.subr.bf16.mxu0 0
        %1904 = vmatpush1.bf16.msra.mxu0 %v1887
        %1905 = vmatprep.subr.bf16.mxu0 0
        %1906 = vmatpush1.bf16.msra.mxu0 %v1888
        %1907 = vmatprep.subr.bf16.mxu0 0
        %1908 = vmatpush1.bf16.msra.mxu0 %v1889
        %1909 = vmatprep.subr.bf16.mxu0 0
        %1910 = vmatpush1.bf16.msra.mxu0 %v1890
        %1911 = vmatprep.subr.bf16.mxu0 0
        %1912 = vmatpush1.bf16.msra.mxu0 %v1891
        %1913 = vmatprep.subr.bf16.mxu0 0
        %1914 = vmatpush1.bf16.msra.mxu0 %v1892
        %1915 = vmatprep.subr.bf16.mxu0 0
        %1916 = vmatpush1.bf16.msra.mxu0 %v1893
        %1917 = vmatprep.subr.bf16.mxu0 0
        %1918 = vmatpush1.bf16.msra.mxu0 %v1894
        %1919 = vmatprep.subr.bf16.mxu0 0
        %1920 = vmatpush1.bf16.msra.mxu0 0
        %1921 = vmatprep.subr.bf16.mxu0 0
        %1922 = vmatpush1.bf16.msra.mxu0 0
        %1923 = vmatprep.subr.bf16.mxu0 0
        %1924 = vmatpush1.bf16.msra.mxu0 0
        %1925 = vmatprep.subr.bf16.mxu0 0
        %1926 = vmatpush1.bf16.msra.mxu0 0
        %1927 = vmatprep.subr.bf16.mxu0 0
        %1928 = vmatpush1.bf16.msra.mxu0 0
        %1929 = vmatprep.subr.bf16.mxu0 0
        %1930 = vmatpush1.bf16.msra.mxu0 0
        %1931 = vmatprep.subr.bf16.mxu0 0
        %1932 = vmatpush1.bf16.msra.mxu0 0
        %1933 = vmatprep.subr.bf16.mxu0 0
        %1934 = vmatpush1.bf16.msra.mxu0 0
        %1935 = vmatprep.mubr.bf16.mxu0 0
        %1936 = vmatmul.mubr.bf16.gmra.mrb[0].mxu0 %v1050
        %v1937 = vpop.f32.mrb[0].mxu0
        %v1938 = vadd.f32 %v1294, %v1937
        %v1939 = vpop.f32.mrb[0].mxu0
        %v1940 = vpop.f32.mrb[0].mxu0
        %v1941 = vpop.f32.mrb[0].mxu0
        %1942 = vdwg.mxu0
        %v1959 = vunpack.c.l.b16 %v1163
        %v1960 = vunpack.c.l.b16 %v1164
        %v1961 = vunpack.c.l.b16 %v1165
        %v1962 = vunpack.c.l.b16 %v1166
        %v1963 = vunpack.c.l.b16 %v1167
        %v1964 = vunpack.c.l.b16 %v1168
        %v1965 = vunpack.c.l.b16 %v1169
        %v1966 = vunpack.c.l.b16 %v1170
        %v1967 = vunpack.c.l.b16 %v1171
        %v1968 = vunpack.c.l.b16 %v1172
        %v1969 = vunpack.c.l.b16 %v1173
        %v1970 = vunpack.c.l.b16 %v1174
        %v1971 = vunpack.c.l.b16 %v1175
        %v1972 = vunpack.c.l.b16 %v1176
        %v1973 = vunpack.c.l.b16 %v1177
        %v1974 = vunpack.c.l.b16 %v1178
        %v1975 = vpack.c.b16 %v1960, %v1959
        %v1976 = vpack.c.b16 %v1962, %v1961
        %v1977 = vpack.c.b16 %v1964, %v1963
        %v1978 = vpack.c.b16 %v1966, %v1965
        %v1979 = vpack.c.b16 %v1968, %v1967
        %v1980 = vpack.c.b16 %v1970, %v1969
        %v1981 = vpack.c.b16 %v1972, %v1971
        %v1982 = vpack.c.b16 %v1974, %v1973
        %1991 = vmatprep.subr.bf16.mxu0 0
        %1992 = vmatpush1.bf16.msra.mxu0 %v1975
        %1993 = vmatprep.subr.bf16.mxu0 0
        %1994 = vmatpush1.bf16.msra.mxu0 %v1976
        %1995 = vmatprep.subr.bf16.mxu0 0
        %1996 = vmatpush1.bf16.msra.mxu0 %v1977
        %1997 = vmatprep.subr.bf16.mxu0 0
        %1998 = vmatpush1.bf16.msra.mxu0 %v1978
        %1999 = vmatprep.subr.bf16.mxu0 0
        %2000 = vmatpush1.bf16.msra.mxu0 %v1979
        %2001 = vmatprep.subr.bf16.mxu0 0
        %2002 = vmatpush1.bf16.msra.mxu0 %v1980
        %2003 = vmatprep.subr.bf16.mxu0 0
        %2004 = vmatpush1.bf16.msra.mxu0 %v1981
        %2005 = vmatprep.subr.bf16.mxu0 0
        %2006 = vmatpush1.bf16.msra.mxu0 %v1982
        %2007 = vmatprep.subr.bf16.mxu0 0
        %2008 = vmatpush1.bf16.msra.mxu0 0
        %2009 = vmatprep.subr.bf16.mxu0 0
        %2010 = vmatpush1.bf16.msra.mxu0 0
        %2011 = vmatprep.subr.bf16.mxu0 0
        %2012 = vmatpush1.bf16.msra.mxu0 0
        %2013 = vmatprep.subr.bf16.mxu0 0
        %2014 = vmatpush1.bf16.msra.mxu0 0
        %2015 = vmatprep.subr.bf16.mxu0 0
        %2016 = vmatpush1.bf16.msra.mxu0 0
        %2017 = vmatprep.subr.bf16.mxu0 0
        %2018 = vmatpush1.bf16.msra.mxu0 0
        %2019 = vmatprep.subr.bf16.mxu0 0
        %2020 = vmatpush1.bf16.msra.mxu0 0
        %2021 = vmatprep.subr.bf16.mxu0 0
        %2022 = vmatpush1.bf16.msra.mxu0 0
        %2023 = vmatprep.mubr.bf16.mxu0 0
        %2024 = vmatmul.mubr.bf16.gmra.mrb[0].mxu0 %v1050
        %v2025 = vpop.f32.mrb[0].mxu0
        %v2026 = vadd.f32 %v1298, %v2025
        %v2027 = vpop.f32.mrb[0].mxu0
        %v2028 = vpop.f32.mrb[0].mxu0
        %v2029 = vpop.f32.mrb[0].mxu0
        %2030 = vdwg.mxu0
        %v2047 = vunpack.c.l.b16 %v1179
        %v2048 = vunpack.c.l.b16 %v1180
        %v2049 = vunpack.c.l.b16 %v1181
        %v2050 = vunpack.c.l.b16 %v1182
        %v2051 = vunpack.c.l.b16 %v1183
        %v2052 = vunpack.c.l.b16 %v1184
        %v2053 = vunpack.c.l.b16 %v1185
        %v2054 = vunpack.c.l.b16 %v1186
        %v2055 = vunpack.c.l.b16 %v1187
        %v2056 = vunpack.c.l.b16 %v1188
        %v2057 = vunpack.c.l.b16 %v1189
        %v2058 = vunpack.c.l.b16 %v1190
        %v2059 = vunpack.c.l.b16 %v1191
        %v2060 = vunpack.c.l.b16 %v1192
        %v2061 = vunpack.c.l.b16 %v1193
        %v2062 = vunpack.c.l.b16 %v1194
        %v2063 = vpack.c.b16 %v2048, %v2047
        %v2064 = vpack.c.b16 %v2050, %v2049
        %v2065 = vpack.c.b16 %v2052, %v2051
        %v2066 = vpack.c.b16 %v2054, %v2053
        %v2067 = vpack.c.b16 %v2056, %v2055
        %v2068 = vpack.c.b16 %v2058, %v2057
        %v2069 = vpack.c.b16 %v2060, %v2059
        %v2070 = vpack.c.b16 %v2062, %v2061
        %2079 = vmatprep.subr.bf16.mxu0 0
        %2080 = vmatpush1.bf16.msra.mxu0 %v2063
        %2081 = vmatprep.subr.bf16.mxu0 0
        %2082 = vmatpush1.bf16.msra.mxu0 %v2064
        %2083 = vmatprep.subr.bf16.mxu0 0
        %2084 = vmatpush1.bf16.msra.mxu0 %v2065
        %2085 = vmatprep.subr.bf16.mxu0 0
        %2086 = vmatpush1.bf16.msra.mxu0 %v2066
        %2087 = vmatprep.subr.bf16.mxu0 0
        %2088 = vmatpush1.bf16.msra.mxu0 %v2067
        %2089 = vmatprep.subr.bf16.mxu0 0
        %2090 = vmatpush1.bf16.msra.mxu0 %v2068
        %2091 = vmatprep.subr.bf16.mxu0 0
        %2092 = vmatpush1.bf16.msra.mxu0 %v2069
        %2093 = vmatprep.subr.bf16.mxu0 0
        %2094 = vmatpush1.bf16.msra.mxu0 %v2070
        %2095 = vmatprep.subr.bf16.mxu0 0
        %2096 = vmatpush1.bf16.msra.mxu0 0
        %2097 = vmatprep.subr.bf16.mxu0 0
        %2098 = vmatpush1.bf16.msra.mxu0 0
        %2099 = vmatprep.subr.bf16.mxu0 0
        %2100 = vmatpush1.bf16.msra.mxu0 0
        %2101 = vmatprep.subr.bf16.mxu0 0
        %2102 = vmatpush1.bf16.msra.mxu0 0
        %2103 = vmatprep.subr.bf16.mxu0 0
        %2104 = vmatpush1.bf16.msra.mxu0 0
        %2105 = vmatprep.subr.bf16.mxu0 0
        %2106 = vmatpush1.bf16.msra.mxu0 0
        %2107 = vmatprep.subr.bf16.mxu0 0
        %2108 = vmatpush1.bf16.msra.mxu0 0
        %2109 = vmatprep.subr.bf16.mxu0 0
        %2110 = vmatpush1.bf16.msra.mxu0 0
        %2111 = vmatprep.mubr.bf16.mxu0 0
        %2112 = vmatmul.mubr.bf16.gmra.mrb[0].mxu0 %v1050
        %v2113 = vpop.f32.mrb[0].mxu0
        %v2114 = vadd.f32 %v1302, %v2113
        %v2115 = vpop.f32.mrb[0].mxu0
        %v2116 = vpop.f32.mrb[0].mxu0
        %v2117 = vpop.f32.mrb[0].mxu0
        %2118 = vdwg.mxu0
        %v2135 = vunpack.c.l.b16 %v1195
        %v2136 = vunpack.c.l.b16 %v1196
        %v2137 = vunpack.c.l.b16 %v1197
        %v2138 = vunpack.c.l.b16 %v1198
        %v2139 = vunpack.c.l.b16 %v1199
        %v2140 = vunpack.c.l.b16 %v1200
        %v2141 = vunpack.c.l.b16 %v1201
        %v2142 = vunpack.c.l.b16 %v1202
        %v2143 = vunpack.c.l.b16 %v1203
        %v2144 = vunpack.c.l.b16 %v1204
        %v2145 = vunpack.c.l.b16 %v1205
        %v2146 = vunpack.c.l.b16 %v1206
        %v2147 = vunpack.c.l.b16 %v1207
        %v2148 = vunpack.c.l.b16 %v1208
        %v2149 = vunpack.c.l.b16 %v1209
        %v2150 = vunpack.c.l.b16 %v1210
        %v2151 = vpack.c.b16 %v2136, %v2135
        %v2152 = vpack.c.b16 %v2138, %v2137
        %v2153 = vpack.c.b16 %v2140, %v2139
        %v2154 = vpack.c.b16 %v2142, %v2141
        %v2155 = vpack.c.b16 %v2144, %v2143
        %v2156 = vpack.c.b16 %v2146, %v2145
        %v2157 = vpack.c.b16 %v2148, %v2147
        %v2158 = vpack.c.b16 %v2150, %v2149
        %2167 = vmatprep.subr.bf16.mxu0 0
        %2168 = vmatpush1.bf16.msra.mxu0 %v2151
        %2169 = vmatprep.subr.bf16.mxu0 0
        %2170 = vmatpush1.bf16.msra.mxu0 %v2152
        %2171 = vmatprep.subr.bf16.mxu0 0
        %2172 = vmatpush1.bf16.msra.mxu0 %v2153
        %2173 = vmatprep.subr.bf16.mxu0 0
        %2174 = vmatpush1.bf16.msra.mxu0 %v2154
        %2175 = vmatprep.subr.bf16.mxu0 0
        %2176 = vmatpush1.bf16.msra.mxu0 %v2155
        %2177 = vmatprep.subr.bf16.mxu0 0
        %2178 = vmatpush1.bf16.msra.mxu0 %v2156
        %2179 = vmatprep.subr.bf16.mxu0 0
        %2180 = vmatpush1.bf16.msra.mxu0 %v2157
        %2181 = vmatprep.subr.bf16.mxu0 0
        %2182 = vmatpush1.bf16.msra.mxu0 %v2158
        %2183 = vmatprep.subr.bf16.mxu0 0
        %2184 = vmatpush1.bf16.msra.mxu0 0
        %2185 = vmatprep.subr.bf16.mxu0 0
        %2186 = vmatpush1.bf16.msra.mxu0 0
        %2187 = vmatprep.subr.bf16.mxu0 0
        %2188 = vmatpush1.bf16.msra.mxu0 0
        %2189 = vmatprep.subr.bf16.mxu0 0
        %2190 = vmatpush1.bf16.msra.mxu0 0
        %2191 = vmatprep.subr.bf16.mxu0 0
        %2192 = vmatpush1.bf16.msra.mxu0 0
        %2193 = vmatprep.subr.bf16.mxu0 0
        %2194 = vmatpush1.bf16.msra.mxu0 0
        %2195 = vmatprep.subr.bf16.mxu0 0
        %2196 = vmatpush1.bf16.msra.mxu0 0
        %2197 = vmatprep.subr.bf16.mxu0 0
        %2198 = vmatpush1.bf16.msra.mxu0 0
        %2199 = vmatprep.mubr.bf16.mxu0 0
        %2200 = vmatmul.mubr.bf16.gmra.mrb[0].mxu0 %v1050
        %v2201 = vpop.f32.mrb[0].mxu0
        %v2202 = vadd.f32 %v1306, %v2201
        %v2203 = vpop.f32.mrb[0].mxu0
        %v2204 = vpop.f32.mrb[0].mxu0
        %v2205 = vpop.f32.mrb[0].mxu0
        %2206 = vdwg.mxu0
        %v2223 = vunpack.c.l.b16 %v1211
        %v2224 = vunpack.c.l.b16 %v1212
        %v2225 = vunpack.c.l.b16 %v1213
        %v2226 = vunpack.c.l.b16 %v1214
        %v2227 = vunpack.c.l.b16 %v1215
        %v2228 = vunpack.c.l.b16 %v1216
        %v2229 = vunpack.c.l.b16 %v1217
        %v2230 = vunpack.c.l.b16 %v1218
        %v2231 = vunpack.c.l.b16 %v1219
        %v2232 = vunpack.c.l.b16 %v1220
        %v2233 = vunpack.c.l.b16 %v1221
        %v2234 = vunpack.c.l.b16 %v1222
        %v2235 = vunpack.c.l.b16 %v1223
        %v2236 = vunpack.c.l.b16 %v1224
        %v2237 = vunpack.c.l.b16 %v1225
        %v2238 = vunpack.c.l.b16 %v1226
        %v2239 = vpack.c.b16 %v2224, %v2223
        %v2240 = vpack.c.b16 %v2226, %v2225
        %v2241 = vpack.c.b16 %v2228, %v2227
        %v2242 = vpack.c.b16 %v2230, %v2229
        %v2243 = vpack.c.b16 %v2232, %v2231
        %v2244 = vpack.c.b16 %v2234, %v2233
        %v2245 = vpack.c.b16 %v2236, %v2235
        %v2246 = vpack.c.b16 %v2238, %v2237
        %2255 = vmatprep.subr.bf16.mxu0 0
        %2256 = vmatpush1.bf16.msra.mxu0 %v2239
        %2257 = vmatprep.subr.bf16.mxu0 0
        %2258 = vmatpush1.bf16.msra.mxu0 %v2240
        %2259 = vmatprep.subr.bf16.mxu0 0
        %2260 = vmatpush1.bf16.msra.mxu0 %v2241
        %2261 = vmatprep.subr.bf16.mxu0 0
        %2262 = vmatpush1.bf16.msra.mxu0 %v2242
        %2263 = vmatprep.subr.bf16.mxu0 0
        %2264 = vmatpush1.bf16.msra.mxu0 %v2243
        %2265 = vmatprep.subr.bf16.mxu0 0
        %2266 = vmatpush1.bf16.msra.mxu0 %v2244
        %2267 = vmatprep.subr.bf16.mxu0 0
        %2268 = vmatpush1.bf16.msra.mxu0 %v2245
        %2269 = vmatprep.subr.bf16.mxu0 0
        %2270 = vmatpush1.bf16.msra.mxu0 %v2246
        %2271 = vmatprep.subr.bf16.mxu0 0
        %2272 = vmatpush1.bf16.msra.mxu0 0
        %2273 = vmatprep.subr.bf16.mxu0 0
        %2274 = vmatpush1.bf16.msra.mxu0 0
        %2275 = vmatprep.subr.bf16.mxu0 0
        %2276 = vmatpush1.bf16.msra.mxu0 0
        %2277 = vmatprep.subr.bf16.mxu0 0
        %2278 = vmatpush1.bf16.msra.mxu0 0
        %2279 = vmatprep.subr.bf16.mxu0 0
        %2280 = vmatpush1.bf16.msra.mxu0 0
        %2281 = vmatprep.subr.bf16.mxu0 0
        %2282 = vmatpush1.bf16.msra.mxu0 0
        %2283 = vmatprep.subr.bf16.mxu0 0
        %2284 = vmatpush1.bf16.msra.mxu0 0
        %2285 = vmatprep.subr.bf16.mxu0 0
        %2286 = vmatpush1.bf16.msra.mxu0 0
        %2287 = vmatprep.mubr.bf16.mxu0 0
        %2288 = vmatmul.mubr.bf16.gmra.mrb[0].mxu0 %v1050
        %v2289 = vpop.f32.mrb[0].mxu0
        %v2290 = vadd.f32 %v1310, %v2289
        %v2291 = vpop.f32.mrb[0].mxu0
        %v2292 = vpop.f32.mrb[0].mxu0
        %v2293 = vpop.f32.mrb[0].mxu0
        %2294 = vdwg.mxu0
        %v2311 = vunpack.c.l.b16 %v1227
        %v2312 = vunpack.c.l.b16 %v1228
        %v2313 = vunpack.c.l.b16 %v1229
        %v2314 = vunpack.c.l.b16 %v1230
        %v2315 = vunpack.c.l.b16 %v1231
        %v2316 = vunpack.c.l.b16 %v1232
        %v2317 = vunpack.c.l.b16 %v1233
        %v2318 = vunpack.c.l.b16 %v1234
        %v2319 = vunpack.c.l.b16 %v1235
        %v2320 = vunpack.c.l.b16 %v1236
        %v2321 = vunpack.c.l.b16 %v1237
        %v2322 = vunpack.c.l.b16 %v1238
        %v2323 = vunpack.c.l.b16 %v1239
        %v2324 = vunpack.c.l.b16 %v1240
        %v2325 = vunpack.c.l.b16 %v1241
        %v2326 = vunpack.c.l.b16 %v1242
        %v2327 = vpack.c.b16 %v2312, %v2311
        %v2328 = vpack.c.b16 %v2314, %v2313
        %v2329 = vpack.c.b16 %v2316, %v2315
        %v2330 = vpack.c.b16 %v2318, %v2317
        %v2331 = vpack.c.b16 %v2320, %v2319
        %v2332 = vpack.c.b16 %v2322, %v2321
        %v2333 = vpack.c.b16 %v2324, %v2323
        %v2334 = vpack.c.b16 %v2326, %v2325
        %2343 = vmatprep.subr.bf16.mxu0 0
        %2344 = vmatpush1.bf16.msra.mxu0 %v2327
        %2345 = vmatprep.subr.bf16.mxu0 0
        %2346 = vmatpush1.bf16.msra.mxu0 %v2328
        %2347 = vmatprep.subr.bf16.mxu0 0
        %2348 = vmatpush1.bf16.msra.mxu0 %v2329
        %2349 = vmatprep.subr.bf16.mxu0 0
        %2350 = vmatpush1.bf16.msra.mxu0 %v2330
        %2351 = vmatprep.subr.bf16.mxu0 0
        %2352 = vmatpush1.bf16.msra.mxu0 %v2331
        %2353 = vmatprep.subr.bf16.mxu0 0
        %2354 = vmatpush1.bf16.msra.mxu0 %v2332
        %2355 = vmatprep.subr.bf16.mxu0 0
        %2356 = vmatpush1.bf16.msra.mxu0 %v2333
        %2357 = vmatprep.subr.bf16.mxu0 0
        %2358 = vmatpush1.bf16.msra.mxu0 %v2334
        %2359 = vmatprep.subr.bf16.mxu0 0
        %2360 = vmatpush1.bf16.msra.mxu0 0
        %2361 = vmatprep.subr.bf16.mxu0 0
        %2362 = vmatpush1.bf16.msra.mxu0 0
        %2363 = vmatprep.subr.bf16.mxu0 0
        %2364 = vmatpush1.bf16.msra.mxu0 0
        %2365 = vmatprep.subr.bf16.mxu0 0
        %2366 = vmatpush1.bf16.msra.mxu0 0
        %2367 = vmatprep.subr.bf16.mxu0 0
        %2368 = vmatpush1.bf16.msra.mxu0 0
        %2369 = vmatprep.subr.bf16.mxu0 0
        %2370 = vmatpush1.bf16.msra.mxu0 0
        %2371 = vmatprep.subr.bf16.mxu0 0
        %2372 = vmatpush1.bf16.msra.mxu0 0
        %2373 = vmatprep.subr.bf16.mxu0 0
        %2374 = vmatpush1.bf16.msra.mxu0 0
        %2375 = vmatprep.mubr.bf16.mxu0 0
        %2376 = vmatmul.mubr.bf16.gmra.mrb[0].mxu0 %v1050
        %v2377 = vpop.f32.mrb[0].mxu0
        %v2378 = vadd.f32 %v1314, %v2377
        %v2379 = vpop.f32.mrb[0].mxu0
        %v2380 = vpop.f32.mrb[0].mxu0
        %v2381 = vpop.f32.mrb[0].mxu0
        %2382 = vdwg.mxu0
        %v2383 = vpack.c.bf16 %v1410, %v1410
        %v2384 = vpack.c.bf16 %v1498, %v1498
        %v2385 = vpack.c.bf16 %v1586, %v1586
        %v2386 = vpack.c.bf16 %v1674, %v1674
        %v2387 = vpack.c.bf16 %v1762, %v1762
        %v2388 = vpack.c.bf16 %v1850, %v1850
        %v2389 = vpack.c.bf16 %v1938, %v1938
        %v2390 = vpack.c.bf16 %v2026, %v2026
        %v2391 = vld [vmem:[%s797] sm:$0x1]
        %v2393 = vlaneseq
        %v2394 = vshrl.u32 %v2393, 7
        %v2395 = vsub.s32 0, %v2394
        %v2396 = vrot.slane %v2391, %v2395
        %vm2398 = vcmask 261120
        %v2400 = vsel %vm2398, %v2383, 0
        %v2403 = vsel %vm2398, %v2387, 0
        %2405 = vmatprep.subr.bf16.mxu0 0
        %2406 = vmatpush1.bf16.xpose.msra.mxu0 %v2403
        %2407 = vmatprep.subr.bf16.mxu0 0
        %2408 = vmatpush1.bf16.xpose.msra.mxu0 0
        %2409 = vmatprep.subr.bf16.mxu0 0
        %2410 = vmatpush1.bf16.xpose.msra.mxu0 0
        %2411 = vmatprep.subr.bf16.mxu0 0
        %2412 = vmatpush1.bf16.xpose.msra.mxu0 0
        %2413 = vmatprep.subr.bf16.mxu0 0
        %2414 = vmatpush1.bf16.xpose.msra.mxu0 0
        %2415 = vmatprep.subr.bf16.mxu0 0
        %2416 = vmatpush1.bf16.xpose.msra.mxu0 0
        %2417 = vmatprep.subr.bf16.mxu0 0
        %2418 = vmatpush1.bf16.xpose.msra.mxu0 0
        %2419 = vmatprep.subr.bf16.mxu0 0
        %2420 = vmatpush1.bf16.xpose.msra.mxu0 0
        %2421 = vmatprep.subr.bf16.mxu0 0
        %2422 = vmatpush1.bf16.xpose.msra.mxu0 0
        %2423 = vmatprep.subr.bf16.mxu0 0
        %2424 = vmatpush1.bf16.xpose.msra.mxu0 0
        %2425 = vmatprep.subr.bf16.mxu0 0
        %2426 = vmatpush1.bf16.xpose.msra.mxu0 0
        %2427 = vmatprep.subr.bf16.mxu0 0
        %2428 = vmatpush1.bf16.xpose.msra.mxu0 0
        %2429 = vmatprep.subr.bf16.mxu0 0
        %2430 = vmatpush1.bf16.xpose.msra.mxu0 0
        %2431 = vmatprep.subr.bf16.mxu0 0
        %2432 = vmatpush1.bf16.xpose.msra.mxu0 0
        %2433 = vmatprep.subr.bf16.mxu0 0
        %2434 = vmatpush1.bf16.xpose.msra.mxu0 0
        %2435 = vmatprep.subr.bf16.mxu0 0
        %2436 = vmatpush1.bf16.xpose.msra.mxu0 0
        %2437 = vmatprep.mubr.bf16.mxu0 0
        %2438 = vmatmul.mubr.bf16.gmra.mrb[0].mxu0 %v2400
        %v2439 = vpop.f32.mrb[0].mxu0
        %v2440 = vadd.f32 %v2396, %v2439
        %v2441 = vpop.f32.mrb[0].mxu0
        %v2442 = vpop.f32.mrb[0].mxu0
        %v2443 = vpop.f32.mrb[0].mxu0
        %2444 = vdwg.mxu0
        %v2446 = vsel %vm2398, %v2384, 0
        %v2449 = vsel %vm2398, %v2388, 0
        %2451 = vmatprep.subr.bf16.mxu0 0
        %2452 = vmatpush1.bf16.xpose.msra.mxu0 %v2449
        %2453 = vmatprep.subr.bf16.mxu0 0
        %2454 = vmatpush1.bf16.xpose.msra.mxu0 0
        %2455 = vmatprep.subr.bf16.mxu0 0
        %2456 = vmatpush1.bf16.xpose.msra.mxu0 0
        %2457 = vmatprep.subr.bf16.mxu0 0
        %2458 = vmatpush1.bf16.xpose.msra.mxu0 0
        %2459 = vmatprep.subr.bf16.mxu0 0
        %2460 = vmatpush1.bf16.xpose.msra.mxu0 0
        %2461 = vmatprep.subr.bf16.mxu0 0
        %2462 = vmatpush1.bf16.xpose.msra.mxu0 0
        %2463 = vmatprep.subr.bf16.mxu0 0
        %2464 = vmatpush1.bf16.xpose.msra.mxu0 0
        %2465 = vmatprep.subr.bf16.mxu0 0
        %2466 = vmatpush1.bf16.xpose.msra.mxu0 0
        %2467 = vmatprep.subr.bf16.mxu0 0
        %2468 = vmatpush1.bf16.xpose.msra.mxu0 0
        %2469 = vmatprep.subr.bf16.mxu0 0
        %2470 = vmatpush1.bf16.xpose.msra.mxu0 0
        %2471 = vmatprep.subr.bf16.mxu0 0
        %2472 = vmatpush1.bf16.xpose.msra.mxu0 0
        %2473 = vmatprep.subr.bf16.mxu0 0
        %2474 = vmatpush1.bf16.xpose.msra.mxu0 0
        %2475 = vmatprep.subr.bf16.mxu0 0
        %2476 = vmatpush1.bf16.xpose.msra.mxu0 0
        %2477 = vmatprep.subr.bf16.mxu0 0
        %2478 = vmatpush1.bf16.xpose.msra.mxu0 0
        %2479 = vmatprep.subr.bf16.mxu0 0
        %2480 = vmatpush1.bf16.xpose.msra.mxu0 0
        %2481 = vmatprep.subr.bf16.mxu0 0
        %2482 = vmatpush1.bf16.xpose.msra.mxu0 0
        %2483 = vmatprep.mubr.bf16.mxu0 0
        %2484 = vmatmul.mubr.bf16.gmra.mrb[0].mxu0 %v2446
        %v2485 = vpop.f32.mrb[0].mxu0
        %v2486 = vadd.f32 %v2396, %v2485
        %v2487 = vpop.f32.mrb[0].mxu0
        %v2488 = vpop.f32.mrb[0].mxu0
        %v2489 = vpop.f32.mrb[0].mxu0
        %2490 = vdwg.mxu0
        %v2492 = vsel %vm2398, %v2385, 0
        %v2495 = vsel %vm2398, %v2389, 0
        %2497 = vmatprep.subr.bf16.mxu0 0
        %2498 = vmatpush1.bf16.xpose.msra.mxu0 %v2495
        %2499 = vmatprep.subr.bf16.mxu0 0
        %2500 = vmatpush1.bf16.xpose.msra.mxu0 0
        %2501 = vmatprep.subr.bf16.mxu0 0
        %2502 = vmatpush1.bf16.xpose.msra.mxu0 0
        %2503 = vmatprep.subr.bf16.mxu0 0
        %2504 = vmatpush1.bf16.xpose.msra.mxu0 0
        %2505 = vmatprep.subr.bf16.mxu0 0
        %2506 = vmatpush1.bf16.xpose.msra.mxu0 0
        %2507 = vmatprep.subr.bf16.mxu0 0
        %2508 = vmatpush1.bf16.xpose.msra.mxu0 0
        %2509 = vmatprep.subr.bf16.mxu0 0
        %2510 = vmatpush1.bf16.xpose.msra.mxu0 0
        %2511 = vmatprep.subr.bf16.mxu0 0
        %2512 = vmatpush1.bf16.xpose.msra.mxu0 0
        %2513 = vmatprep.subr.bf16.mxu0 0
        %2514 = vmatpush1.bf16.xpose.msra.mxu0 0
        %2515 = vmatprep.subr.bf16.mxu0 0
        %2516 = vmatpush1.bf16.xpose.msra.mxu0 0
        %2517 = vmatprep.subr.bf16.mxu0 0
        %2518 = vmatpush1.bf16.xpose.msra.mxu0 0
        %2519 = vmatprep.subr.bf16.mxu0 0
        %2520 = vmatpush1.bf16.xpose.msra.mxu0 0
        %2521 = vmatprep.subr.bf16.mxu0 0
        %2522 = vmatpush1.bf16.xpose.msra.mxu0 0
        %2523 = vmatprep.subr.bf16.mxu0 0
        %2524 = vmatpush1.bf16.xpose.msra.mxu0 0
        %2525 = vmatprep.subr.bf16.mxu0 0
        %2526 = vmatpush1.bf16.xpose.msra.mxu0 0
        %2527 = vmatprep.subr.bf16.mxu0 0
        %2528 = vmatpush1.bf16.xpose.msra.mxu0 0
        %2529 = vmatprep.mubr.bf16.mxu0 0
        %2530 = vmatmul.mubr.bf16.gmra.mrb[0].mxu0 %v2492
        %v2531 = vpop.f32.mrb[0].mxu0
        %v2532 = vadd.f32 %v2396, %v2531
        %v2533 = vpop.f32.mrb[0].mxu0
        %v2534 = vpop.f32.mrb[0].mxu0
        %v2535 = vpop.f32.mrb[0].mxu0
        %2536 = vdwg.mxu0
        %v2538 = vsel %vm2398, %v2386, 0
        %v2541 = vsel %vm2398, %v2390, 0
        %2543 = vmatprep.subr.bf16.mxu0 0
        %2544 = vmatpush1.bf16.xpose.msra.mxu0 %v2541
        %2545 = vmatprep.subr.bf16.mxu0 0
        %2546 = vmatpush1.bf16.xpose.msra.mxu0 0
        %2547 = vmatprep.subr.bf16.mxu0 0
        %2548 = vmatpush1.bf16.xpose.msra.mxu0 0
        %2549 = vmatprep.subr.bf16.mxu0 0
        %2550 = vmatpush1.bf16.xpose.msra.mxu0 0
        %2551 = vmatprep.subr.bf16.mxu0 0
        %2552 = vmatpush1.bf16.xpose.msra.mxu0 0
        %2553 = vmatprep.subr.bf16.mxu0 0
        %2554 = vmatpush1.bf16.xpose.msra.mxu0 0
        %2555 = vmatprep.subr.bf16.mxu0 0
        %2556 = vmatpush1.bf16.xpose.msra.mxu0 0
        %2557 = vmatprep.subr.bf16.mxu0 0
        %2558 = vmatpush1.bf16.xpose.msra.mxu0 0
        %2559 = vmatprep.subr.bf16.mxu0 0
        %2560 = vmatpush1.bf16.xpose.msra.mxu0 0
        %2561 = vmatprep.subr.bf16.mxu0 0
        %2562 = vmatpush1.bf16.xpose.msra.mxu0 0
        %2563 = vmatprep.subr.bf16.mxu0 0
        %2564 = vmatpush1.bf16.xpose.msra.mxu0 0
        %2565 = vmatprep.subr.bf16.mxu0 0
        %2566 = vmatpush1.bf16.xpose.msra.mxu0 0
        %2567 = vmatprep.subr.bf16.mxu0 0
        %2568 = vmatpush1.bf16.xpose.msra.mxu0 0
        %2569 = vmatprep.subr.bf16.mxu0 0
        %2570 = vmatpush1.bf16.xpose.msra.mxu0 0
        %2571 = vmatprep.subr.bf16.mxu0 0
        %2572 = vmatpush1.bf16.xpose.msra.mxu0 0
        %2573 = vmatprep.subr.bf16.mxu0 0
        %2574 = vmatpush1.bf16.xpose.msra.mxu0 0
        %2575 = vmatprep.mubr.bf16.mxu0 0
        %2576 = vmatmul.mubr.bf16.gmra.mrb[0].mxu0 %v2538
        %v2577 = vpop.f32.mrb[0].mxu0
        %v2578 = vadd.f32 %v2396, %v2577
        %v2579 = vpop.f32.mrb[0].mxu0
        %v2580 = vpop.f32.mrb[0].mxu0
        %v2581 = vpop.f32.mrb[0].mxu0
        %2582 = vdwg.mxu0
        %vm2583 = vcmask 64512
        %v2584 = vsel %vm2583, %v2440, -inf
        %2585 = vmax.xlane.f32.xlu0 %v2584
        %v2586 = vpop.xlane.xlu0 %2585
        %v2587 = vsel %vm2583, %v2486, -inf
        %2588 = vmax.xlane.f32.xlu0 %v2587
        %v2589 = vpop.xlane.xlu0 %2588
        %v2590 = vsel %vm2583, %v2532, -inf
        %2591 = vmax.xlane.f32.xlu0 %v2590
        %v2592 = vpop.xlane.xlu0 %2591
        %v2593 = vsel %vm2583, %v2578, -inf
        %2594 = vmax.xlane.f32.xlu0 %v2593
        %v2595 = vpop.xlane.xlu0 %2594
        %v2596 = vsub.f32 %v2440, %v2586
        %v2597 = vsub.f32 %v2486, %v2589
        %v2598 = vsub.f32 %v2532, %v2592
        %v2599 = vsub.f32 %v2578, %v2595
        %v2600 = vmul.f32 %v2596, 1.442695
        %v2601 = vpow.pop %v2600
        %v2602 = vmul.f32 %v2597, 1.442695
        %v2603 = vpow.pop %v2602
        %v2604 = vmul.f32 %v2598, 1.442695
        %v2605 = vpow.pop %v2604
        %v2606 = vmul.f32 %v2599, 1.442695
        %v2607 = vpow.pop %v2606
        %v2608 = vsel %vm2583, %v2601, 0.0
        %2609 = vadd.xlane.f32.xlu0 %v2608
        %v2610 = vpop.xlane.xlu0 %2609
        %v2611 = vsel %vm2583, %v2603, 0.0
        %2612 = vadd.xlane.f32.xlu0 %v2611
        %v2613 = vpop.xlane.xlu0 %2612
        %v2614 = vsel %vm2583, %v2605, 0.0
        %2615 = vadd.xlane.f32.xlu0 %v2614
        %v2616 = vpop.xlane.xlu0 %2615
        %v2617 = vsel %vm2583, %v2607, 0.0
        %2618 = vadd.xlane.f32.xlu0 %v2617
        %v2619 = vpop.xlane.xlu0 %2618
        %v2620 = vpack.c.bf16 %v2601, %v2601
        %v2621 = vpack.c.bf16 %v2603, %v2603
        %v2622 = vpack.c.bf16 %v2605, %v2605
        %v2623 = vpack.c.bf16 %v2607, %v2607
        %v2624 = vpack.c.bf16 %v2114, %v2114
        %v2625 = vpack.c.bf16 %v2202, %v2202
        %v2626 = vpack.c.bf16 %v2290, %v2290
        %v2627 = vpack.c.bf16 %v2378, %v2378
        %v2629 = vsel %vm2583, %v2620, 0
        %vm2631 = vcmask 1043456
        %v2633 = vsel %vm2631, %v2624, 0
        %2635 = vmatprep.subr.bf16.mxu0 0
        %2636 = vmatpush1.bf16.msra.mxu0 %v2633
        %2637 = vmatprep.subr.bf16.mxu0 0
        %2638 = vmatpush1.bf16.msra.mxu0 0
        %2639 = vmatprep.subr.bf16.mxu0 0
        %2640 = vmatpush1.bf16.msra.mxu0 0
        %2641 = vmatprep.subr.bf16.mxu0 0
        %2642 = vmatpush1.bf16.msra.mxu0 0
        %2643 = vmatprep.subr.bf16.mxu0 0
        %2644 = vmatpush1.bf16.msra.mxu0 0
        %2645 = vmatprep.subr.bf16.mxu0 0
        %2646 = vmatpush1.bf16.msra.mxu0 0
        %2647 = vmatprep.subr.bf16.mxu0 0
        %2648 = vmatpush1.bf16.msra.mxu0 0
        %2649 = vmatprep.subr.bf16.mxu0 0
        %2650 = vmatpush1.bf16.msra.mxu0 0
        %2651 = vmatprep.subr.bf16.mxu0 0
        %2652 = vmatpush1.bf16.msra.mxu0 0
        %2653 = vmatprep.subr.bf16.mxu0 0
        %2654 = vmatpush1.bf16.msra.mxu0 0
        %2655 = vmatprep.subr.bf16.mxu0 0
        %2656 = vmatpush1.bf16.msra.mxu0 0
        %2657 = vmatprep.subr.bf16.mxu0 0
        %2658 = vmatpush1.bf16.msra.mxu0 0
        %2659 = vmatprep.subr.bf16.mxu0 0
        %2660 = vmatpush1.bf16.msra.mxu0 0
        %2661 = vmatprep.subr.bf16.mxu0 0
        %2662 = vmatpush1.bf16.msra.mxu0 0
        %2663 = vmatprep.subr.bf16.mxu0 0
        %2664 = vmatpush1.bf16.msra.mxu0 0
        %2665 = vmatprep.subr.bf16.mxu0 0
        %2666 = vmatpush1.bf16.msra.mxu0 0
        %2667 = vmatprep.mubr.bf16.mxu0 0
        %2668 = vmatmul.mubr.bf16.gmra.mrb[0].mxu0 %v2629
        %v2669 = vpop.f32.mrb[0].mxu0
        %v2670 = vadd.f32 0.0, %v2669
        %v2671 = vpop.f32.mrb[0].mxu0
        %v2672 = vpop.f32.mrb[0].mxu0
        %v2673 = vpop.f32.mrb[0].mxu0
        %2674 = vdwg.mxu0
        %v2676 = vsel %vm2583, %v2621, 0
        %v2679 = vsel %vm2631, %v2625, 0
        %2681 = vmatprep.subr.bf16.mxu0 0
        %2682 = vmatpush1.bf16.msra.mxu0 %v2679
        %2683 = vmatprep.subr.bf16.mxu0 0
        %2684 = vmatpush1.bf16.msra.mxu0 0
        %2685 = vmatprep.subr.bf16.mxu0 0
        %2686 = vmatpush1.bf16.msra.mxu0 0
        %2687 = vmatprep.subr.bf16.mxu0 0
        %2688 = vmatpush1.bf16.msra.mxu0 0
        %2689 = vmatprep.subr.bf16.mxu0 0
        %2690 = vmatpush1.bf16.msra.mxu0 0
        %2691 = vmatprep.subr.bf16.mxu0 0
        %2692 = vmatpush1.bf16.msra.mxu0 0
        %2693 = vmatprep.subr.bf16.mxu0 0
        %2694 = vmatpush1.bf16.msra.mxu0 0
        %2695 = vmatprep.subr.bf16.mxu0 0
        %2696 = vmatpush1.bf16.msra.mxu0 0
        %2697 = vmatprep.subr.bf16.mxu0 0
        %2698 = vmatpush1.bf16.msra.mxu0 0
        %2699 = vmatprep.subr.bf16.mxu0 0
        %2700 = vmatpush1.bf16.msra.mxu0 0
        %2701 = vmatprep.subr.bf16.mxu0 0
        %2702 = vmatpush1.bf16.msra.mxu0 0
        %2703 = vmatprep.subr.bf16.mxu0 0
        %2704 = vmatpush1.bf16.msra.mxu0 0
        %2705 = vmatprep.subr.bf16.mxu0 0
        %2706 = vmatpush1.bf16.msra.mxu0 0
        %2707 = vmatprep.subr.bf16.mxu0 0
        %2708 = vmatpush1.bf16.msra.mxu0 0
        %2709 = vmatprep.subr.bf16.mxu0 0
        %2710 = vmatpush1.bf16.msra.mxu0 0
        %2711 = vmatprep.subr.bf16.mxu0 0
        %2712 = vmatpush1.bf16.msra.mxu0 0
        %2713 = vmatprep.mubr.bf16.mxu0 0
        %2714 = vmatmul.mubr.bf16.gmra.mrb[0].mxu0 %v2676
        %v2715 = vpop.f32.mrb[0].mxu0
        %v2716 = vadd.f32 0.0, %v2715
        %v2717 = vpop.f32.mrb[0].mxu0
        %v2718 = vpop.f32.mrb[0].mxu0
        %v2719 = vpop.f32.mrb[0].mxu0
        %2720 = vdwg.mxu0
        %v2722 = vsel %vm2583, %v2622, 0
        %v2725 = vsel %vm2631, %v2626, 0
        %2727 = vmatprep.subr.bf16.mxu0 0
        %2728 = vmatpush1.bf16.msra.mxu0 %v2725
        %2729 = vmatprep.subr.bf16.mxu0 0
        %2730 = vmatpush1.bf16.msra.mxu0 0
        %2731 = vmatprep.subr.bf16.mxu0 0
        %2732 = vmatpush1.bf16.msra.mxu0 0
        %2733 = vmatprep.subr.bf16.mxu0 0
        %2734 = vmatpush1.bf16.msra.mxu0 0
        %2735 = vmatprep.subr.bf16.mxu0 0
        %2736 = vmatpush1.bf16.msra.mxu0 0
        %2737 = vmatprep.subr.bf16.mxu0 0
        %2738 = vmatpush1.bf16.msra.mxu0 0
        %2739 = vmatprep.subr.bf16.mxu0 0
        %2740 = vmatpush1.bf16.msra.mxu0 0
        %2741 = vmatprep.subr.bf16.mxu0 0
        %2742 = vmatpush1.bf16.msra.mxu0 0
        %2743 = vmatprep.subr.bf16.mxu0 0
        %2744 = vmatpush1.bf16.msra.mxu0 0
        %2745 = vmatprep.subr.bf16.mxu0 0
        %2746 = vmatpush1.bf16.msra.mxu0 0
        %2747 = vmatprep.subr.bf16.mxu0 0
        %2748 = vmatpush1.bf16.msra.mxu0 0
        %2749 = vmatprep.subr.bf16.mxu0 0
        %2750 = vmatpush1.bf16.msra.mxu0 0
        %2751 = vmatprep.subr.bf16.mxu0 0
        %2752 = vmatpush1.bf16.msra.mxu0 0
        %2753 = vmatprep.subr.bf16.mxu0 0
        %2754 = vmatpush1.bf16.msra.mxu0 0
        %2755 = vmatprep.subr.bf16.mxu0 0
        %2756 = vmatpush1.bf16.msra.mxu0 0
        %2757 = vmatprep.subr.bf16.mxu0 0
        %2758 = vmatpush1.bf16.msra.mxu0 0
        %2759 = vmatprep.mubr.bf16.mxu0 0
        %2760 = vmatmul.mubr.bf16.gmra.mrb[0].mxu0 %v2722
        %v2761 = vpop.f32.mrb[0].mxu0
        %v2762 = vadd.f32 0.0, %v2761
        %v2763 = vpop.f32.mrb[0].mxu0
        %v2764 = vpop.f32.mrb[0].mxu0
        %v2765 = vpop.f32.mrb[0].mxu0
        %2766 = vdwg.mxu0
        %v2768 = vsel %vm2583, %v2623, 0
        %v2771 = vsel %vm2631, %v2627, 0
        %2773 = vmatprep.subr.bf16.mxu0 0
        %2774 = vmatpush1.bf16.msra.mxu0 %v2771
        %2775 = vmatprep.subr.bf16.mxu0 0
        %2776 = vmatpush1.bf16.msra.mxu0 0
        %2777 = vmatprep.subr.bf16.mxu0 0
        %2778 = vmatpush1.bf16.msra.mxu0 0
        %2779 = vmatprep.subr.bf16.mxu0 0
        %2780 = vmatpush1.bf16.msra.mxu0 0
        %2781 = vmatprep.subr.bf16.mxu0 0
        %2782 = vmatpush1.bf16.msra.mxu0 0
        %2783 = vmatprep.subr.bf16.mxu0 0
        %2784 = vmatpush1.bf16.msra.mxu0 0
        %2785 = vmatprep.subr.bf16.mxu0 0
        %2786 = vmatpush1.bf16.msra.mxu0 0
        %2787 = vmatprep.subr.bf16.mxu0 0
        %2788 = vmatpush1.bf16.msra.mxu0 0
        %2789 = vmatprep.subr.bf16.mxu0 0
        %2790 = vmatpush1.bf16.msra.mxu0 0
        %2791 = vmatprep.subr.bf16.mxu0 0
        %2792 = vmatpush1.bf16.msra.mxu0 0
        %2793 = vmatprep.subr.bf16.mxu0 0
        %2794 = vmatpush1.bf16.msra.mxu0 0
        %2795 = vmatprep.subr.bf16.mxu0 0
        %2796 = vmatpush1.bf16.msra.mxu0 0
        %2797 = vmatprep.subr.bf16.mxu0 0
        %2798 = vmatpush1.bf16.msra.mxu0 0
        %2799 = vmatprep.subr.bf16.mxu0 0
        %2800 = vmatpush1.bf16.msra.mxu0 0
        %2801 = vmatprep.subr.bf16.mxu0 0
        %2802 = vmatpush1.bf16.msra.mxu0 0
        %2803 = vmatprep.subr.bf16.mxu0 0
        %2804 = vmatpush1.bf16.msra.mxu0 0
        %2805 = vmatprep.mubr.bf16.mxu0 0
        %2806 = vmatmul.mubr.bf16.gmra.mrb[0].mxu0 %v2768
        %v2807 = vpop.f32.mrb[0].mxu0
        %v2808 = vadd.f32 0.0, %v2807
        %v2809 = vpop.f32.mrb[0].mxu0
        %v2810 = vpop.f32.mrb[0].mxu0
        %v2811 = vpop.f32.mrb[0].mxu0
        %2812 = vdwg.mxu0
        %v2813 = vrcp.pop %v2610
        %v2814 = vrcp.pop %v2613
        %v2815 = vrcp.pop %v2616
        %v2816 = vrcp.pop %v2619
        %v2817 = vmul.f32 %v2670, %v2813
        %v2818 = vmul.f32 %v2716, %v2814
        %v2819 = vmul.f32 %v2762, %v2815
        %v2820 = vmul.f32 %v2808, %v2816
        %v2821 = vpack.c.bf16 %v2817, %v2817
        %v2822 = vpack.c.bf16 %v2818, %v2818
        %v2823 = vpack.c.bf16 %v2819, %v2819
        %v2824 = vpack.c.bf16 %v2820, %v2820
        %v2825 = vld [vmem:[%s832] sm:$0xf]
        %v2826 = vld [vmem:[%s832 + $0x4] sm:$0xf]
        %v2827 = vld [vmem:[%s832 + $0x8] sm:$0xf]
        %v2828 = vld [vmem:[%s832 + $0xc] sm:$0xf]
        %v2829 = vld [vmem:[%s832 + $0x10] sm:$0xf]
        %v2830 = vld [vmem:[%s832 + $0x14] sm:$0xf]
        %v2831 = vld [vmem:[%s832 + $0x18] sm:$0xf]
        %v2832 = vld [vmem:[%s832 + $0x1c] sm:$0xf]
        %v2833 = vld [vmem:[%s832 + $0x20] sm:$0xf]
        %v2834 = vld [vmem:[%s832 + $0x24] sm:$0xf]
        %v2835 = vld [vmem:[%s832 + $0x28] sm:$0xf]
        %v2836 = vld [vmem:[%s832 + $0x2c] sm:$0xf]
        %v2837 = vld [vmem:[%s832 + $0x30] sm:$0xf]
        %v2838 = vld [vmem:[%s832 + $0x34] sm:$0xf]
        %v2839 = vld [vmem:[%s832 + $0x38] sm:$0xf]
        %v2840 = vld [vmem:[%s832 + $0x3c] sm:$0xf]
        %v2845 = vunpack.c.l.b16 %v2825
        %v2846 = vunpack.c.l.b16 %v2826
        %v2847 = vunpack.c.l.b16 %v2827
        %v2848 = vunpack.c.l.b16 %v2828
        %v2849 = vpack.c.b16 %v2846, %v2845
        %v2850 = vpack.c.b16 %v2848, %v2847
        %v2854 = vsel %vm2398, %v2821, 0
        %2856 = vmatprep.subr.bf16.mxu0 0
        %2857 = vmatpush1.bf16.msra.mxu0 %v2849
        %2858 = vmatprep.subr.bf16.mxu0 0
        %2859 = vmatpush1.bf16.msra.mxu0 %v2850
        %2860 = vmatprep.subr.bf16.mxu0 0
        %2861 = vmatpush1.bf16.msra.mxu0 0
        %2862 = vmatprep.subr.bf16.mxu0 0
        %2863 = vmatpush1.bf16.msra.mxu0 0
        %2864 = vmatprep.subr.bf16.mxu0 0
        %2865 = vmatpush1.bf16.msra.mxu0 0
        %2866 = vmatprep.subr.bf16.mxu0 0
        %2867 = vmatpush1.bf16.msra.mxu0 0
        %2868 = vmatprep.subr.bf16.mxu0 0
        %2869 = vmatpush1.bf16.msra.mxu0 0
        %2870 = vmatprep.subr.bf16.mxu0 0
        %2871 = vmatpush1.bf16.msra.mxu0 0
        %2872 = vmatprep.subr.bf16.mxu0 0
        %2873 = vmatpush1.bf16.msra.mxu0 0
        %2874 = vmatprep.subr.bf16.mxu0 0
        %2875 = vmatpush1.bf16.msra.mxu0 0
        %2876 = vmatprep.subr.bf16.mxu0 0
        %2877 = vmatpush1.bf16.msra.mxu0 0
        %2878 = vmatprep.subr.bf16.mxu0 0
        %2879 = vmatpush1.bf16.msra.mxu0 0
        %2880 = vmatprep.subr.bf16.mxu0 0
        %2881 = vmatpush1.bf16.msra.mxu0 0
        %2882 = vmatprep.subr.bf16.mxu0 0
        %2883 = vmatpush1.bf16.msra.mxu0 0
        %2884 = vmatprep.subr.bf16.mxu0 0
        %2885 = vmatpush1.bf16.msra.mxu0 0
        %2886 = vmatprep.subr.bf16.mxu0 0
        %2887 = vmatpush1.bf16.msra.mxu0 0
        %2888 = vmatprep.mubr.bf16.mxu0 0
        %2889 = vmatmul.mubr.bf16.gmra.mrb[0].mxu0 %v2854
        %v2890 = vpop.f32.mrb[0].mxu0
        %v2891 = vadd.f32 0.0, %v2890
        %v2892 = vpop.f32.mrb[0].mxu0
        %v2893 = vpop.f32.mrb[0].mxu0
        %v2894 = vpop.f32.mrb[0].mxu0
        %2895 = vdwg.mxu0
        %v2900 = vunpack.c.l.b16 %v2829
        %v2901 = vunpack.c.l.b16 %v2830
        %v2902 = vunpack.c.l.b16 %v2831
        %v2903 = vunpack.c.l.b16 %v2832
        %v2904 = vpack.c.b16 %v2901, %v2900
        %v2905 = vpack.c.b16 %v2903, %v2902
        %v2909 = vsel %vm2398, %v2822, 0
        %2911 = vmatprep.subr.bf16.mxu0 0
        %2912 = vmatpush1.bf16.msra.mxu0 %v2904
        %2913 = vmatprep.subr.bf16.mxu0 0
        %2914 = vmatpush1.bf16.msra.mxu0 %v2905
        %2915 = vmatprep.subr.bf16.mxu0 0
        %2916 = vmatpush1.bf16.msra.mxu0 0
        %2917 = vmatprep.subr.bf16.mxu0 0
        %2918 = vmatpush1.bf16.msra.mxu0 0
        %2919 = vmatprep.subr.bf16.mxu0 0
        %2920 = vmatpush1.bf16.msra.mxu0 0
        %2921 = vmatprep.subr.bf16.mxu0 0
        %2922 = vmatpush1.bf16.msra.mxu0 0
        %2923 = vmatprep.subr.bf16.mxu0 0
        %2924 = vmatpush1.bf16.msra.mxu0 0
        %2925 = vmatprep.subr.bf16.mxu0 0
        %2926 = vmatpush1.bf16.msra.mxu0 0
        %2927 = vmatprep.subr.bf16.mxu0 0
        %2928 = vmatpush1.bf16.msra.mxu0 0
        %2929 = vmatprep.subr.bf16.mxu0 0
        %2930 = vmatpush1.bf16.msra.mxu0 0
        %2931 = vmatprep.subr.bf16.mxu0 0
        %2932 = vmatpush1.bf16.msra.mxu0 0
        %2933 = vmatprep.subr.bf16.mxu0 0
        %2934 = vmatpush1.bf16.msra.mxu0 0
        %2935 = vmatprep.subr.bf16.mxu0 0
        %2936 = vmatpush1.bf16.msra.mxu0 0
        %2937 = vmatprep.subr.bf16.mxu0 0
        %2938 = vmatpush1.bf16.msra.mxu0 0
        %2939 = vmatprep.subr.bf16.mxu0 0
        %2940 = vmatpush1.bf16.msra.mxu0 0
        %2941 = vmatprep.subr.bf16.mxu0 0
        %2942 = vmatpush1.bf16.msra.mxu0 0
        %2943 = vmatprep.mubr.bf16.mxu0 0
        %2944 = vmatmul.mubr.bf16.gmra.mrb[0].mxu0 %v2909
        %v2945 = vpop.f32.mrb[0].mxu0
        %v2946 = vadd.f32 0.0, %v2945
        %v2947 = vpop.f32.mrb[0].mxu0
        %v2948 = vpop.f32.mrb[0].mxu0
        %v2949 = vpop.f32.mrb[0].mxu0
        %2950 = vdwg.mxu0
        %v2955 = vunpack.c.l.b16 %v2833
        %v2956 = vunpack.c.l.b16 %v2834
        %v2957 = vunpack.c.l.b16 %v2835
        %v2958 = vunpack.c.l.b16 %v2836
        %v2959 = vpack.c.b16 %v2956, %v2955
        %v2960 = vpack.c.b16 %v2958, %v2957
        %v2964 = vsel %vm2398, %v2823, 0
        %2966 = vmatprep.subr.bf16.mxu0 0
        %2967 = vmatpush1.bf16.msra.mxu0 %v2959
        %2968 = vmatprep.subr.bf16.mxu0 0
        %2969 = vmatpush1.bf16.msra.mxu0 %v2960
        %2970 = vmatprep.subr.bf16.mxu0 0
        %2971 = vmatpush1.bf16.msra.mxu0 0
        %2972 = vmatprep.subr.bf16.mxu0 0
        %2973 = vmatpush1.bf16.msra.mxu0 0
        %2974 = vmatprep.subr.bf16.mxu0 0
        %2975 = vmatpush1.bf16.msra.mxu0 0
        %2976 = vmatprep.subr.bf16.mxu0 0
        %2977 = vmatpush1.bf16.msra.mxu0 0
        %2978 = vmatprep.subr.bf16.mxu0 0
        %2979 = vmatpush1.bf16.msra.mxu0 0
        %2980 = vmatprep.subr.bf16.mxu0 0
        %2981 = vmatpush1.bf16.msra.mxu0 0
        %2982 = vmatprep.subr.bf16.mxu0 0
        %2983 = vmatpush1.bf16.msra.mxu0 0
        %2984 = vmatprep.subr.bf16.mxu0 0
        %2985 = vmatpush1.bf16.msra.mxu0 0
        %2986 = vmatprep.subr.bf16.mxu0 0
        %2987 = vmatpush1.bf16.msra.mxu0 0
        %2988 = vmatprep.subr.bf16.mxu0 0
        %2989 = vmatpush1.bf16.msra.mxu0 0
        %2990 = vmatprep.subr.bf16.mxu0 0
        %2991 = vmatpush1.bf16.msra.mxu0 0
        %2992 = vmatprep.subr.bf16.mxu0 0
        %2993 = vmatpush1.bf16.msra.mxu0 0
        %2994 = vmatprep.subr.bf16.mxu0 0
        %2995 = vmatpush1.bf16.msra.mxu0 0
        %2996 = vmatprep.subr.bf16.mxu0 0
        %2997 = vmatpush1.bf16.msra.mxu0 0
        %2998 = vmatprep.mubr.bf16.mxu0 0
        %2999 = vmatmul.mubr.bf16.gmra.mrb[0].mxu0 %v2964
        %v3000 = vpop.f32.mrb[0].mxu0
        %v3001 = vadd.f32 0.0, %v3000
        %v3002 = vpop.f32.mrb[0].mxu0
        %v3003 = vpop.f32.mrb[0].mxu0
        %v3004 = vpop.f32.mrb[0].mxu0
        %3005 = vdwg.mxu0
        %v3010 = vunpack.c.l.b16 %v2837
        %v3011 = vunpack.c.l.b16 %v2838
        %v3012 = vunpack.c.l.b16 %v2839
        %v3013 = vunpack.c.l.b16 %v2840
        %v3014 = vpack.c.b16 %v3011, %v3010
        %v3015 = vpack.c.b16 %v3013, %v3012
        %v3019 = vsel %vm2398, %v2824, 0
        %3021 = vmatprep.subr.bf16.mxu0 0
        %3022 = vmatpush1.bf16.msra.mxu0 %v3014
        %3023 = vmatprep.subr.bf16.mxu0 0
        %3024 = vmatpush1.bf16.msra.mxu0 %v3015
        %3025 = vmatprep.subr.bf16.mxu0 0
        %3026 = vmatpush1.bf16.msra.mxu0 0
        %3027 = vmatprep.subr.bf16.mxu0 0
        %3028 = vmatpush1.bf16.msra.mxu0 0
        %3029 = vmatprep.subr.bf16.mxu0 0
        %3030 = vmatpush1.bf16.msra.mxu0 0
        %3031 = vmatprep.subr.bf16.mxu0 0
        %3032 = vmatpush1.bf16.msra.mxu0 0
        %3033 = vmatprep.subr.bf16.mxu0 0
        %3034 = vmatpush1.bf16.msra.mxu0 0
        %3035 = vmatprep.subr.bf16.mxu0 0
        %3036 = vmatpush1.bf16.msra.mxu0 0
        %3037 = vmatprep.subr.bf16.mxu0 0
        %3038 = vmatpush1.bf16.msra.mxu0 0
        %3039 = vmatprep.subr.bf16.mxu0 0
        %3040 = vmatpush1.bf16.msra.mxu0 0
        %3041 = vmatprep.subr.bf16.mxu0 0
        %3042 = vmatpush1.bf16.msra.mxu0 0
        %3043 = vmatprep.subr.bf16.mxu0 0
        %3044 = vmatpush1.bf16.msra.mxu0 0
        %3045 = vmatprep.subr.bf16.mxu0 0
        %3046 = vmatpush1.bf16.msra.mxu0 0
        %3047 = vmatprep.subr.bf16.mxu0 0
        %3048 = vmatpush1.bf16.msra.mxu0 0
        %3049 = vmatprep.subr.bf16.mxu0 0
        %3050 = vmatpush1.bf16.msra.mxu0 0
        %3051 = vmatprep.subr.bf16.mxu0 0
        %3052 = vmatpush1.bf16.msra.mxu0 0
        %3053 = vmatprep.mubr.bf16.mxu0 0
        %3054 = vmatmul.mubr.bf16.gmra.mrb[0].mxu0 %v3019
        %v3055 = vpop.f32.mrb[0].mxu0
        %v3056 = vadd.f32 0.0, %v3055
        %v3057 = vpop.f32.mrb[0].mxu0
        %v3058 = vpop.f32.mrb[0].mxu0
        %v3059 = vpop.f32.mrb[0].mxu0
        %3060 = vdwg.mxu0
        %v3061 = vadd.f32 %v2891, %v2946
        %v3062 = vadd.f32 %v3061, %v3001
        %v3063 = vadd.f32 %v3062, %v3056
        %v3064 = vld [vmem:[%s840] sm:$0x1]
        %v3066 = vlaneseq
        %v3067 = vshrl.u32 %v3066, 7
        %v3068 = vsub.s32 0, %v3067
        %v3069 = vrot.slane %v3064, %v3068
        %v3071 = vadd.f32 %v3063, %v3069
        %v3072 = vadd.f32 %v1049, %v3071
        %v3073 = vld [vmem:[%s848] sm:$0x1]
        %v3074 = vld [vmem:[%s856] sm:$0x1]
        %3075 = vadd.xlane.f32.xlu0 %v3072
        %v3076 = vpop.xlane.xlu0 %3075
        %v3077 = vrcp.pop 128.0
        %v3078 = vmul.f32 %v3076, %v3077
        %v3079 = vsub.f32 %v3072, %v3078
        %v3080 = vmul.f32 %v3079, %v3079
        %3081 = vadd.xlane.f32.xlu0 %v3080
        %v3082 = vpop.xlane.xlu0 %3081
        %v3083 = vmul.f32 %v3082, %v3077
        %v3084 = vadd.f32 %v3083, 1e-12
        %v3085 = vrsqrt.pop %v3084
        %v3086 = vmul.f32 %v3079, %v3085
        %v3088 = vlaneseq
        %v3089 = vshrl.u32 %v3088, 7
        %v3090 = vsub.s32 0, %v3089
        %v3091 = vrot.slane %v3073, %v3090
        %v3093 = vmul.f32 %v3086, %v3091
        %v3095 = vlaneseq
        %v3096 = vshrl.u32 %v3095, 7
        %v3097 = vsub.s32 0, %v3096
        %v3098 = vrot.slane %v3074, %v3097
        %v3100 = vadd.f32 %v3093, %v3098
        %v3101 = vpack.c.bf16 %v3100, %v3100
        %v3102 = vld [vmem:[%s865] sm:$0xff]
        %v3103 = vld [vmem:[%s865 + $0x8] sm:$0xff]
        %v3104 = vld [vmem:[%s865 + $0x10] sm:$0xff]
        %v3105 = vld [vmem:[%s865 + $0x18] sm:$0xff]
        %v3106 = vld [vmem:[%s865 + $0x20] sm:$0xff]
        %v3107 = vld [vmem:[%s865 + $0x28] sm:$0xff]
        %v3108 = vld [vmem:[%s865 + $0x30] sm:$0xff]
        %v3109 = vld [vmem:[%s865 + $0x38] sm:$0xff]
        %v3110 = vld [vmem:[%s865 + $0x40] sm:$0xff]
        %v3111 = vld [vmem:[%s865 + $0x48] sm:$0xff]
        %v3112 = vld [vmem:[%s865 + $0x50] sm:$0xff]
        %v3113 = vld [vmem:[%s865 + $0x58] sm:$0xff]
        %v3114 = vld [vmem:[%s865 + $0x60] sm:$0xff]
        %v3115 = vld [vmem:[%s865 + $0x68] sm:$0xff]
        %v3116 = vld [vmem:[%s865 + $0x70] sm:$0xff]
        %v3117 = vld [vmem:[%s865 + $0x78] sm:$0xff]
        %v3118 = vld [vmem:[%s865 + $0x80] sm:$0xff]
        %v3119 = vld [vmem:[%s865 + $0x88] sm:$0xff]
        %v3120 = vld [vmem:[%s865 + $0x90] sm:$0xff]
        %v3121 = vld [vmem:[%s865 + $0x98] sm:$0xff]
        %v3122 = vld [vmem:[%s865 + $0xa0] sm:$0xff]
        %v3123 = vld [vmem:[%s865 + $0xa8] sm:$0xff]
        %v3124 = vld [vmem:[%s865 + $0xb0] sm:$0xff]
        %v3125 = vld [vmem:[%s865 + $0xb8] sm:$0xff]
        %v3126 = vld [vmem:[%s865 + $0xc0] sm:$0xff]
        %v3127 = vld [vmem:[%s865 + $0xc8] sm:$0xff]
        %v3128 = vld [vmem:[%s865 + $0xd0] sm:$0xff]
        %v3129 = vld [vmem:[%s865 + $0xd8] sm:$0xff]
        %v3130 = vld [vmem:[%s865 + $0xe0] sm:$0xff]
        %v3131 = vld [vmem:[%s865 + $0xe8] sm:$0xff]
        %v3132 = vld [vmem:[%s865 + $0xf0] sm:$0xff]
        %v3133 = vld [vmem:[%s865 + $0xf8] sm:$0xff]
        %v3134 = vld [vmem:[%s874] sm:$0xf]
        %v3136 = vlaneseq
        %v3137 = vshrl.u32 %v3136, 7
        %v3138 = vsub.s32 0, %v3137
        %v3139 = vrot.slane %v3134, %v3138
        %v3140 = vlaneseq
        %v3141 = vshrl.u32 %v3140, 7
        %v3142 = vsub.s32 1, %v3141
        %v3143 = vrot.slane %v3134, %v3142
        %v3144 = vlaneseq
        %v3145 = vshrl.u32 %v3144, 7
        %v3146 = vsub.s32 2, %v3145
        %v3147 = vrot.slane %v3134, %v3146
        %v3148 = vlaneseq
        %v3149 = vshrl.u32 %v3148, 7
        %v3150 = vsub.s32 3, %v3149
        %v3151 = vrot.slane %v3134, %v3150
        %v3188 = vunpack.c.l.b16 %v3102
        %v3189 = vunpack.c.h.b16 %v3102
        %v3190 = vunpack.c.l.b16 %v3103
        %v3191 = vunpack.c.h.b16 %v3103
        %v3192 = vunpack.c.l.b16 %v3104
        %v3193 = vunpack.c.h.b16 %v3104
        %v3194 = vunpack.c.l.b16 %v3105
        %v3195 = vunpack.c.h.b16 %v3105
        %v3196 = vunpack.c.l.b16 %v3106
        %v3197 = vunpack.c.h.b16 %v3106
        %v3198 = vunpack.c.l.b16 %v3107
        %v3199 = vunpack.c.h.b16 %v3107
        %v3200 = vunpack.c.l.b16 %v3108
        %v3201 = vunpack.c.h.b16 %v3108
        %v3202 = vunpack.c.l.b16 %v3109
        %v3203 = vunpack.c.h.b16 %v3109
        %v3204 = vunpack.c.l.b16 %v3110
        %v3205 = vunpack.c.h.b16 %v3110
        %v3206 = vunpack.c.l.b16 %v3111
        %v3207 = vunpack.c.h.b16 %v3111
        %v3208 = vunpack.c.l.b16 %v3112
        %v3209 = vunpack.c.h.b16 %v3112
        %v3210 = vunpack.c.l.b16 %v3113
        %v3211 = vunpack.c.h.b16 %v3113
        %v3212 = vunpack.c.l.b16 %v3114
        %v3213 = vunpack.c.h.b16 %v3114
        %v3214 = vunpack.c.l.b16 %v3115
        %v3215 = vunpack.c.h.b16 %v3115
        %v3216 = vunpack.c.l.b16 %v3116
        %v3217 = vunpack.c.h.b16 %v3116
        %v3218 = vunpack.c.l.b16 %v3117
        %v3219 = vunpack.c.h.b16 %v3117
        %v3220 = vunpack.c.l.b16 %v3118
        %v3221 = vunpack.c.h.b16 %v3118
        %v3222 = vunpack.c.l.b16 %v3119
        %v3223 = vunpack.c.h.b16 %v3119
        %v3224 = vunpack.c.l.b16 %v3120
        %v3225 = vunpack.c.h.b16 %v3120
        %v3226 = vunpack.c.l.b16 %v3121
        %v3227 = vunpack.c.h.b16 %v3121
        %v3228 = vunpack.c.l.b16 %v3122
        %v3229 = vunpack.c.h.b16 %v3122
        %v3230 = vunpack.c.l.b16 %v3123
        %v3231 = vunpack.c.h.b16 %v3123
        %v3232 = vunpack.c.l.b16 %v3124
        %v3233 = vunpack.c.h.b16 %v3124
        %v3234 = vunpack.c.l.b16 %v3125
        %v3235 = vunpack.c.h.b16 %v3125
        %v3236 = vunpack.c.l.b16 %v3126
        %v3237 = vunpack.c.h.b16 %v3126
        %v3238 = vunpack.c.l.b16 %v3127
        %v3239 = vunpack.c.h.b16 %v3127
        %v3240 = vunpack.c.l.b16 %v3128
        %v3241 = vunpack.c.h.b16 %v3128
        %v3242 = vunpack.c.l.b16 %v3129
        %v3243 = vunpack.c.h.b16 %v3129
        %v3244 = vunpack.c.l.b16 %v3130
        %v3245 = vunpack.c.h.b16 %v3130
        %v3246 = vunpack.c.l.b16 %v3131
        %v3247 = vunpack.c.h.b16 %v3131
        %v3248 = vunpack.c.l.b16 %v3132
        %v3249 = vunpack.c.h.b16 %v3132
        %v3250 = vunpack.c.l.b16 %v3133
        %v3251 = vunpack.c.h.b16 %v3133
        %v3252 = vpack.c.b16 %v3192, %v3188
        %v3253 = vpack.c.b16 %v3193, %v3189
        %v3254 = vpack.c.b16 %v3194, %v3190
        %v3255 = vpack.c.b16 %v3195, %v3191
        %v3256 = vpack.c.b16 %v3200, %v3196
        %v3257 = vpack.c.b16 %v3201, %v3197
        %v3258 = vpack.c.b16 %v3202, %v3198
        %v3259 = vpack.c.b16 %v3203, %v3199
        %v3260 = vpack.c.b16 %v3208, %v3204
        %v3261 = vpack.c.b16 %v3209, %v3205
        %v3262 = vpack.c.b16 %v3210, %v3206
        %v3263 = vpack.c.b16 %v3211, %v3207
        %v3264 = vpack.c.b16 %v3216, %v3212
        %v3265 = vpack.c.b16 %v3217, %v3213
        %v3266 = vpack.c.b16 %v3218, %v3214
        %v3267 = vpack.c.b16 %v3219, %v3215
        %v3268 = vpack.c.b16 %v3224, %v3220
        %v3269 = vpack.c.b16 %v3225, %v3221
        %v3270 = vpack.c.b16 %v3226, %v3222
        %v3271 = vpack.c.b16 %v3227, %v3223
        %v3272 = vpack.c.b16 %v3232, %v3228
        %v3273 = vpack.c.b16 %v3233, %v3229
        %v3274 = vpack.c.b16 %v3234, %v3230
        %v3275 = vpack.c.b16 %v3235, %v3231
        %v3276 = vpack.c.b16 %v3240, %v3236
        %v3277 = vpack.c.b16 %v3241, %v3237
        %v3278 = vpack.c.b16 %v3242, %v3238
        %v3279 = vpack.c.b16 %v3243, %v3239
        %v3280 = vpack.c.b16 %v3248, %v3244
        %v3281 = vpack.c.b16 %v3249, %v3245
        %v3282 = vpack.c.b16 %v3250, %v3246
        %v3283 = vpack.c.b16 %v3251, %v3247
        %3316 = vmatprep.subr.bf16.mxu0 %v3253
        %3317 = vmatpush1.bf16.msra.mxu0 %v3252
        %3318 = vmatprep.subr.bf16.mxu0 %v3257
        %3319 = vmatpush1.bf16.msra.mxu0 %v3256
        %3320 = vmatprep.subr.bf16.mxu0 %v3261
        %3321 = vmatpush1.bf16.msra.mxu0 %v3260
        %3322 = vmatprep.subr.bf16.mxu0 %v3265
        %3323 = vmatpush1.bf16.msra.mxu0 %v3264
        %3324 = vmatprep.subr.bf16.mxu0 %v3269
        %3325 = vmatpush1.bf16.msra.mxu0 %v3268
        %3326 = vmatprep.subr.bf16.mxu0 %v3273
        %3327 = vmatpush1.bf16.msra.mxu0 %v3272
        %3328 = vmatprep.subr.bf16.mxu0 %v3277
        %3329 = vmatpush1.bf16.msra.mxu0 %v3276
        %3330 = vmatprep.subr.bf16.mxu0 %v3281
        %3331 = vmatpush1.bf16.msra.mxu0 %v3280
        %3332 = vmatprep.subr.bf16.mxu0 0
        %3333 = vmatpush1.bf16.msra.mxu0 0
        %3334 = vmatprep.subr.bf16.mxu0 0
        %3335 = vmatpush1.bf16.msra.mxu0 0
        %3336 = vmatprep.subr.bf16.mxu0 0
        %3337 = vmatpush1.bf16.msra.mxu0 0
        %3338 = vmatprep.subr.bf16.mxu0 0
        %3339 = vmatpush1.bf16.msra.mxu0 0
        %3340 = vmatprep.subr.bf16.mxu0 0
        %3341 = vmatpush1.bf16.msra.mxu0 0
        %3342 = vmatprep.subr.bf16.mxu0 0
        %3343 = vmatpush1.bf16.msra.mxu0 0
        %3344 = vmatprep.subr.bf16.mxu0 0
        %3345 = vmatpush1.bf16.msra.mxu0 0
        %3346 = vmatprep.subr.bf16.mxu0 0
        %3347 = vmatpush1.bf16.msra.mxu0 0
        %3348 = vmatprep.mubr.bf16.mxu0 0
        %3349 = vmatmul.mubr.bf16.gmra.mrb[0].mxu0 %v3101
        %v3350 = vpop.f32.mrb[0].mxu0
        %v3351 = vadd.f32 %v3139, %v3350
        %v3352 = vpop.f32.mrb[0].mxu0
        %v3353 = vadd.f32 %v3143, %v3352
        %v3354 = vpop.f32.mrb[0].mxu0
        %v3355 = vpop.f32.mrb[0].mxu0
        %3356 = vdwg.mxu0
        %3357 = vmatprep.subr.bf16.mxu0 %v3255
        %3358 = vmatpush1.bf16.msra.mxu0 %v3254
        %3359 = vmatprep.subr.bf16.mxu0 %v3259
        %3360 = vmatpush1.bf16.msra.mxu0 %v3258
        %3361 = vmatprep.subr.bf16.mxu0 %v3263
        %3362 = vmatpush1.bf16.msra.mxu0 %v3262
        %3363 = vmatprep.subr.bf16.mxu0 %v3267
        %3364 = vmatpush1.bf16.msra.mxu0 %v3266
        %3365 = vmatprep.subr.bf16.mxu0 %v3271
        %3366 = vmatpush1.bf16.msra.mxu0 %v3270
        %3367 = vmatprep.subr.bf16.mxu0 %v3275
        %3368 = vmatpush1.bf16.msra.mxu0 %v3274
        %3369 = vmatprep.subr.bf16.mxu0 %v3279
        %3370 = vmatpush1.bf16.msra.mxu0 %v3278
        %3371 = vmatprep.subr.bf16.mxu0 %v3283
        %3372 = vmatpush1.bf16.msra.mxu0 %v3282
        %3373 = vmatprep.subr.bf16.mxu0 0
        %3374 = vmatpush1.bf16.msra.mxu0 0
        %3375 = vmatprep.subr.bf16.mxu0 0
        %3376 = vmatpush1.bf16.msra.mxu0 0
        %3377 = vmatprep.subr.bf16.mxu0 0
        %3378 = vmatpush1.bf16.msra.mxu0 0
        %3379 = vmatprep.subr.bf16.mxu0 0
        %3380 = vmatpush1.bf16.msra.mxu0 0
        %3381 = vmatprep.subr.bf16.mxu0 0
        %3382 = vmatpush1.bf16.msra.mxu0 0
        %3383 = vmatprep.subr.bf16.mxu0 0
        %3384 = vmatpush1.bf16.msra.mxu0 0
        %3385 = vmatprep.subr.bf16.mxu0 0
        %3386 = vmatpush1.bf16.msra.mxu0 0
        %3387 = vmatprep.subr.bf16.mxu0 0
        %3388 = vmatpush1.bf16.msra.mxu0 0
        %3389 = vmatprep.mubr.bf16.mxu0 0
        %3390 = vmatmul.mubr.bf16.gmra.mrb[0].mxu0 %v3101
        %v3391 = vpop.f32.mrb[0].mxu0
        %v3392 = vadd.f32 %v3147, %v3391
        %v3393 = vpop.f32.mrb[0].mxu0
        %v3394 = vadd.f32 %v3151, %v3393
        %v3395 = vpop.f32.mrb[0].mxu0
        %v3396 = vpop.f32.mrb[0].mxu0
        %3397 = vdwg.mxu0
        %v3398 = vmul.f32 %v3351, 0.5
        %v3399 = vmul.f32 %v3353, 0.5
        %v3400 = vmul.f32 %v3392, 0.5
        %v3401 = vmul.f32 %v3394, 0.5
        %v3402 = vmul.f32 %v3351, 0.044715
        %v3403 = vmul.f32 %v3353, 0.044715
        %v3404 = vmul.f32 %v3392, 0.044715
        %v3405 = vmul.f32 %v3394, 0.044715
        %v3406 = vmul.f32 %v3402, %v3351
        %v3407 = vmul.f32 %v3403, %v3353
        %v3408 = vmul.f32 %v3404, %v3392
        %v3409 = vmul.f32 %v3405, %v3394
        %v3410 = vmul.f32 %v3406, %v3351
        %v3411 = vmul.f32 %v3407, %v3353
        %v3412 = vmul.f32 %v3408, %v3392
        %v3413 = vmul.f32 %v3409, %v3394
        %v3414 = vadd.f32 %v3351, %v3410
        %v3415 = vadd.f32 %v3353, %v3411
        %v3416 = vadd.f32 %v3392, %v3412
        %v3417 = vadd.f32 %v3394, %v3413
        %v3418 = vmul.f32 %v3414, 0.7978846
        %v3419 = vmul.f32 %v3415, 0.7978846
        %v3420 = vmul.f32 %v3416, 0.7978846
        %v3421 = vmul.f32 %v3417, 0.7978846
        %v3422 = vtanh.pop %v3418
        %v3423 = vtanh.pop %v3419
        %v3424 = vtanh.pop %v3420
        %v3425 = vtanh.pop %v3421
        %v3426 = vadd.f32 %v3422, 1.0
        %v3427 = vadd.f32 %v3423, 1.0
        %v3428 = vadd.f32 %v3424, 1.0
        %v3429 = vadd.f32 %v3425, 1.0
        %v3430 = vmul.f32 %v3398, %v3426
        %v3431 = vmul.f32 %v3399, %v3427
        %v3432 = vmul.f32 %v3400, %v3428
        %v3433 = vmul.f32 %v3401, %v3429
        %v3434 = vpack.c.bf16 %v3430, %v3430
        %v3435 = vpack.c.bf16 %v3431, %v3431
        %v3436 = vpack.c.bf16 %v3432, %v3432
        %v3437 = vpack.c.bf16 %v3433, %v3433
        %v3438 = vld [vmem:[%s883] sm:$0xf]
        %v3439 = vld [vmem:[%s883 + $0x4] sm:$0xf]
        %v3440 = vld [vmem:[%s883 + $0x8] sm:$0xf]
        %v3441 = vld [vmem:[%s883 + $0xc] sm:$0xf]
        %v3442 = vld [vmem:[%s883 + $0x10] sm:$0xf]
        %v3443 = vld [vmem:[%s883 + $0x14] sm:$0xf]
        %v3444 = vld [vmem:[%s883 + $0x18] sm:$0xf]
        %v3445 = vld [vmem:[%s883 + $0x1c] sm:$0xf]
        %v3446 = vld [vmem:[%s883 + $0x20] sm:$0xf]
        %v3447 = vld [vmem:[%s883 + $0x24] sm:$0xf]
        %v3448 = vld [vmem:[%s883 + $0x28] sm:$0xf]
        %v3449 = vld [vmem:[%s883 + $0x2c] sm:$0xf]
        %v3450 = vld [vmem:[%s883 + $0x30] sm:$0xf]
        %v3451 = vld [vmem:[%s883 + $0x34] sm:$0xf]
        %v3452 = vld [vmem:[%s883 + $0x38] sm:$0xf]
        %v3453 = vld [vmem:[%s883 + $0x3c] sm:$0xf]
        %v3454 = vld [vmem:[%s883 + $0x40] sm:$0xf]
        %v3455 = vld [vmem:[%s883 + $0x44] sm:$0xf]
        %v3456 = vld [vmem:[%s883 + $0x48] sm:$0xf]
        %v3457 = vld [vmem:[%s883 + $0x4c] sm:$0xf]
        %v3458 = vld [vmem:[%s883 + $0x50] sm:$0xf]
        %v3459 = vld [vmem:[%s883 + $0x54] sm:$0xf]
        %v3460 = vld [vmem:[%s883 + $0x58] sm:$0xf]
        %v3461 = vld [vmem:[%s883 + $0x5c] sm:$0xf]
        %v3462 = vld [vmem:[%s883 + $0x60] sm:$0xf]
        %v3463 = vld [vmem:[%s883 + $0x64] sm:$0xf]
        %v3464 = vld [vmem:[%s883 + $0x68] sm:$0xf]
        %v3465 = vld [vmem:[%s883 + $0x6c] sm:$0xf]
        %v3466 = vld [vmem:[%s883 + $0x70] sm:$0xf]
        %v3467 = vld [vmem:[%s883 + $0x74] sm:$0xf]
        %v3468 = vld [vmem:[%s883 + $0x78] sm:$0xf]
        %v3469 = vld [vmem:[%s883 + $0x7c] sm:$0xf]
        %v3470 = vld [vmem:[%s883 + $0x80] sm:$0xf]
        %v3471 = vld [vmem:[%s883 + $0x84] sm:$0xf]
        %v3472 = vld [vmem:[%s883 + $0x88] sm:$0xf]
        %v3473 = vld [vmem:[%s883 + $0x8c] sm:$0xf]
        %v3474 = vld [vmem:[%s883 + $0x90] sm:$0xf]
        %v3475 = vld [vmem:[%s883 + $0x94] sm:$0xf]
        %v3476 = vld [vmem:[%s883 + $0x98] sm:$0xf]
        %v3477 = vld [vmem:[%s883 + $0x9c] sm:$0xf]
        %v3478 = vld [vmem:[%s883 + $0xa0] sm:$0xf]
        %v3479 = vld [vmem:[%s883 + $0xa4] sm:$0xf]
        %v3480 = vld [vmem:[%s883 + $0xa8] sm:$0xf]
        %v3481 = vld [vmem:[%s883 + $0xac] sm:$0xf]
        %v3482 = vld [vmem:[%s883 + $0xb0] sm:$0xf]
        %v3483 = vld [vmem:[%s883 + $0xb4] sm:$0xf]
        %v3484 = vld [vmem:[%s883 + $0xb8] sm:$0xf]
        %v3485 = vld [vmem:[%s883 + $0xbc] sm:$0xf]
        %v3486 = vld [vmem:[%s883 + $0xc0] sm:$0xf]
        %v3487 = vld [vmem:[%s883 + $0xc4] sm:$0xf]
        %v3488 = vld [vmem:[%s883 + $0xc8] sm:$0xf]
        %v3489 = vld [vmem:[%s883 + $0xcc] sm:$0xf]
        %v3490 = vld [vmem:[%s883 + $0xd0] sm:$0xf]
        %v3491 = vld [vmem:[%s883 + $0xd4] sm:$0xf]
        %v3492 = vld [vmem:[%s883 + $0xd8] sm:$0xf]
        %v3493 = vld [vmem:[%s883 + $0xdc] sm:$0xf]
        %v3494 = vld [vmem:[%s883 + $0xe0] sm:$0xf]
        %v3495 = vld [vmem:[%s883 + $0xe4] sm:$0xf]
        %v3496 = vld [vmem:[%s883 + $0xe8] sm:$0xf]
        %v3497 = vld [vmem:[%s883 + $0xec] sm:$0xf]
        %v3498 = vld [vmem:[%s883 + $0xf0] sm:$0xf]
        %v3499 = vld [vmem:[%s883 + $0xf4] sm:$0xf]
        %v3500 = vld [vmem:[%s883 + $0xf8] sm:$0xf]
        %v3501 = vld [vmem:[%s883 + $0xfc] sm:$0xf]
        %v3502 = vld [vmem:[%s891] sm:$0x1]
        %v3504 = vlaneseq
        %v3505 = vshrl.u32 %v3504, 7
        %v3506 = vsub.s32 0, %v3505
        %v3507 = vrot.slane %v3502, %v3506
        %v3573 = vunpack.c.l.b16 %v3438
        %v3574 = vunpack.c.l.b16 %v3439
        %v3575 = vunpack.c.l.b16 %v3440
        %v3576 = vunpack.c.l.b16 %v3441
        %v3577 = vunpack.c.l.b16 %v3442
        %v3578 = vunpack.c.l.b16 %v3443
        %v3579 = vunpack.c.l.b16 %v3444
        %v3580 = vunpack.c.l.b16 %v3445
        %v3581 = vunpack.c.l.b16 %v3446
        %v3582 = vunpack.c.l.b16 %v3447
        %v3583 = vunpack.c.l.b16 %v3448
        %v3584 = vunpack.c.l.b16 %v3449
        %v3585 = vunpack.c.l.b16 %v3450
        %v3586 = vunpack.c.l.b16 %v3451
        %v3587 = vunpack.c.l.b16 %v3452
        %v3588 = vunpack.c.l.b16 %v3453
        %v3589 = vunpack.c.l.b16 %v3454
        %v3590 = vunpack.c.l.b16 %v3455
        %v3591 = vunpack.c.l.b16 %v3456
        %v3592 = vunpack.c.l.b16 %v3457
        %v3593 = vunpack.c.l.b16 %v3458
        %v3594 = vunpack.c.l.b16 %v3459
        %v3595 = vunpack.c.l.b16 %v3460
        %v3596 = vunpack.c.l.b16 %v3461
        %v3597 = vunpack.c.l.b16 %v3462
        %v3598 = vunpack.c.l.b16 %v3463
        %v3599 = vunpack.c.l.b16 %v3464
        %v3600 = vunpack.c.l.b16 %v3465
        %v3601 = vunpack.c.l.b16 %v3466
        %v3602 = vunpack.c.l.b16 %v3467
        %v3603 = vunpack.c.l.b16 %v3468
        %v3604 = vunpack.c.l.b16 %v3469
        %v3605 = vunpack.c.l.b16 %v3470
        %v3606 = vunpack.c.l.b16 %v3471
        %v3607 = vunpack.c.l.b16 %v3472
        %v3608 = vunpack.c.l.b16 %v3473
        %v3609 = vunpack.c.l.b16 %v3474
        %v3610 = vunpack.c.l.b16 %v3475
        %v3611 = vunpack.c.l.b16 %v3476
        %v3612 = vunpack.c.l.b16 %v3477
        %v3613 = vunpack.c.l.b16 %v3478
        %v3614 = vunpack.c.l.b16 %v3479
        %v3615 = vunpack.c.l.b16 %v3480
        %v3616 = vunpack.c.l.b16 %v3481
        %v3617 = vunpack.c.l.b16 %v3482
        %v3618 = vunpack.c.l.b16 %v3483
        %v3619 = vunpack.c.l.b16 %v3484
        %v3620 = vunpack.c.l.b16 %v3485
        %v3621 = vunpack.c.l.b16 %v3486
        %v3622 = vunpack.c.l.b16 %v3487
        %v3623 = vunpack.c.l.b16 %v3488
        %v3624 = vunpack.c.l.b16 %v3489
        %v3625 = vunpack.c.l.b16 %v3490
        %v3626 = vunpack.c.l.b16 %v3491
        %v3627 = vunpack.c.l.b16 %v3492
        %v3628 = vunpack.c.l.b16 %v3493
        %v3629 = vunpack.c.l.b16 %v3494
        %v3630 = vunpack.c.l.b16 %v3495
        %v3631 = vunpack.c.l.b16 %v3496
        %v3632 = vunpack.c.l.b16 %v3497
        %v3633 = vunpack.c.l.b16 %v3498
        %v3634 = vunpack.c.l.b16 %v3499
        %v3635 = vunpack.c.l.b16 %v3500
        %v3636 = vunpack.c.l.b16 %v3501
        %v3637 = vpack.c.b16 %v3574, %v3573
        %v3638 = vpack.c.b16 %v3576, %v3575
        %v3639 = vpack.c.b16 %v3578, %v3577
        %v3640 = vpack.c.b16 %v3580, %v3579
        %v3641 = vpack.c.b16 %v3582, %v3581
        %v3642 = vpack.c.b16 %v3584, %v3583
        %v3643 = vpack.c.b16 %v3586, %v3585
        %v3644 = vpack.c.b16 %v3588, %v3587
        %v3645 = vpack.c.b16 %v3590, %v3589
        %v3646 = vpack.c.b16 %v3592, %v3591
        %v3647 = vpack.c.b16 %v3594, %v3593
        %v3648 = vpack.c.b16 %v3596, %v3595
        %v3649 = vpack.c.b16 %v3598, %v3597
        %v3650 = vpack.c.b16 %v3600, %v3599
        %v3651 = vpack.c.b16 %v3602, %v3601
        %v3652 = vpack.c.b16 %v3604, %v3603
        %v3653 = vpack.c.b16 %v3606, %v3605
        %v3654 = vpack.c.b16 %v3608, %v3607
        %v3655 = vpack.c.b16 %v3610, %v3609
        %v3656 = vpack.c.b16 %v3612, %v3611
        %v3657 = vpack.c.b16 %v3614, %v3613
        %v3658 = vpack.c.b16 %v3616, %v3615
        %v3659 = vpack.c.b16 %v3618, %v3617
        %v3660 = vpack.c.b16 %v3620, %v3619
        %v3661 = vpack.c.b16 %v3622, %v3621
        %v3662 = vpack.c.b16 %v3624, %v3623
        %v3663 = vpack.c.b16 %v3626, %v3625
        %v3664 = vpack.c.b16 %v3628, %v3627
        %v3665 = vpack.c.b16 %v3630, %v3629
        %v3666 = vpack.c.b16 %v3632, %v3631
        %v3667 = vpack.c.b16 %v3634, %v3633
        %v3668 = vpack.c.b16 %v3636, %v3635
        %3701 = vmatprep.subr.bf16.mxu0 0
        %3702 = vmatpush1.bf16.msra.mxu0 %v3637
        %3703 = vmatprep.subr.bf16.mxu0 0
        %3704 = vmatpush1.bf16.msra.mxu0 %v3638
        %3705 = vmatprep.subr.bf16.mxu0 0
        %3706 = vmatpush1.bf16.msra.mxu0 %v3639
        %3707 = vmatprep.subr.bf16.mxu0 0
        %3708 = vmatpush1.bf16.msra.mxu0 %v3640
        %3709 = vmatprep.subr.bf16.mxu0 0
        %3710 = vmatpush1.bf16.msra.mxu0 %v3641
        %3711 = vmatprep.subr.bf16.mxu0 0
        %3712 = vmatpush1.bf16.msra.mxu0 %v3642
        %3713 = vmatprep.subr.bf16.mxu0 0
        %3714 = vmatpush1.bf16.msra.mxu0 %v3643
        %3715 = vmatprep.subr.bf16.mxu0 0
        %3716 = vmatpush1.bf16.msra.mxu0 %v3644
        %3717 = vmatprep.subr.bf16.mxu0 0
        %3718 = vmatpush1.bf16.msra.mxu0 %v3645
        %3719 = vmatprep.subr.bf16.mxu0 0
        %3720 = vmatpush1.bf16.msra.mxu0 %v3646
        %3721 = vmatprep.subr.bf16.mxu0 0
        %3722 = vmatpush1.bf16.msra.mxu0 %v3647
        %3723 = vmatprep.subr.bf16.mxu0 0
        %3724 = vmatpush1.bf16.msra.mxu0 %v3648
        %3725 = vmatprep.subr.bf16.mxu0 0
        %3726 = vmatpush1.bf16.msra.mxu0 %v3649
        %3727 = vmatprep.subr.bf16.mxu0 0
        %3728 = vmatpush1.bf16.msra.mxu0 %v3650
        %3729 = vmatprep.subr.bf16.mxu0 0
        %3730 = vmatpush1.bf16.msra.mxu0 %v3651
        %3731 = vmatprep.subr.bf16.mxu0 0
        %3732 = vmatpush1.bf16.msra.mxu0 %v3652
        %3733 = vmatprep.mubr.bf16.mxu0 %v3435
        %3734 = vmatmul.mubr.bf16.gmra.mrb[0].mxu0 %v3434
        %v3735 = vpop.f32.mrb[0].mxu0
        %v3736 = vadd.f32 %v3507, %v3735
        %v3737 = vpop.f32.mrb[0].mxu0
        %v3738 = vpop.f32.mrb[0].mxu0
        %v3739 = vpop.f32.mrb[0].mxu0
        %3740 = vdwg.mxu0
        %3741 = vmatprep.subr.bf16.mxu0 0
        %3742 = vmatpush1.bf16.msra.mxu0 %v3653
        %3743 = vmatprep.subr.bf16.mxu0 0
        %3744 = vmatpush1.bf16.msra.mxu0 %v3654
        %3745 = vmatprep.subr.bf16.mxu0 0
        %3746 = vmatpush1.bf16.msra.mxu0 %v3655
        %3747 = vmatprep.subr.bf16.mxu0 0
        %3748 = vmatpush1.bf16.msra.mxu0 %v3656
        %3749 = vmatprep.subr.bf16.mxu0 0
        %3750 = vmatpush1.bf16.msra.mxu0 %v3657
        %3751 = vmatprep.subr.bf16.mxu0 0
        %3752 = vmatpush1.bf16.msra.mxu0 %v3658
        %3753 = vmatprep.subr.bf16.mxu0 0
        %3754 = vmatpush1.bf16.msra.mxu0 %v3659
        %3755 = vmatprep.subr.bf16.mxu0 0
        %3756 = vmatpush1.bf16.msra.mxu0 %v3660
        %3757 = vmatprep.subr.bf16.mxu0 0
        %3758 = vmatpush1.bf16.msra.mxu0 %v3661
        %3759 = vmatprep.subr.bf16.mxu0 0
        %3760 = vmatpush1.bf16.msra.mxu0 %v3662
        %3761 = vmatprep.subr.bf16.mxu0 0
        %3762 = vmatpush1.bf16.msra.mxu0 %v3663
        %3763 = vmatprep.subr.bf16.mxu0 0
        %3764 = vmatpush1.bf16.msra.mxu0 %v3664
        %3765 = vmatprep.subr.bf16.mxu0 0
        %3766 = vmatpush1.bf16.msra.mxu0 %v3665
        %3767 = vmatprep.subr.bf16.mxu0 0
        %3768 = vmatpush1.bf16.msra.mxu0 %v3666
        %3769 = vmatprep.subr.bf16.mxu0 0
        %3770 = vmatpush1.bf16.msra.mxu0 %v3667
        %3771 = vmatprep.subr.bf16.mxu0 0
        %3772 = vmatpush1.bf16.msra.mxu0 %v3668
        %3773 = vmatprep.mubr.bf16.mxu0 %v3437
        %3774 = vmatmul.mubr.bf16.gmra.mrb[0].mxu0 %v3436
        %v3775 = vpop.f32.mrb[0].mxu0
        %v3776 = vadd.f32 %v3736, %v3775
        %v3777 = vpop.f32.mrb[0].mxu0
        %v3778 = vpop.f32.mrb[0].mxu0
        %v3779 = vpop.f32.mrb[0].mxu0
        %3780 = vdwg.mxu0
        %v3781 = vadd.f32 %v3100, %v3776
        %v3782 = vld [vmem:[%s899] sm:$0x1]
        %v3783 = vld [vmem:[%s907] sm:$0x1]
        %3784 = vadd.xlane.f32.xlu0 %v3781
        %v3785 = vpop.xlane.xlu0 %3784
        %v3786 = vmul.f32 %v3785, %v3077
        %v3787 = vsub.f32 %v3781, %v3786
        %v3788 = vmul.f32 %v3787, %v3787
        %3789 = vadd.xlane.f32.xlu0 %v3788
        %v3790 = vpop.xlane.xlu0 %3789
        %v3791 = vmul.f32 %v3790, %v3077
        %v3792 = vadd.f32 %v3791, 1e-12
        %v3793 = vrsqrt.pop %v3792
        %v3794 = vmul.f32 %v3787, %v3793
        %v3796 = vlaneseq
        %v3797 = vshrl.u32 %v3796, 7
        %v3798 = vsub.s32 0, %v3797
        %v3799 = vrot.slane %v3782, %v3798
        %v3801 = vmul.f32 %v3794, %v3799
        %v3803 = vlaneseq
        %v3804 = vshrl.u32 %v3803, 7
        %v3805 = vsub.s32 0, %v3804
        %v3806 = vrot.slane %v3783, %v3805
        %v3808 = vadd.f32 %v3801, %v3806
        %3809 = vst [vmem:[#allocation2] sm:$0xff] %v3808
        %p3810 = scmp.eq.s32.totalorder %s42, 1
        // Predicated region
        $region153: #{tpu_custom_call.1} parent=83 // pred_check
          %p3811 = pneg %p3810
        $region154: #{tpu_custom_call.1} parent=83 // pred_check_branch
          %3813 = sbr.rel (%p3811) target = $region156
        $region155: #{tpu_custom_call.1} parent=83 // pred_region
          %3814 = vst [vmem:[%s1013] sm:$0xff] %v3808
        $region156: #{tpu_custom_call.1} parent=83 // pred_fallthru
          _
        %s3815 = sand.u32 %s463, 1
        %s3816 = scalar_lea.sflag [#allocation5], %s3815
        %s3817 = sand.u32 %s463, 1
        %s3818 = smul.addr %s3817, 8
        %s3819 = scalar_lea.vmem [#allocation23], %s3818
        // Predicated region
        $region157: #{tpu_custom_call.1} parent=83 // pred_check
          %p3820 = pneg %p473
        $region158: #{tpu_custom_call.1} parent=83 // pred_check_branch
          %3822 = sbr.rel (%p3820) target = $region160
        $region159: #{tpu_custom_call.1} parent=83 // pred_region
          %s3824 = ssub.s32 128, 128
          %3825 = vsyncadd %s3816, %s3824
          %s3826 = smul.addr %s41, 128
          %s3827 = scalar_lea.hbm %s16, %s3826
          %s3829 = sshll.u32 %s3819, 4
          %s3830 = int_to_ptr.vmem [resolvable:$true] %s3829
          %3832 = dma.vmem_to_hbm [thread:$0]  %s3830, 128, %s3827, %s3816
        $region160: #{tpu_custom_call.1} parent=83 // pred_fallthru
          _
      $region84: #{tpu_custom_call.1} parent=5 // pred_fallthru
        _
      %p3833 = scmp.le.s32.totalorder 2, %s32
      // Predicated region
      $region161: #{tpu_custom_call.1} parent=5 // pred_check
        %p3834 = pneg %p3833
      $region162: #{tpu_custom_call.1} parent=5 // pred_check_branch
        %3836 = sbr.rel (%p3834) target = $region164
      $region163: #{tpu_custom_call.1} parent=5 // pred_region
        %s3837 = ssub.s32 %s32, 2
        // Predicated region
        $region165: #{tpu_custom_call.1} parent=163 // pred_check
          %p3838 = pneg %p479
        $region166: #{tpu_custom_call.1} parent=163 // pred_check_branch
          %3840 = sbr.rel (%p3838) target = $region168
        $region167: #{tpu_custom_call.1} parent=163 // pred_region
          %s3841 = sand.u32 %s464, 1
          %s3842 = scalar_lea.sflag [#allocation5], %s3841
          %s3843 = sand.u32 %s464, 1
          %s3844 = smul.addr %s3843, 8
          %s3845 = scalar_lea.vmem [#allocation23], %s3844
          %3846 = dma.done %s3842, 128
        $region168: #{tpu_custom_call.1} parent=163 // pred_fallthru
          _
      $region164: #{tpu_custom_call.1} parent=5 // pred_fallthru
        _
    $region6: #{tpu_custom_call.1} parent=1 // loop_footer
      %s36 = sadd.s32 1, %s32
    $region7: #{tpu_custom_call.1} parent=1 // loop_footer_branch
      %31 = sbr.rel target = $region3
    $region8: #{tpu_custom_call.1} parent=1 // loop_exit
      _
    %3847 = vsyncpa [#allocation4], 1
    %s3848 = scalar_lea.sflag [#allocation4], 1
    %3849 = vsyncpa %s3848, 1
    %3850 = vsyncpa [#allocation7], 1
    %s3851 = scalar_lea.sflag [#allocation7], 1
    %3852 = vsyncpa %s3851, 1
    %3853 = vsyncpa [#allocation10], 1
    %3854 = vsyncpa [#allocation5], 1
    %s3855 = scalar_lea.sflag [#allocation5], 1
    %3856 = vsyncpa %s3855, 1

</llo_original>
